<compile_context>
chip_gen: v6e
topology: v6e:2x2x1
jax: 0.10.0
libtpu: 0.0.40
codegen_flags: <defaults>
</compile_context>

<pallas_src>
import functools

import jax
import jax.numpy as jnp
from jax.experimental import pallas as pl
from jax.experimental.pallas import tpu as pltpu


# --------------------------------------------------------------------------
# Shared per-direction LSTM cell step (gate order [i, f, o, g]).
# gx_t already contains x_t @ W_ih^T + (b_ih + b_hh).
# --------------------------------------------------------------------------
def _lstm_dir_step(gx_t, h, c, whhT, H):
    gates = gx_t + jnp.dot(h, whhT, preferred_element_type=jnp.float32)   # (B, 4H)
    ifo = jax.nn.sigmoid(gates[:, :3 * H])          # single EUP-friendly sigmoid slab
    g = jnp.tanh(gates[:, 3 * H:])
    c_new = ifo[:, H:2 * H] * c + ifo[:, :H] * g
    h_new = ifo[:, 2 * H:3 * H] * jnp.tanh(c_new)
    return h_new, c_new


# --------------------------------------------------------------------------
# Fused bidirectional LSTM layer: one grid step = one time chunk (both directions).
# h/c carries live in VMEM scratch across grid steps; time axis is "arbitrary".
# --------------------------------------------------------------------------
def _bilstm_chunk_kernel(gxf_ref, gxb_ref, whh_ref,          # inputs
                         outf_ref, outb_ref, hfin_ref,       # outputs
                         h_scr, c_scr,                       # scratch (2, B, H)
                         *, hidden, chunk):
    H, Tc = hidden, chunk
    ci = pl.program_id(0)

    @pl.when(ci == 0)
    def _():
        h_scr[...] = jnp.zeros_like(h_scr)
        c_scr[...] = jnp.zeros_like(c_scr)

    whh_f = whh_ref[0]                                       # (H, 4H), chunk-resident
    whh_b = whh_ref[1]

    def step(s, carry):
        # Forward direction: local time s (global time ci*Tc + s).
        h_new, c_new = _lstm_dir_step(gxf_ref[s], h_scr[0], c_scr[0], whh_f, H)
        h_scr[0] = h_new
        c_scr[0] = c_new
        outf_ref[s] = h_new.astype(outf_ref.dtype)

        # Reverse direction: this grid step holds the mirrored chunk; walk it backwards.
        sr = Tc - 1 - s
        h_newb, c_newb = _lstm_dir_step(gxb_ref[sr], h_scr[1], c_scr[1], whh_b, H)
        h_scr[1] = h_newb
        c_scr[1] = c_newb
        outb_ref[sr] = h_newb.astype(outb_ref.dtype)
        return carry

    jax.lax.fori_loop(0, Tc, step, 0, unroll=(Tc <= 32))

    @pl.when(ci == pl.num_programs(0) - 1)                   # write final hidden ONCE
    def _():
        hfin_ref[...] = h_scr[...].astype(hfin_ref.dtype)


# --------------------------------------------------------------------------
# Unidirectional variant (biflag=False).
# --------------------------------------------------------------------------
def _lstm_chunk_kernel(gx_ref, whh_ref, out_ref, hfin_ref, h_scr, c_scr,
                       *, hidden, chunk):
    H, Tc = hidden, chunk
    ci = pl.program_id(0)

    @pl.when(ci == 0)
    def _():
        h_scr[...] = jnp.zeros_like(h_scr)
        c_scr[...] = jnp.zeros_like(c_scr)

    whh = whh_ref[...]

    def step(s, carry):
        h_new, c_new = _lstm_dir_step(gx_ref[s], h_scr[...], c_scr[...], whh, H)
        h_scr[...] = h_new
        c_scr[...] = c_new
        out_ref[s] = h_new.astype(out_ref.dtype)
        return carry

    jax.lax.fori_loop(0, Tc, step, 0, unroll=(Tc <= 32))

    @pl.when(ci == pl.num_programs(0) - 1)
    def _():
        hfin_ref[...] = h_scr[...].astype(hfin_ref.dtype)


# --------------------------------------------------------------------------
# Host-side helpers.
# --------------------------------------------------------------------------
def _gate_perm(H):
    # PyTorch gate order along 4H is [i, f, g, o]; permute to [i, f, o, g] so sigmoid
    # applies to one contiguous 3H slice in-kernel.
    return jnp.concatenate([jnp.arange(0, 2 * H),
                            jnp.arange(3 * H, 4 * H),
                            jnp.arange(2 * H, 3 * H)])


def _prep_dir_params(w_ih, w_hh, b_ih, b_hh):
    H = w_hh.shape[1]
    perm = _gate_perm(H)
    wihT = jnp.transpose(w_ih[perm])            # (D, 4H)
    whhT = jnp.transpose(w_hh[perm])            # (H, 4H)
    bias = (b_ih + b_hh)[perm]                  # (4H,)
    return wihT, whhT, bias


def _x_projection(x_tm, wihT, bias):
    """Hoisted input projection for the whole sequence: one big (T*B,D)x(D,4H) matmul."""
    T, B, D = x_tm.shape
    gx = jnp.dot(x_tm.reshape(T * B, D), wihT,
                 preferred_element_type=jnp.float32) + bias
    return gx.reshape(T, B, wihT.shape[1])


def _pick_time_chunk(T, max_chunk=64):
    for c in range(min(T, max_chunk), 0, -1):
        if T % c == 0:
            return c
    return T


def bilstm_layer(x_tm, params_fwd, params_bwd, *, hidden):
    """x_tm: (T, B, D) time-major. Returns (out (T,B,2H), h_fwd (B,H), h_bwd (B,H))."""
    T, B, _ = x_tm.shape
    H = hidden

    wihT_f, whhT_f, bias_f = _prep_dir_params(*params_fwd)
    wihT_b, whhT_b, bias_b = _prep_dir_params(*params_bwd)

    gx_f = _x_projection(x_tm, wihT_f, bias_f)      # (T, B, 4H)
    gx_b = _x_projection(x_tm, wihT_b, bias_b)      # (T, B, 4H)
    whh = jnp.stack([whhT_f, whhT_b], axis=0)       # (2, H, 4H)

    Tc = _pick_time_chunk(T)
    nchunks = T // Tc

    out_f, out_b, h_fin = pl.pallas_call(
        functools.partial(_bilstm_chunk_kernel, hidden=H, chunk=Tc),
        out_shape=(jax.ShapeDtypeStruct((T, B, H), jnp.float32),
                   jax.ShapeDtypeStruct((T, B, H), jnp.float32),
                   jax.ShapeDtypeStruct((2, B, H), jnp.float32)),
        grid_spec=pltpu.PrefetchScalarGridSpec(
            num_scalar_prefetch=0,
            grid=(nchunks,),
            in_specs=[
                pl.BlockSpec((Tc, B, 4 * H), lambda i: (i, 0, 0)),
                pl.BlockSpec((Tc, B, 4 * H), lambda i: (nchunks - 1 - i, 0, 0)),
                pl.BlockSpec((2, H, 4 * H), lambda i: (0, 0, 0)),   # grid-invariant weights
            ],
            out_specs=[
                pl.BlockSpec((Tc, B, H), lambda i: (i, 0, 0)),
                pl.BlockSpec((Tc, B, H), lambda i: (nchunks - 1 - i, 0, 0)),
                # Resident output across the (arbitrary) time axis; written once.
                pl.BlockSpec((2, B, H), lambda i: (0, 0, 0)),
            ],
            scratch_shapes=[
                pltpu.VMEM((2, B, H), jnp.float32),    # h carry (fwd, bwd)
                pltpu.VMEM((2, B, H), jnp.float32),    # c carry (fwd, bwd)
            ],
        ),
        compiler_params=pltpu.CompilerParams(
            dimension_semantics=("arbitrary",)),       # time recurrence is sequential
    )(gx_f, gx_b, whh)

    out = jnp.concatenate([out_f, out_b], axis=-1)     # (T, B, 2H)
    return out, h_fin[0], h_fin[1]


def lstm_layer(x_tm, params, *, hidden):
    """Unidirectional layer. Returns (out (T,B,H), h_final (B,H))."""
    T, B, _ = x_tm.shape
    H = hidden
    wihT, whhT, bias = _prep_dir_params(*params)
    gx = _x_projection(x_tm, wihT, bias)
    Tc = _pick_time_chunk(T)
    nchunks = T // Tc

    out, h_fin = pl.pallas_call(
        functools.partial(_lstm_chunk_kernel, hidden=H, chunk=Tc),
        out_shape=(jax.ShapeDtypeStruct((T, B, H), jnp.float32),
                   jax.ShapeDtypeStruct((B, H), jnp.float32)),
        grid_spec=pltpu.PrefetchScalarGridSpec(
            num_scalar_prefetch=0,
            grid=(nchunks,),
            in_specs=[
                pl.BlockSpec((Tc, B, 4 * H), lambda i: (i, 0, 0)),
                pl.BlockSpec((H, 4 * H), lambda i: (0, 0)),
            ],
            out_specs=[
                pl.BlockSpec((Tc, B, H), lambda i: (i, 0, 0)),
                pl.BlockSpec((B, H), lambda i: (0, 0)),
            ],
            scratch_shapes=[
                pltpu.VMEM((B, H), jnp.float32),
                pltpu.VMEM((B, H), jnp.float32),
            ],
        ),
        compiler_params=pltpu.CompilerParams(
            dimension_semantics=("arbitrary",)),
    )(gx, whhT)
    return out, h_fin


# --------------------------------------------------------------------------
# LSTM_encoder.forward equivalent
# --------------------------------------------------------------------------
def lstm_encoder_forward(x, params, *, num_layers, hidden_size, biflag=True):
    """x: (B, T, in_size) batch_first.  Returns (out (B,T,num_dir*H), hn (L*num_dir,B,H))."""
    x_tm = jnp.transpose(x, (1, 0, 2))              # -> time-major (T, B, D)
    hn_list = []
    layer_in = x_tm
    for layer in range(num_layers):
        if biflag:
            layer_in, hf, hb = bilstm_layer(layer_in, params[(layer, 0)], params[(layer, 1)],
                                            hidden=hidden_size)
            hn_list += [hf, hb]
        else:
            layer_in, hf = lstm_layer(layer_in, params[(layer, 0)], hidden=hidden_size)
            hn_list.append(hf)
        # TODO(synk): inter-layer dropout omitted (dropout=0.0 / eval-mode semantics)
    out = jnp.transpose(layer_in, (1, 0, 2))        # back to (B, T, num_dir*H)
    hn = jnp.stack(hn_list, axis=0)                 # (L*num_dir, B, H)
    return out, hn


# --------------------------------------------------------------------------
# Pure-JAX reference (lax.scan, original PyTorch gate order) for correctness.
# --------------------------------------------------------------------------
def _ref_dir(x_tm, w_ih, w_hh, b_ih, b_hh, reverse):
    T, B, _ = x_tm.shape
    H = w_hh.shape[1]
    xs = x_tm[::-1] if reverse else x_tm

    def step(carry, x_t):
        h, c = carry
        gates = x_t @ w_ih.T + h @ w_hh.T + b_ih + b_hh
        i, f, g, o = jnp.split(gates, 4, axis=-1)
        i, f, g, o = jax.nn.sigmoid(i), jax.nn.sigmoid(f), jnp.tanh(g), jax.nn.sigmoid(o)
        c = f * c + i * g
        h = o * jnp.tanh(c)
        return (h, c), h

    (h, _), ys = jax.lax.scan(step, (jnp.zeros((B, H)), jnp.zeros((B, H))), xs)
    if reverse:
        ys = ys[::-1]
    return ys, h


def _ref_encoder(x, params, *, num_layers, hidden_size, biflag=True):
    num_dir = 2 if biflag else 1
    x_tm = jnp.transpose(x, (1, 0, 2))
    hn_list = []
    layer_in = x_tm
    for layer in range(num_layers):
        outs = []
        for d in range(num_dir):
            w_ih, w_hh, b_ih, b_hh = params[(layer, d)]
            o, hf = _ref_dir(layer_in, w_ih, w_hh, b_ih, b_hh, d == 1)
            outs.append(o)
            hn_list.append(hf)
        layer_in = jnp.concatenate(outs, axis=-1) if num_dir == 2 else outs[0]
    return jnp.transpose(layer_in, (1, 0, 2)), jnp.stack(hn_list, axis=0)


# --------------------------------------------------------------------------
# Deterministic parameter init (PyTorch nn.LSTM default: U(-1/sqrt(H), 1/sqrt(H)))
# --------------------------------------------------------------------------
def init_params(key, in_size, hidden_size, num_layers, biflag=True):
    num_dir = 2 if biflag else 1
    k = 1.0 / jnp.sqrt(hidden_size)
    params = {}
    for layer in range(num_layers):
        in_l = in_size if layer == 0 else num_dir * hidden_size
        for d in range(num_dir):
            key, k1, k2, k3, k4 = jax.random.split(key, 5)
            params[(layer, d)] = (
                jax.random.uniform(k1, (4 * hidden_size, in_l), jnp.float32, -k, k),
                jax.random.uniform(k2, (4 * hidden_size, hidden_size), jnp.float32, -k, k),
                jax.random.uniform(k3, (4 * hidden_size,), jnp.float32, -k, k),
                jax.random.uniform(k4, (4 * hidden_size,), jnp.float32, -k, k),
            )
    return params


if __name__ == "__main__":
    # Small shapes consistent with the module: batch=2, seq=8, in_size=16,
    # hidden_size=32, num_layers=2, bidirectional=True, dropout=0.0
    B, T, IN, H, L = 2, 8, 16, 32, 2
    key = jax.random.PRNGKey(0)
    key, kx = jax.random.split(key)
    x = jax.random.normal(kx, (B, T, IN), jnp.float32)

    params = init_params(key, IN, H, L, biflag=True)

    fwd = jax.jit(functools.partial(lstm_encoder_forward,
                                    num_layers=L, hidden_size=H, biflag=True))
    out, hn = fwd(x, params)
    out = jax.block_until_ready(out)
    hn = jax.block_until_ready(hn)

    assert out.shape == (B, T, 2 * H)
    assert hn.shape == (2 * L, B, H)

    out_ref, hn_ref = _ref_encoder(x, params, num_layers=L, hidden_size=H, biflag=True)
    assert jnp.allclose(out, out_ref, atol=1e-5, rtol=1e-5)
    assert jnp.allclose(hn, hn_ref, atol=1e-5, rtol=1e-5)

    print("KERNEL_OK")
</pallas_src>

<mosaic_0001>
module attributes {stable_mosaic.version = 11 : i64} {
  func.func @_bilstm_chunk_kernel(%arg0: i32, %arg1: memref<8x2x128xf32, #tpu.memory_space<vmem>>, %arg2: memref<8x2x128xf32, #tpu.memory_space<vmem>>, %arg3: memref<2x32x128xf32, #tpu.memory_space<vmem>>, %arg4: memref<8x2x32xf32, #tpu.memory_space<vmem>>, %arg5: memref<8x2x32xf32, #tpu.memory_space<vmem>>, %arg6: memref<2x2x32xf32, #tpu.memory_space<vmem>>, %arg7: memref<2x2x32xf32, #tpu.memory_space<vmem>>, %arg8: memref<2x2x32xf32, #tpu.memory_space<vmem>>) attributes {dimension_semantics = [#tpu.dimension_semantics<arbitrary>], iteration_bounds = array<i64: 1>, scalar_prefetch = 0 : i64, scratch_operands = 2 : i64, tpu.core_type = #tpu.core_type<tc>, window_params = [{transform_indices = @transform_0, window_bounds = array<i64: 8, 2, 128>}, {transform_indices = @transform_1, window_bounds = array<i64: 8, 2, 128>}, {pipeline_mode = #tpu.pipeline_mode<synchronous>, transform_indices = @transform_2, window_bounds = array<i64: 2, 32, 128>}, {transform_indices = @transform_3, window_bounds = array<i64: 8, 2, 32>}, {transform_indices = @transform_4, window_bounds = array<i64: 8, 2, 32>}, {pipeline_mode = #tpu.pipeline_mode<synchronous>, transform_indices = @transform_5, window_bounds = array<i64: 2, 2, 32>}]} {
    %c0_i32 = arith.constant 0 : i32
    %0 = arith.cmpi eq, %arg0, %c0_i32 : i32
    %1 = arith.extui %0 : i1 to i32
    %c0_i32_0 = arith.constant 0 : i32
    %2 = arith.cmpi ne, %1, %c0_i32_0 : i32
    scf.if %2 {
      %cst_303 = arith.constant 0.000000e+00 : f32
      %578 = vector.broadcast %cst_303 : f32 to vector<2x2x32xf32>
      %c0_304 = arith.constant 0 : index
      %c0_305 = arith.constant 0 : index
      %c0_306 = arith.constant 0 : index
      %579 = vector.load %arg7[%c0_304, %c0_305, %c0_306] : memref<2x2x32xf32, #tpu.memory_space<vmem>>, vector<2x2x32xf32>
      tpu.vector_store %arg7[%c0_304, %c0_305, %c0_306], %578 {strides = array<i32>} : memref<2x2x32xf32, #tpu.memory_space<vmem>>, vector<2x2x32xf32>,
      %cst_307 = arith.constant 0.000000e+00 : f32
      %580 = vector.broadcast %cst_307 : f32 to vector<2x2x32xf32>
      %c0_308 = arith.constant 0 : index
      %c0_309 = arith.constant 0 : index
      %c0_310 = arith.constant 0 : index
      %581 = vector.load %arg8[%c0_308, %c0_309, %c0_310] : memref<2x2x32xf32, #tpu.memory_space<vmem>>, vector<2x2x32xf32>
      tpu.vector_store %arg8[%c0_308, %c0_309, %c0_310], %580 {strides = array<i32>} : memref<2x2x32xf32, #tpu.memory_space<vmem>>, vector<2x2x32xf32>,
    } else {
    }
    %c0 = arith.constant 0 : index
    %c0_1 = arith.constant 0 : index
    %c0_2 = arith.constant 0 : index
    %3 = vector.load %arg3[%c0, %c0_1, %c0_2] : memref<2x32x128xf32, #tpu.memory_space<vmem>>, vector<1x32x128xf32>
    %4 = vector.shape_cast %3 : vector<1x32x128xf32> to vector<32x128xf32>
    %c1 = arith.constant 1 : index
    %c0_3 = arith.constant 0 : index
    %c0_4 = arith.constant 0 : index
    %5 = vector.load %arg3[%c1, %c0_3, %c0_4] : memref<2x32x128xf32, #tpu.memory_space<vmem>>, vector<1x32x128xf32>
    %6 = vector.shape_cast %5 : vector<1x32x128xf32> to vector<32x128xf32>
    %c0_i32_5 = arith.constant 0 : i32
    %7 = arith.index_cast %c0_i32_5 : i32 to index
    %c0_6 = arith.constant 0 : index
    %c0_7 = arith.constant 0 : index
    %8 = vector.load %arg1[%7, %c0_6, %c0_7] : memref<8x2x128xf32, #tpu.memory_space<vmem>>, vector<1x2x128xf32>
    %9 = vector.shape_cast %8 : vector<1x2x128xf32> to vector<2x128xf32>
    %c0_8 = arith.constant 0 : index
    %c0_9 = arith.constant 0 : index
    %c0_10 = arith.constant 0 : index
    %10 = vector.load %arg7[%c0_8, %c0_9, %c0_10] : memref<2x2x32xf32, #tpu.memory_space<vmem>>, vector<1x2x32xf32>
    %11 = vector.shape_cast %10 : vector<1x2x32xf32> to vector<2x32xf32>
    %c0_11 = arith.constant 0 : index
    %c0_12 = arith.constant 0 : index
    %c0_13 = arith.constant 0 : index
    %12 = vector.load %arg8[%c0_11, %c0_12, %c0_13] : memref<2x2x32xf32, #tpu.memory_space<vmem>>, vector<1x2x32xf32>
    %13 = vector.shape_cast %12 : vector<1x2x32xf32> to vector<2x32xf32>
    %cst = arith.constant dense<0.000000e+00> : vector<2x128xf32>
    %14 = tpu.matmul %11, %4, %cst {dimension_numbers = #tpu.dot_dimension_numbers<[1], [0], [0], [1], [0, 0, 1, 1], [], []>} : vector<2x32xf32>, vector<32x128xf32>, vector<2x128xf32> -> vector<2x128xf32>
    %15 = arith.addf %9, %14 : vector<2x128xf32>
    %16 = vector.extract_strided_slice %15 {offsets = [0, 0], sizes = [2, 96], strides = [1, 1]} : vector<2x128xf32> to vector<2x96xf32>
    %17 = arith.negf %16 : vector<2x96xf32>
    %18 = math.exp %17 : vector<2x96xf32>
    %cst_14 = arith.constant 1.000000e+00 : f32
    %19 = vector.broadcast %cst_14 : f32 to vector<2x96xf32>
    %20 = arith.addf %19, %18 : vector<2x96xf32>
    %21 = arith.divf %19, %20 : vector<2x96xf32>
    %22 = vector.extract_strided_slice %15 {offsets = [0, 96], sizes = [2, 32], strides = [1, 1]} : vector<2x128xf32> to vector<2x32xf32>
    %23 = math.tanh %22 : vector<2x32xf32>
    %24 = vector.extract_strided_slice %21 {offsets = [0, 32], sizes = [2, 32], strides = [1, 1]} : vector<2x96xf32> to vector<2x32xf32>
    %25 = arith.mulf %24, %13 : vector<2x32xf32>
    %26 = vector.extract_strided_slice %21 {offsets = [0, 0], sizes = [2, 32], strides = [1, 1]} : vector<2x96xf32> to vector<2x32xf32>
    %27 = arith.mulf %26, %23 : vector<2x32xf32>
    %28 = arith.addf %25, %27 : vector<2x32xf32>
    %29 = vector.extract_strided_slice %21 {offsets = [0, 64], sizes = [2, 32], strides = [1, 1]} : vector<2x96xf32> to vector<2x32xf32>
    %30 = math.tanh %28 : vector<2x32xf32>
    %31 = arith.mulf %29, %30 : vector<2x32xf32>
    %c0_15 = arith.constant 0 : index
    %c0_16 = arith.constant 0 : index
    %c0_17 = arith.constant 0 : index
    %32 = vector.load %arg7[%c0_15, %c0_16, %c0_17] : memref<2x2x32xf32, #tpu.memory_space<vmem>>, vector<1x2x32xf32>
    %33 = vector.shape_cast %32 : vector<1x2x32xf32> to vector<2x32xf32>
    %34 = vector.shape_cast %31 : vector<2x32xf32> to vector<1x2x32xf32>
    tpu.vector_store %arg7[%c0_15, %c0_16, %c0_17], %34 {strides = array<i32>} : memref<2x2x32xf32, #tpu.memory_space<vmem>>, vector<1x2x32xf32>,
    %c0_18 = arith.constant 0 : index
    %c0_19 = arith.constant 0 : index
    %c0_20 = arith.constant 0 : index
    %35 = vector.load %arg8[%c0_18, %c0_19, %c0_20] : memref<2x2x32xf32, #tpu.memory_space<vmem>>, vector<1x2x32xf32>
    %36 = vector.shape_cast %35 : vector<1x2x32xf32> to vector<2x32xf32>
    %37 = vector.shape_cast %28 : vector<2x32xf32> to vector<1x2x32xf32>
    tpu.vector_store %arg8[%c0_18, %c0_19, %c0_20], %37 {strides = array<i32>} : memref<2x2x32xf32, #tpu.memory_space<vmem>>, vector<1x2x32xf32>,
    %38 = arith.index_cast %c0_i32_5 : i32 to index
    %c0_21 = arith.constant 0 : index
    %c0_22 = arith.constant 0 : index
    %39 = vector.load %arg4[%38, %c0_21, %c0_22] : memref<8x2x32xf32, #tpu.memory_space<vmem>>, vector<1x2x32xf32>
    %40 = vector.shape_cast %39 : vector<1x2x32xf32> to vector<2x32xf32>
    %41 = vector.shape_cast %31 : vector<2x32xf32> to vector<1x2x32xf32>
    tpu.vector_store %arg4[%38, %c0_21, %c0_22], %41 {strides = array<i32>} : memref<8x2x32xf32, #tpu.memory_space<vmem>>, vector<1x2x32xf32>,
    %c7_i32 = arith.constant 7 : i32
    %42 = arith.subi %c7_i32, %c0_i32_5 : i32
    %43 = arith.index_cast %42 : i32 to index
    %c0_23 = arith.constant 0 : index
    %c0_24 = arith.constant 0 : index
    %44 = vector.load %arg2[%43, %c0_23, %c0_24] : memref<8x2x128xf32, #tpu.memory_space<vmem>>, vector<1x2x128xf32>
    %45 = vector.shape_cast %44 : vector<1x2x128xf32> to vector<2x128xf32>
    %c1_25 = arith.constant 1 : index
    %c0_26 = arith.constant 0 : index
    %c0_27 = arith.constant 0 : index
    %46 = vector.load %arg7[%c1_25, %c0_26, %c0_27] : memref<2x2x32xf32, #tpu.memory_space<vmem>>, vector<1x2x32xf32>
    %47 = vector.shape_cast %46 : vector<1x2x32xf32> to vector<2x32xf32>
    %c1_28 = arith.constant 1 : index
    %c0_29 = arith.constant 0 : index
    %c0_30 = arith.constant 0 : index
    %48 = vector.load %arg8[%c1_28, %c0_29, %c0_30] : memref<2x2x32xf32, #tpu.memory_space<vmem>>, vector<1x2x32xf32>
    %49 = vector.shape_cast %48 : vector<1x2x32xf32> to vector<2x32xf32>
    %cst_31 = arith.constant dense<0.000000e+00> : vector<2x128xf32>
    %50 = tpu.matmul %47, %6, %cst_31 {dimension_numbers = #tpu.dot_dimension_numbers<[1], [0], [0], [1], [0, 0, 1, 1], [], []>} : vector<2x32xf32>, vector<32x128xf32>, vector<2x128xf32> -> vector<2x128xf32>
    %51 = arith.addf %45, %50 : vector<2x128xf32>
    %52 = vector.extract_strided_slice %51 {offsets = [0, 0], sizes = [2, 96], strides = [1, 1]} : vector<2x128xf32> to vector<2x96xf32>
    %53 = arith.negf %52 : vector<2x96xf32>
    %54 = math.exp %53 : vector<2x96xf32>
    %cst_32 = arith.constant 1.000000e+00 : f32
    %55 = vector.broadcast %cst_32 : f32 to vector<2x96xf32>
    %56 = arith.addf %55, %54 : vector<2x96xf32>
    %57 = arith.divf %55, %56 : vector<2x96xf32>
    %58 = vector.extract_strided_slice %51 {offsets = [0, 96], sizes = [2, 32], strides = [1, 1]} : vector<2x128xf32> to vector<2x32xf32>
    %59 = math.tanh %58 : vector<2x32xf32>
    %60 = vector.extract_strided_slice %57 {offsets = [0, 32], sizes = [2, 32], strides = [1, 1]} : vector<2x96xf32> to vector<2x32xf32>
    %61 = arith.mulf %60, %49 : vector<2x32xf32>
    %62 = vector.extract_strided_slice %57 {offsets = [0, 0], sizes = [2, 32], strides = [1, 1]} : vector<2x96xf32> to vector<2x32xf32>
    %63 = arith.mulf %62, %59 : vector<2x32xf32>
    %64 = arith.addf %61, %63 : vector<2x32xf32>
    %65 = vector.extract_strided_slice %57 {offsets = [0, 64], sizes = [2, 32], strides = [1, 1]} : vector<2x96xf32> to vector<2x32xf32>
    %66 = math.tanh %64 : vector<2x32xf32>
    %67 = arith.mulf %65, %66 : vector<2x32xf32>
    %c1_33 = arith.constant 1 : index
    %c0_34 = arith.constant 0 : index
    %c0_35 = arith.constant 0 : index
    %68 = vector.load %arg7[%c1_33, %c0_34, %c0_35] : memref<2x2x32xf32, #tpu.memory_space<vmem>>, vector<1x2x32xf32>
    %69 = vector.shape_cast %68 : vector<1x2x32xf32> to vector<2x32xf32>
    %70 = vector.shape_cast %67 : vector<2x32xf32> to vector<1x2x32xf32>
    tpu.vector_store %arg7[%c1_33, %c0_34, %c0_35], %70 {strides = array<i32>} : memref<2x2x32xf32, #tpu.memory_space<vmem>>, vector<1x2x32xf32>,
    %c1_36 = arith.constant 1 : index
    %c0_37 = arith.constant 0 : index
    %c0_38 = arith.constant 0 : index
    %71 = vector.load %arg8[%c1_36, %c0_37, %c0_38] : memref<2x2x32xf32, #tpu.memory_space<vmem>>, vector<1x2x32xf32>
    %72 = vector.shape_cast %71 : vector<1x2x32xf32> to vector<2x32xf32>
    %73 = vector.shape_cast %64 : vector<2x32xf32> to vector<1x2x32xf32>
    tpu.vector_store %arg8[%c1_36, %c0_37, %c0_38], %73 {strides = array<i32>} : memref<2x2x32xf32, #tpu.memory_space<vmem>>, vector<1x2x32xf32>,
    %74 = arith.index_cast %42 : i32 to index
    %c0_39 = arith.constant 0 : index
    %c0_40 = arith.constant 0 : index
    %75 = vector.load %arg5[%74, %c0_39, %c0_40] : memref<8x2x32xf32, #tpu.memory_space<vmem>>, vector<1x2x32xf32>
    %76 = vector.shape_cast %75 : vector<1x2x32xf32> to vector<2x32xf32>
    %77 = vector.shape_cast %67 : vector<2x32xf32> to vector<1x2x32xf32>
    tpu.vector_store %arg5[%74, %c0_39, %c0_40], %77 {strides = array<i32>} : memref<8x2x32xf32, #tpu.memory_space<vmem>>, vector<1x2x32xf32>,
    %c1_i32 = arith.constant 1 : i32
    %78 = arith.index_cast %c1_i32 : i32 to index
    %c0_41 = arith.constant 0 : index
    %c0_42 = arith.constant 0 : index
    %79 = vector.load %arg1[%78, %c0_41, %c0_42] : memref<8x2x128xf32, #tpu.memory_space<vmem>>, vector<1x2x128xf32>
    %80 = vector.shape_cast %79 : vector<1x2x128xf32> to vector<2x128xf32>
    %c0_43 = arith.constant 0 : index
    %c0_44 = arith.constant 0 : index
    %c0_45 = arith.constant 0 : index
    %81 = vector.load %arg7[%c0_43, %c0_44, %c0_45] : memref<2x2x32xf32, #tpu.memory_space<vmem>>, vector<1x2x32xf32>
    %82 = vector.shape_cast %81 : vector<1x2x32xf32> to vector<2x32xf32>
    %c0_46 = arith.constant 0 : index
    %c0_47 = arith.constant 0 : index
    %c0_48 = arith.constant 0 : index
    %83 = vector.load %arg8[%c0_46, %c0_47, %c0_48] : memref<2x2x32xf32, #tpu.memory_space<vmem>>, vector<1x2x32xf32>
    %84 = vector.shape_cast %83 : vector<1x2x32xf32> to vector<2x32xf32>
    %cst_49 = arith.constant dense<0.000000e+00> : vector<2x128xf32>
    %85 = tpu.matmul %82, %4, %cst_49 {dimension_numbers = #tpu.dot_dimension_numbers<[1], [0], [0], [1], [0, 0, 1, 1], [], []>} : vector<2x32xf32>, vector<32x128xf32>, vector<2x128xf32> -> vector<2x128xf32>
    %86 = arith.addf %80, %85 : vector<2x128xf32>
    %87 = vector.extract_strided_slice %86 {offsets = [0, 0], sizes = [2, 96], strides = [1, 1]} : vector<2x128xf32> to vector<2x96xf32>
    %88 = arith.negf %87 : vector<2x96xf32>
    %89 = math.exp %88 : vector<2x96xf32>
    %cst_50 = arith.constant 1.000000e+00 : f32
    %90 = vector.broadcast %cst_50 : f32 to vector<2x96xf32>
    %91 = arith.addf %90, %89 : vector<2x96xf32>
    %92 = arith.divf %90, %91 : vector<2x96xf32>
    %93 = vector.extract_strided_slice %86 {offsets = [0, 96], sizes = [2, 32], strides = [1, 1]} : vector<2x128xf32> to vector<2x32xf32>
    %94 = math.tanh %93 : vector<2x32xf32>
    %95 = vector.extract_strided_slice %92 {offsets = [0, 32], sizes = [2, 32], strides = [1, 1]} : vector<2x96xf32> to vector<2x32xf32>
    %96 = arith.mulf %95, %84 : vector<2x32xf32>
    %97 = vector.extract_strided_slice %92 {offsets = [0, 0], sizes = [2, 32], strides = [1, 1]} : vector<2x96xf32> to vector<2x32xf32>
    %98 = arith.mulf %97, %94 : vector<2x32xf32>
    %99 = arith.addf %96, %98 : vector<2x32xf32>
    %100 = vector.extract_strided_slice %92 {offsets = [0, 64], sizes = [2, 32], strides = [1, 1]} : vector<2x96xf32> to vector<2x32xf32>
    %101 = math.tanh %99 : vector<2x32xf32>
    %102 = arith.mulf %100, %101 : vector<2x32xf32>
    %c0_51 = arith.constant 0 : index
    %c0_52 = arith.constant 0 : index
    %c0_53 = arith.constant 0 : index
    %103 = vector.load %arg7[%c0_51, %c0_52, %c0_53] : memref<2x2x32xf32, #tpu.memory_space<vmem>>, vector<1x2x32xf32>
    %104 = vector.shape_cast %103 : vector<1x2x32xf32> to vector<2x32xf32>
    %105 = vector.shape_cast %102 : vector<2x32xf32> to vector<1x2x32xf32>
    tpu.vector_store %arg7[%c0_51, %c0_52, %c0_53], %105 {strides = array<i32>} : memref<2x2x32xf32, #tpu.memory_space<vmem>>, vector<1x2x32xf32>,
    %c0_54 = arith.constant 0 : index
    %c0_55 = arith.constant 0 : index
    %c0_56 = arith.constant 0 : index
    %106 = vector.load %arg8[%c0_54, %c0_55, %c0_56] : memref<2x2x32xf32, #tpu.memory_space<vmem>>, vector<1x2x32xf32>
    %107 = vector.shape_cast %106 : vector<1x2x32xf32> to vector<2x32xf32>
    %108 = vector.shape_cast %99 : vector<2x32xf32> to vector<1x2x32xf32>
    tpu.vector_store %arg8[%c0_54, %c0_55, %c0_56], %108 {strides = array<i32>} : memref<2x2x32xf32, #tpu.memory_space<vmem>>, vector<1x2x32xf32>,
    %109 = arith.index_cast %c1_i32 : i32 to index
    %c0_57 = arith.constant 0 : index
    %c0_58 = arith.constant 0 : index
    %110 = vector.load %arg4[%109, %c0_57, %c0_58] : memref<8x2x32xf32, #tpu.memory_space<vmem>>, vector<1x2x32xf32>
    %111 = vector.shape_cast %110 : vector<1x2x32xf32> to vector<2x32xf32>
    %112 = vector.shape_cast %102 : vector<2x32xf32> to vector<1x2x32xf32>
    tpu.vector_store %arg4[%109, %c0_57, %c0_58], %112 {strides = array<i32>} : memref<8x2x32xf32, #tpu.memory_space<vmem>>, vector<1x2x32xf32>,
    %c7_i32_59 = arith.constant 7 : i32
    %113 = arith.subi %c7_i32_59, %c1_i32 : i32
    %114 = arith.index_cast %113 : i32 to index
    %c0_60 = arith.constant 0 : index
    %c0_61 = arith.constant 0 : index
    %115 = vector.load %arg2[%114, %c0_60, %c0_61] : memref<8x2x128xf32, #tpu.memory_space<vmem>>, vector<1x2x128xf32>
    %116 = vector.shape_cast %115 : vector<1x2x128xf32> to vector<2x128xf32>
    %c1_62 = arith.constant 1 : index
    %c0_63 = arith.constant 0 : index
    %c0_64 = arith.constant 0 : index
    %117 = vector.load %arg7[%c1_62, %c0_63, %c0_64] : memref<2x2x32xf32, #tpu.memory_space<vmem>>, vector<1x2x32xf32>
    %118 = vector.shape_cast %117 : vector<1x2x32xf32> to vector<2x32xf32>
    %c1_65 = arith.constant 1 : index
    %c0_66 = arith.constant 0 : index
    %c0_67 = arith.constant 0 : index
    %119 = vector.load %arg8[%c1_65, %c0_66, %c0_67] : memref<2x2x32xf32, #tpu.memory_space<vmem>>, vector<1x2x32xf32>
    %120 = vector.shape_cast %119 : vector<1x2x32xf32> to vector<2x32xf32>
    %cst_68 = arith.constant dense<0.000000e+00> : vector<2x128xf32>
    %121 = tpu.matmul %118, %6, %cst_68 {dimension_numbers = #tpu.dot_dimension_numbers<[1], [0], [0], [1], [0, 0, 1, 1], [], []>} : vector<2x32xf32>, vector<32x128xf32>, vector<2x128xf32> -> vector<2x128xf32>
    %122 = arith.addf %116, %121 : vector<2x128xf32>
    %123 = vector.extract_strided_slice %122 {offsets = [0, 0], sizes = [2, 96], strides = [1, 1]} : vector<2x128xf32> to vector<2x96xf32>
    %124 = arith.negf %123 : vector<2x96xf32>
    %125 = math.exp %124 : vector<2x96xf32>
    %cst_69 = arith.constant 1.000000e+00 : f32
    %126 = vector.broadcast %cst_69 : f32 to vector<2x96xf32>
    %127 = arith.addf %126, %125 : vector<2x96xf32>
    %128 = arith.divf %126, %127 : vector<2x96xf32>
    %129 = vector.extract_strided_slice %122 {offsets = [0, 96], sizes = [2, 32], strides = [1, 1]} : vector<2x128xf32> to vector<2x32xf32>
    %130 = math.tanh %129 : vector<2x32xf32>
    %131 = vector.extract_strided_slice %128 {offsets = [0, 32], sizes = [2, 32], strides = [1, 1]} : vector<2x96xf32> to vector<2x32xf32>
    %132 = arith.mulf %131, %120 : vector<2x32xf32>
    %133 = vector.extract_strided_slice %128 {offsets = [0, 0], sizes = [2, 32], strides = [1, 1]} : vector<2x96xf32> to vector<2x32xf32>
    %134 = arith.mulf %133, %130 : vector<2x32xf32>
    %135 = arith.addf %132, %134 : vector<2x32xf32>
    %136 = vector.extract_strided_slice %128 {offsets = [0, 64], sizes = [2, 32], strides = [1, 1]} : vector<2x96xf32> to vector<2x32xf32>
    %137 = math.tanh %135 : vector<2x32xf32>
    %138 = arith.mulf %136, %137 : vector<2x32xf32>
    %c1_70 = arith.constant 1 : index
    %c0_71 = arith.constant 0 : index
    %c0_72 = arith.constant 0 : index
    %139 = vector.load %arg7[%c1_70, %c0_71, %c0_72] : memref<2x2x32xf32, #tpu.memory_space<vmem>>, vector<1x2x32xf32>
    %140 = vector.shape_cast %139 : vector<1x2x32xf32> to vector<2x32xf32>
    %141 = vector.shape_cast %138 : vector<2x32xf32> to vector<1x2x32xf32>
    tpu.vector_store %arg7[%c1_70, %c0_71, %c0_72], %141 {strides = array<i32>} : memref<2x2x32xf32, #tpu.memory_space<vmem>>, vector<1x2x32xf32>,
    %c1_73 = arith.constant 1 : index
    %c0_74 = arith.constant 0 : index
    %c0_75 = arith.constant 0 : index
    %142 = vector.load %arg8[%c1_73, %c0_74, %c0_75] : memref<2x2x32xf32, #tpu.memory_space<vmem>>, vector<1x2x32xf32>
    %143 = vector.shape_cast %142 : vector<1x2x32xf32> to vector<2x32xf32>
    %144 = vector.shape_cast %135 : vector<2x32xf32> to vector<1x2x32xf32>
    tpu.vector_store %arg8[%c1_73, %c0_74, %c0_75], %144 {strides = array<i32>} : memref<2x2x32xf32, #tpu.memory_space<vmem>>, vector<1x2x32xf32>,
    %145 = arith.index_cast %113 : i32 to index
    %c0_76 = arith.constant 0 : index
    %c0_77 = arith.constant 0 : index
    %146 = vector.load %arg5[%145, %c0_76, %c0_77] : memref<8x2x32xf32, #tpu.memory_space<vmem>>, vector<1x2x32xf32>
    %147 = vector.shape_cast %146 : vector<1x2x32xf32> to vector<2x32xf32>
    %148 = vector.shape_cast %138 : vector<2x32xf32> to vector<1x2x32xf32>
    tpu.vector_store %arg5[%145, %c0_76, %c0_77], %148 {strides = array<i32>} : memref<8x2x32xf32, #tpu.memory_space<vmem>>, vector<1x2x32xf32>,
    %c2_i32 = arith.constant 2 : i32
    %149 = arith.index_cast %c2_i32 : i32 to index
    %c0_78 = arith.constant 0 : index
    %c0_79 = arith.constant 0 : index
    %150 = vector.load %arg1[%149, %c0_78, %c0_79] : memref<8x2x128xf32, #tpu.memory_space<vmem>>, vector<1x2x128xf32>
    %151 = vector.shape_cast %150 : vector<1x2x128xf32> to vector<2x128xf32>
    %c0_80 = arith.constant 0 : index
    %c0_81 = arith.constant 0 : index
    %c0_82 = arith.constant 0 : index
    %152 = vector.load %arg7[%c0_80, %c0_81, %c0_82] : memref<2x2x32xf32, #tpu.memory_space<vmem>>, vector<1x2x32xf32>
    %153 = vector.shape_cast %152 : vector<1x2x32xf32> to vector<2x32xf32>
    %c0_83 = arith.constant 0 : index
    %c0_84 = arith.constant 0 : index
    %c0_85 = arith.constant 0 : index
    %154 = vector.load %arg8[%c0_83, %c0_84, %c0_85] : memref<2x2x32xf32, #tpu.memory_space<vmem>>, vector<1x2x32xf32>
    %155 = vector.shape_cast %154 : vector<1x2x32xf32> to vector<2x32xf32>
    %cst_86 = arith.constant dense<0.000000e+00> : vector<2x128xf32>
    %156 = tpu.matmul %153, %4, %cst_86 {dimension_numbers = #tpu.dot_dimension_numbers<[1], [0], [0], [1], [0, 0, 1, 1], [], []>} : vector<2x32xf32>, vector<32x128xf32>, vector<2x128xf32> -> vector<2x128xf32>
    %157 = arith.addf %151, %156 : vector<2x128xf32>
    %158 = vector.extract_strided_slice %157 {offsets = [0, 0], sizes = [2, 96], strides = [1, 1]} : vector<2x128xf32> to vector<2x96xf32>
    %159 = arith.negf %158 : vector<2x96xf32>
    %160 = math.exp %159 : vector<2x96xf32>
    %cst_87 = arith.constant 1.000000e+00 : f32
    %161 = vector.broadcast %cst_87 : f32 to vector<2x96xf32>
    %162 = arith.addf %161, %160 : vector<2x96xf32>
    %163 = arith.divf %161, %162 : vector<2x96xf32>
    %164 = vector.extract_strided_slice %157 {offsets = [0, 96], sizes = [2, 32], strides = [1, 1]} : vector<2x128xf32> to vector<2x32xf32>
    %165 = math.tanh %164 : vector<2x32xf32>
    %166 = vector.extract_strided_slice %163 {offsets = [0, 32], sizes = [2, 32], strides = [1, 1]} : vector<2x96xf32> to vector<2x32xf32>
    %167 = arith.mulf %166, %155 : vector<2x32xf32>
    %168 = vector.extract_strided_slice %163 {offsets = [0, 0], sizes = [2, 32], strides = [1, 1]} : vector<2x96xf32> to vector<2x32xf32>
    %169 = arith.mulf %168, %165 : vector<2x32xf32>
    %170 = arith.addf %167, %169 : vector<2x32xf32>
    %171 = vector.extract_strided_slice %163 {offsets = [0, 64], sizes = [2, 32], strides = [1, 1]} : vector<2x96xf32> to vector<2x32xf32>
    %172 = math.tanh %170 : vector<2x32xf32>
    %173 = arith.mulf %171, %172 : vector<2x32xf32>
    %c0_88 = arith.constant 0 : index
    %c0_89 = arith.constant 0 : index
    %c0_90 = arith.constant 0 : index
    %174 = vector.load %arg7[%c0_88, %c0_89, %c0_90] : memref<2x2x32xf32, #tpu.memory_space<vmem>>, vector<1x2x32xf32>
    %175 = vector.shape_cast %174 : vector<1x2x32xf32> to vector<2x32xf32>
    %176 = vector.shape_cast %173 : vector<2x32xf32> to vector<1x2x32xf32>
    tpu.vector_store %arg7[%c0_88, %c0_89, %c0_90], %176 {strides = array<i32>} : memref<2x2x32xf32, #tpu.memory_space<vmem>>, vector<1x2x32xf32>,
    %c0_91 = arith.constant 0 : index
    %c0_92 = arith.constant 0 : index
    %c0_93 = arith.constant 0 : index
    %177 = vector.load %arg8[%c0_91, %c0_92, %c0_93] : memref<2x2x32xf32, #tpu.memory_space<vmem>>, vector<1x2x32xf32>
    %178 = vector.shape_cast %177 : vector<1x2x32xf32> to vector<2x32xf32>
    %179 = vector.shape_cast %170 : vector<2x32xf32> to vector<1x2x32xf32>
    tpu.vector_store %arg8[%c0_91, %c0_92, %c0_93], %179 {strides = array<i32>} : memref<2x2x32xf32, #tpu.memory_space<vmem>>, vector<1x2x32xf32>,
    %180 = arith.index_cast %c2_i32 : i32 to index
    %c0_94 = arith.constant 0 : index
    %c0_95 = arith.constant 0 : index
    %181 = vector.load %arg4[%180, %c0_94, %c0_95] : memref<8x2x32xf32, #tpu.memory_space<vmem>>, vector<1x2x32xf32>
    %182 = vector.shape_cast %181 : vector<1x2x32xf32> to vector<2x32xf32>
    %183 = vector.shape_cast %173 : vector<2x32xf32> to vector<1x2x32xf32>
    tpu.vector_store %arg4[%180, %c0_94, %c0_95], %183 {strides = array<i32>} : memref<8x2x32xf32, #tpu.memory_space<vmem>>, vector<1x2x32xf32>,
    %c7_i32_96 = arith.constant 7 : i32
    %184 = arith.subi %c7_i32_96, %c2_i32 : i32
    %185 = arith.index_cast %184 : i32 to index
    %c0_97 = arith.constant 0 : index
    %c0_98 = arith.constant 0 : index
    %186 = vector.load %arg2[%185, %c0_97, %c0_98] : memref<8x2x128xf32, #tpu.memory_space<vmem>>, vector<1x2x128xf32>
    %187 = vector.shape_cast %186 : vector<1x2x128xf32> to vector<2x128xf32>
    %c1_99 = arith.constant 1 : index
    %c0_100 = arith.constant 0 : index
    %c0_101 = arith.constant 0 : index
    %188 = vector.load %arg7[%c1_99, %c0_100, %c0_101] : memref<2x2x32xf32, #tpu.memory_space<vmem>>, vector<1x2x32xf32>
    %189 = vector.shape_cast %188 : vector<1x2x32xf32> to vector<2x32xf32>
    %c1_102 = arith.constant 1 : index
    %c0_103 = arith.constant 0 : index
    %c0_104 = arith.constant 0 : index
    %190 = vector.load %arg8[%c1_102, %c0_103, %c0_104] : memref<2x2x32xf32, #tpu.memory_space<vmem>>, vector<1x2x32xf32>
    %191 = vector.shape_cast %190 : vector<1x2x32xf32> to vector<2x32xf32>
    %cst_105 = arith.constant dense<0.000000e+00> : vector<2x128xf32>
    %192 = tpu.matmul %189, %6, %cst_105 {dimension_numbers = #tpu.dot_dimension_numbers<[1], [0], [0], [1], [0, 0, 1, 1], [], []>} : vector<2x32xf32>, vector<32x128xf32>, vector<2x128xf32> -> vector<2x128xf32>
    %193 = arith.addf %187, %192 : vector<2x128xf32>
    %194 = vector.extract_strided_slice %193 {offsets = [0, 0], sizes = [2, 96], strides = [1, 1]} : vector<2x128xf32> to vector<2x96xf32>
    %195 = arith.negf %194 : vector<2x96xf32>
    %196 = math.exp %195 : vector<2x96xf32>
    %cst_106 = arith.constant 1.000000e+00 : f32
    %197 = vector.broadcast %cst_106 : f32 to vector<2x96xf32>
    %198 = arith.addf %197, %196 : vector<2x96xf32>
    %199 = arith.divf %197, %198 : vector<2x96xf32>
    %200 = vector.extract_strided_slice %193 {offsets = [0, 96], sizes = [2, 32], strides = [1, 1]} : vector<2x128xf32> to vector<2x32xf32>
    %201 = math.tanh %200 : vector<2x32xf32>
    %202 = vector.extract_strided_slice %199 {offsets = [0, 32], sizes = [2, 32], strides = [1, 1]} : vector<2x96xf32> to vector<2x32xf32>
    %203 = arith.mulf %202, %191 : vector<2x32xf32>
    %204 = vector.extract_strided_slice %199 {offsets = [0, 0], sizes = [2, 32], strides = [1, 1]} : vector<2x96xf32> to vector<2x32xf32>
    %205 = arith.mulf %204, %201 : vector<2x32xf32>
    %206 = arith.addf %203, %205 : vector<2x32xf32>
    %207 = vector.extract_strided_slice %199 {offsets = [0, 64], sizes = [2, 32], strides = [1, 1]} : vector<2x96xf32> to vector<2x32xf32>
    %208 = math.tanh %206 : vector<2x32xf32>
    %209 = arith.mulf %207, %208 : vector<2x32xf32>
    %c1_107 = arith.constant 1 : index
    %c0_108 = arith.constant 0 : index
    %c0_109 = arith.constant 0 : index
    %210 = vector.load %arg7[%c1_107, %c0_108, %c0_109] : memref<2x2x32xf32, #tpu.memory_space<vmem>>, vector<1x2x32xf32>
    %211 = vector.shape_cast %210 : vector<1x2x32xf32> to vector<2x32xf32>
    %212 = vector.shape_cast %209 : vector<2x32xf32> to vector<1x2x32xf32>
    tpu.vector_store %arg7[%c1_107, %c0_108, %c0_109], %212 {strides = array<i32>} : memref<2x2x32xf32, #tpu.memory_space<vmem>>, vector<1x2x32xf32>,
    %c1_110 = arith.constant 1 : index
    %c0_111 = arith.constant 0 : index
    %c0_112 = arith.constant 0 : index
    %213 = vector.load %arg8[%c1_110, %c0_111, %c0_112] : memref<2x2x32xf32, #tpu.memory_space<vmem>>, vector<1x2x32xf32>
    %214 = vector.shape_cast %213 : vector<1x2x32xf32> to vector<2x32xf32>
    %215 = vector.shape_cast %206 : vector<2x32xf32> to vector<1x2x32xf32>
    tpu.vector_store %arg8[%c1_110, %c0_111, %c0_112], %215 {strides = array<i32>} : memref<2x2x32xf32, #tpu.memory_space<vmem>>, vector<1x2x32xf32>,
    %216 = arith.index_cast %184 : i32 to index
    %c0_113 = arith.constant 0 : index
    %c0_114 = arith.constant 0 : index
    %217 = vector.load %arg5[%216, %c0_113, %c0_114] : memref<8x2x32xf32, #tpu.memory_space<vmem>>, vector<1x2x32xf32>
    %218 = vector.shape_cast %217 : vector<1x2x32xf32> to vector<2x32xf32>
    %219 = vector.shape_cast %209 : vector<2x32xf32> to vector<1x2x32xf32>
    tpu.vector_store %arg5[%216, %c0_113, %c0_114], %219 {strides = array<i32>} : memref<8x2x32xf32, #tpu.memory_space<vmem>>, vector<1x2x32xf32>,
    %c3_i32 = arith.constant 3 : i32
    %220 = arith.index_cast %c3_i32 : i32 to index
    %c0_115 = arith.constant 0 : index
    %c0_116 = arith.constant 0 : index
    %221 = vector.load %arg1[%220, %c0_115, %c0_116] : memref<8x2x128xf32, #tpu.memory_space<vmem>>, vector<1x2x128xf32>
    %222 = vector.shape_cast %221 : vector<1x2x128xf32> to vector<2x128xf32>
    %c0_117 = arith.constant 0 : index
    %c0_118 = arith.constant 0 : index
    %c0_119 = arith.constant 0 : index
    %223 = vector.load %arg7[%c0_117, %c0_118, %c0_119] : memref<2x2x32xf32, #tpu.memory_space<vmem>>, vector<1x2x32xf32>
    %224 = vector.shape_cast %223 : vector<1x2x32xf32> to vector<2x32xf32>
    %c0_120 = arith.constant 0 : index
    %c0_121 = arith.constant 0 : index
    %c0_122 = arith.constant 0 : index
    %225 = vector.load %arg8[%c0_120, %c0_121, %c0_122] : memref<2x2x32xf32, #tpu.memory_space<vmem>>, vector<1x2x32xf32>
    %226 = vector.shape_cast %225 : vector<1x2x32xf32> to vector<2x32xf32>
    %cst_123 = arith.constant dense<0.000000e+00> : vector<2x128xf32>
    %227 = tpu.matmul %224, %4, %cst_123 {dimension_numbers = #tpu.dot_dimension_numbers<[1], [0], [0], [1], [0, 0, 1, 1], [], []>} : vector<2x32xf32>, vector<32x128xf32>, vector<2x128xf32> -> vector<2x128xf32>
    %228 = arith.addf %222, %227 : vector<2x128xf32>
    %229 = vector.extract_strided_slice %228 {offsets = [0, 0], sizes = [2, 96], strides = [1, 1]} : vector<2x128xf32> to vector<2x96xf32>
    %230 = arith.negf %229 : vector<2x96xf32>
    %231 = math.exp %230 : vector<2x96xf32>
    %cst_124 = arith.constant 1.000000e+00 : f32
    %232 = vector.broadcast %cst_124 : f32 to vector<2x96xf32>
    %233 = arith.addf %232, %231 : vector<2x96xf32>
    %234 = arith.divf %232, %233 : vector<2x96xf32>
    %235 = vector.extract_strided_slice %228 {offsets = [0, 96], sizes = [2, 32], strides = [1, 1]} : vector<2x128xf32> to vector<2x32xf32>
    %236 = math.tanh %235 : vector<2x32xf32>
    %237 = vector.extract_strided_slice %234 {offsets = [0, 32], sizes = [2, 32], strides = [1, 1]} : vector<2x96xf32> to vector<2x32xf32>
    %238 = arith.mulf %237, %226 : vector<2x32xf32>
    %239 = vector.extract_strided_slice %234 {offsets = [0, 0], sizes = [2, 32], strides = [1, 1]} : vector<2x96xf32> to vector<2x32xf32>
    %240 = arith.mulf %239, %236 : vector<2x32xf32>
    %241 = arith.addf %238, %240 : vector<2x32xf32>
    %242 = vector.extract_strided_slice %234 {offsets = [0, 64], sizes = [2, 32], strides = [1, 1]} : vector<2x96xf32> to vector<2x32xf32>
    %243 = math.tanh %241 : vector<2x32xf32>
    %244 = arith.mulf %242, %243 : vector<2x32xf32>
    %c0_125 = arith.constant 0 : index
    %c0_126 = arith.constant 0 : index
    %c0_127 = arith.constant 0 : index
    %245 = vector.load %arg7[%c0_125, %c0_126, %c0_127] : memref<2x2x32xf32, #tpu.memory_space<vmem>>, vector<1x2x32xf32>
    %246 = vector.shape_cast %245 : vector<1x2x32xf32> to vector<2x32xf32>
    %247 = vector.shape_cast %244 : vector<2x32xf32> to vector<1x2x32xf32>
    tpu.vector_store %arg7[%c0_125, %c0_126, %c0_127], %247 {strides = array<i32>} : memref<2x2x32xf32, #tpu.memory_space<vmem>>, vector<1x2x32xf32>,
    %c0_128 = arith.constant 0 : index
    %c0_129 = arith.constant 0 : index
    %c0_130 = arith.constant 0 : index
    %248 = vector.load %arg8[%c0_128, %c0_129, %c0_130] : memref<2x2x32xf32, #tpu.memory_space<vmem>>, vector<1x2x32xf32>
    %249 = vector.shape_cast %248 : vector<1x2x32xf32> to vector<2x32xf32>
    %250 = vector.shape_cast %241 : vector<2x32xf32> to vector<1x2x32xf32>
    tpu.vector_store %arg8[%c0_128, %c0_129, %c0_130], %250 {strides = array<i32>} : memref<2x2x32xf32, #tpu.memory_space<vmem>>, vector<1x2x32xf32>,
    %251 = arith.index_cast %c3_i32 : i32 to index
    %c0_131 = arith.constant 0 : index
    %c0_132 = arith.constant 0 : index
    %252 = vector.load %arg4[%251, %c0_131, %c0_132] : memref<8x2x32xf32, #tpu.memory_space<vmem>>, vector<1x2x32xf32>
    %253 = vector.shape_cast %252 : vector<1x2x32xf32> to vector<2x32xf32>
    %254 = vector.shape_cast %244 : vector<2x32xf32> to vector<1x2x32xf32>
    tpu.vector_store %arg4[%251, %c0_131, %c0_132], %254 {strides = array<i32>} : memref<8x2x32xf32, #tpu.memory_space<vmem>>, vector<1x2x32xf32>,
    %c7_i32_133 = arith.constant 7 : i32
    %255 = arith.subi %c7_i32_133, %c3_i32 : i32
    %256 = arith.index_cast %255 : i32 to index
    %c0_134 = arith.constant 0 : index
    %c0_135 = arith.constant 0 : index
    %257 = vector.load %arg2[%256, %c0_134, %c0_135] : memref<8x2x128xf32, #tpu.memory_space<vmem>>, vector<1x2x128xf32>
    %258 = vector.shape_cast %257 : vector<1x2x128xf32> to vector<2x128xf32>
    %c1_136 = arith.constant 1 : index
    %c0_137 = arith.constant 0 : index
    %c0_138 = arith.constant 0 : index
    %259 = vector.load %arg7[%c1_136, %c0_137, %c0_138] : memref<2x2x32xf32, #tpu.memory_space<vmem>>, vector<1x2x32xf32>
    %260 = vector.shape_cast %259 : vector<1x2x32xf32> to vector<2x32xf32>
    %c1_139 = arith.constant 1 : index
    %c0_140 = arith.constant 0 : index
    %c0_141 = arith.constant 0 : index
    %261 = vector.load %arg8[%c1_139, %c0_140, %c0_141] : memref<2x2x32xf32, #tpu.memory_space<vmem>>, vector<1x2x32xf32>
    %262 = vector.shape_cast %261 : vector<1x2x32xf32> to vector<2x32xf32>
    %cst_142 = arith.constant dense<0.000000e+00> : vector<2x128xf32>
    %263 = tpu.matmul %260, %6, %cst_142 {dimension_numbers = #tpu.dot_dimension_numbers<[1], [0], [0], [1], [0, 0, 1, 1], [], []>} : vector<2x32xf32>, vector<32x128xf32>, vector<2x128xf32> -> vector<2x128xf32>
    %264 = arith.addf %258, %263 : vector<2x128xf32>
    %265 = vector.extract_strided_slice %264 {offsets = [0, 0], sizes = [2, 96], strides = [1, 1]} : vector<2x128xf32> to vector<2x96xf32>
    %266 = arith.negf %265 : vector<2x96xf32>
    %267 = math.exp %266 : vector<2x96xf32>
    %cst_143 = arith.constant 1.000000e+00 : f32
    %268 = vector.broadcast %cst_143 : f32 to vector<2x96xf32>
    %269 = arith.addf %268, %267 : vector<2x96xf32>
    %270 = arith.divf %268, %269 : vector<2x96xf32>
    %271 = vector.extract_strided_slice %264 {offsets = [0, 96], sizes = [2, 32], strides = [1, 1]} : vector<2x128xf32> to vector<2x32xf32>
    %272 = math.tanh %271 : vector<2x32xf32>
    %273 = vector.extract_strided_slice %270 {offsets = [0, 32], sizes = [2, 32], strides = [1, 1]} : vector<2x96xf32> to vector<2x32xf32>
    %274 = arith.mulf %273, %262 : vector<2x32xf32>
    %275 = vector.extract_strided_slice %270 {offsets = [0, 0], sizes = [2, 32], strides = [1, 1]} : vector<2x96xf32> to vector<2x32xf32>
    %276 = arith.mulf %275, %272 : vector<2x32xf32>
    %277 = arith.addf %274, %276 : vector<2x32xf32>
    %278 = vector.extract_strided_slice %270 {offsets = [0, 64], sizes = [2, 32], strides = [1, 1]} : vector<2x96xf32> to vector<2x32xf32>
    %279 = math.tanh %277 : vector<2x32xf32>
    %280 = arith.mulf %278, %279 : vector<2x32xf32>
    %c1_144 = arith.constant 1 : index
    %c0_145 = arith.constant 0 : index
    %c0_146 = arith.constant 0 : index
    %281 = vector.load %arg7[%c1_144, %c0_145, %c0_146] : memref<2x2x32xf32, #tpu.memory_space<vmem>>, vector<1x2x32xf32>
    %282 = vector.shape_cast %281 : vector<1x2x32xf32> to vector<2x32xf32>
    %283 = vector.shape_cast %280 : vector<2x32xf32> to vector<1x2x32xf32>
    tpu.vector_store %arg7[%c1_144, %c0_145, %c0_146], %283 {strides = array<i32>} : memref<2x2x32xf32, #tpu.memory_space<vmem>>, vector<1x2x32xf32>,
    %c1_147 = arith.constant 1 : index
    %c0_148 = arith.constant 0 : index
    %c0_149 = arith.constant 0 : index
    %284 = vector.load %arg8[%c1_147, %c0_148, %c0_149] : memref<2x2x32xf32, #tpu.memory_space<vmem>>, vector<1x2x32xf32>
    %285 = vector.shape_cast %284 : vector<1x2x32xf32> to vector<2x32xf32>
    %286 = vector.shape_cast %277 : vector<2x32xf32> to vector<1x2x32xf32>
    tpu.vector_store %arg8[%c1_147, %c0_148, %c0_149], %286 {strides = array<i32>} : memref<2x2x32xf32, #tpu.memory_space<vmem>>, vector<1x2x32xf32>,
    %287 = arith.index_cast %255 : i32 to index
    %c0_150 = arith.constant 0 : index
    %c0_151 = arith.constant 0 : index
    %288 = vector.load %arg5[%287, %c0_150, %c0_151] : memref<8x2x32xf32, #tpu.memory_space<vmem>>, vector<1x2x32xf32>
    %289 = vector.shape_cast %288 : vector<1x2x32xf32> to vector<2x32xf32>
    %290 = vector.shape_cast %280 : vector<2x32xf32> to vector<1x2x32xf32>
    tpu.vector_store %arg5[%287, %c0_150, %c0_151], %290 {strides = array<i32>} : memref<8x2x32xf32, #tpu.memory_space<vmem>>, vector<1x2x32xf32>,
    %c4_i32 = arith.constant 4 : i32
    %291 = arith.index_cast %c4_i32 : i32 to index
    %c0_152 = arith.constant 0 : index
    %c0_153 = arith.constant 0 : index
    %292 = vector.load %arg1[%291, %c0_152, %c0_153] : memref<8x2x128xf32, #tpu.memory_space<vmem>>, vector<1x2x128xf32>
    %293 = vector.shape_cast %292 : vector<1x2x128xf32> to vector<2x128xf32>
    %c0_154 = arith.constant 0 : index
    %c0_155 = arith.constant 0 : index
    %c0_156 = arith.constant 0 : index
    %294 = vector.load %arg7[%c0_154, %c0_155, %c0_156] : memref<2x2x32xf32, #tpu.memory_space<vmem>>, vector<1x2x32xf32>
    %295 = vector.shape_cast %294 : vector<1x2x32xf32> to vector<2x32xf32>
    %c0_157 = arith.constant 0 : index
    %c0_158 = arith.constant 0 : index
    %c0_159 = arith.constant 0 : index
    %296 = vector.load %arg8[%c0_157, %c0_158, %c0_159] : memref<2x2x32xf32, #tpu.memory_space<vmem>>, vector<1x2x32xf32>
    %297 = vector.shape_cast %296 : vector<1x2x32xf32> to vector<2x32xf32>
    %cst_160 = arith.constant dense<0.000000e+00> : vector<2x128xf32>
    %298 = tpu.matmul %295, %4, %cst_160 {dimension_numbers = #tpu.dot_dimension_numbers<[1], [0], [0], [1], [0, 0, 1, 1], [], []>} : vector<2x32xf32>, vector<32x128xf32>, vector<2x128xf32> -> vector<2x128xf32>
    %299 = arith.addf %293, %298 : vector<2x128xf32>
    %300 = vector.extract_strided_slice %299 {offsets = [0, 0], sizes = [2, 96], strides = [1, 1]} : vector<2x128xf32> to vector<2x96xf32>
    %301 = arith.negf %300 : vector<2x96xf32>
    %302 = math.exp %301 : vector<2x96xf32>
    %cst_161 = arith.constant 1.000000e+00 : f32
    %303 = vector.broadcast %cst_161 : f32 to vector<2x96xf32>
    %304 = arith.addf %303, %302 : vector<2x96xf32>
    %305 = arith.divf %303, %304 : vector<2x96xf32>
    %306 = vector.extract_strided_slice %299 {offsets = [0, 96], sizes = [2, 32], strides = [1, 1]} : vector<2x128xf32> to vector<2x32xf32>
    %307 = math.tanh %306 : vector<2x32xf32>
    %308 = vector.extract_strided_slice %305 {offsets = [0, 32], sizes = [2, 32], strides = [1, 1]} : vector<2x96xf32> to vector<2x32xf32>
    %309 = arith.mulf %308, %297 : vector<2x32xf32>
    %310 = vector.extract_strided_slice %305 {offsets = [0, 0], sizes = [2, 32], strides = [1, 1]} : vector<2x96xf32> to vector<2x32xf32>
    %311 = arith.mulf %310, %307 : vector<2x32xf32>
    %312 = arith.addf %309, %311 : vector<2x32xf32>
    %313 = vector.extract_strided_slice %305 {offsets = [0, 64], sizes = [2, 32], strides = [1, 1]} : vector<2x96xf32> to vector<2x32xf32>
    %314 = math.tanh %312 : vector<2x32xf32>
    %315 = arith.mulf %313, %314 : vector<2x32xf32>
    %c0_162 = arith.constant 0 : index
    %c0_163 = arith.constant 0 : index
    %c0_164 = arith.constant 0 : index
    %316 = vector.load %arg7[%c0_162, %c0_163, %c0_164] : memref<2x2x32xf32, #tpu.memory_space<vmem>>, vector<1x2x32xf32>
    %317 = vector.shape_cast %316 : vector<1x2x32xf32> to vector<2x32xf32>
    %318 = vector.shape_cast %315 : vector<2x32xf32> to vector<1x2x32xf32>
    tpu.vector_store %arg7[%c0_162, %c0_163, %c0_164], %318 {strides = array<i32>} : memref<2x2x32xf32, #tpu.memory_space<vmem>>, vector<1x2x32xf32>,
    %c0_165 = arith.constant 0 : index
    %c0_166 = arith.constant 0 : index
    %c0_167 = arith.constant 0 : index
    %319 = vector.load %arg8[%c0_165, %c0_166, %c0_167] : memref<2x2x32xf32, #tpu.memory_space<vmem>>, vector<1x2x32xf32>
    %320 = vector.shape_cast %319 : vector<1x2x32xf32> to vector<2x32xf32>
    %321 = vector.shape_cast %312 : vector<2x32xf32> to vector<1x2x32xf32>
    tpu.vector_store %arg8[%c0_165, %c0_166, %c0_167], %321 {strides = array<i32>} : memref<2x2x32xf32, #tpu.memory_space<vmem>>, vector<1x2x32xf32>,
    %322 = arith.index_cast %c4_i32 : i32 to index
    %c0_168 = arith.constant 0 : index
    %c0_169 = arith.constant 0 : index
    %323 = vector.load %arg4[%322, %c0_168, %c0_169] : memref<8x2x32xf32, #tpu.memory_space<vmem>>, vector<1x2x32xf32>
    %324 = vector.shape_cast %323 : vector<1x2x32xf32> to vector<2x32xf32>
    %325 = vector.shape_cast %315 : vector<2x32xf32> to vector<1x2x32xf32>
    tpu.vector_store %arg4[%322, %c0_168, %c0_169], %325 {strides = array<i32>} : memref<8x2x32xf32, #tpu.memory_space<vmem>>, vector<1x2x32xf32>,
    %c7_i32_170 = arith.constant 7 : i32
    %326 = arith.subi %c7_i32_170, %c4_i32 : i32
    %327 = arith.index_cast %326 : i32 to index
    %c0_171 = arith.constant 0 : index
    %c0_172 = arith.constant 0 : index
    %328 = vector.load %arg2[%327, %c0_171, %c0_172] : memref<8x2x128xf32, #tpu.memory_space<vmem>>, vector<1x2x128xf32>
    %329 = vector.shape_cast %328 : vector<1x2x128xf32> to vector<2x128xf32>
    %c1_173 = arith.constant 1 : index
    %c0_174 = arith.constant 0 : index
    %c0_175 = arith.constant 0 : index
    %330 = vector.load %arg7[%c1_173, %c0_174, %c0_175] : memref<2x2x32xf32, #tpu.memory_space<vmem>>, vector<1x2x32xf32>
    %331 = vector.shape_cast %330 : vector<1x2x32xf32> to vector<2x32xf32>
    %c1_176 = arith.constant 1 : index
    %c0_177 = arith.constant 0 : index
    %c0_178 = arith.constant 0 : index
    %332 = vector.load %arg8[%c1_176, %c0_177, %c0_178] : memref<2x2x32xf32, #tpu.memory_space<vmem>>, vector<1x2x32xf32>
    %333 = vector.shape_cast %332 : vector<1x2x32xf32> to vector<2x32xf32>
    %cst_179 = arith.constant dense<0.000000e+00> : vector<2x128xf32>
    %334 = tpu.matmul %331, %6, %cst_179 {dimension_numbers = #tpu.dot_dimension_numbers<[1], [0], [0], [1], [0, 0, 1, 1], [], []>} : vector<2x32xf32>, vector<32x128xf32>, vector<2x128xf32> -> vector<2x128xf32>
    %335 = arith.addf %329, %334 : vector<2x128xf32>
    %336 = vector.extract_strided_slice %335 {offsets = [0, 0], sizes = [2, 96], strides = [1, 1]} : vector<2x128xf32> to vector<2x96xf32>
    %337 = arith.negf %336 : vector<2x96xf32>
    %338 = math.exp %337 : vector<2x96xf32>
    %cst_180 = arith.constant 1.000000e+00 : f32
    %339 = vector.broadcast %cst_180 : f32 to vector<2x96xf32>
    %340 = arith.addf %339, %338 : vector<2x96xf32>
    %341 = arith.divf %339, %340 : vector<2x96xf32>
    %342 = vector.extract_strided_slice %335 {offsets = [0, 96], sizes = [2, 32], strides = [1, 1]} : vector<2x128xf32> to vector<2x32xf32>
    %343 = math.tanh %342 : vector<2x32xf32>
    %344 = vector.extract_strided_slice %341 {offsets = [0, 32], sizes = [2, 32], strides = [1, 1]} : vector<2x96xf32> to vector<2x32xf32>
    %345 = arith.mulf %344, %333 : vector<2x32xf32>
    %346 = vector.extract_strided_slice %341 {offsets = [0, 0], sizes = [2, 32], strides = [1, 1]} : vector<2x96xf32> to vector<2x32xf32>
    %347 = arith.mulf %346, %343 : vector<2x32xf32>
    %348 = arith.addf %345, %347 : vector<2x32xf32>
    %349 = vector.extract_strided_slice %341 {offsets = [0, 64], sizes = [2, 32], strides = [1, 1]} : vector<2x96xf32> to vector<2x32xf32>
    %350 = math.tanh %348 : vector<2x32xf32>
    %351 = arith.mulf %349, %350 : vector<2x32xf32>
    %c1_181 = arith.constant 1 : index
    %c0_182 = arith.constant 0 : index
    %c0_183 = arith.constant 0 : index
    %352 = vector.load %arg7[%c1_181, %c0_182, %c0_183] : memref<2x2x32xf32, #tpu.memory_space<vmem>>, vector<1x2x32xf32>
    %353 = vector.shape_cast %352 : vector<1x2x32xf32> to vector<2x32xf32>
    %354 = vector.shape_cast %351 : vector<2x32xf32> to vector<1x2x32xf32>
    tpu.vector_store %arg7[%c1_181, %c0_182, %c0_183], %354 {strides = array<i32>} : memref<2x2x32xf32, #tpu.memory_space<vmem>>, vector<1x2x32xf32>,
    %c1_184 = arith.constant 1 : index
    %c0_185 = arith.constant 0 : index
    %c0_186 = arith.constant 0 : index
    %355 = vector.load %arg8[%c1_184, %c0_185, %c0_186] : memref<2x2x32xf32, #tpu.memory_space<vmem>>, vector<1x2x32xf32>
    %356 = vector.shape_cast %355 : vector<1x2x32xf32> to vector<2x32xf32>
    %357 = vector.shape_cast %348 : vector<2x32xf32> to vector<1x2x32xf32>
    tpu.vector_store %arg8[%c1_184, %c0_185, %c0_186], %357 {strides = array<i32>} : memref<2x2x32xf32, #tpu.memory_space<vmem>>, vector<1x2x32xf32>,
    %358 = arith.index_cast %326 : i32 to index
    %c0_187 = arith.constant 0 : index
    %c0_188 = arith.constant 0 : index
    %359 = vector.load %arg5[%358, %c0_187, %c0_188] : memref<8x2x32xf32, #tpu.memory_space<vmem>>, vector<1x2x32xf32>
    %360 = vector.shape_cast %359 : vector<1x2x32xf32> to vector<2x32xf32>
    %361 = vector.shape_cast %351 : vector<2x32xf32> to vector<1x2x32xf32>
    tpu.vector_store %arg5[%358, %c0_187, %c0_188], %361 {strides = array<i32>} : memref<8x2x32xf32, #tpu.memory_space<vmem>>, vector<1x2x32xf32>,
    %c5_i32 = arith.constant 5 : i32
    %362 = arith.index_cast %c5_i32 : i32 to index
    %c0_189 = arith.constant 0 : index
    %c0_190 = arith.constant 0 : index
    %363 = vector.load %arg1[%362, %c0_189, %c0_190] : memref<8x2x128xf32, #tpu.memory_space<vmem>>, vector<1x2x128xf32>
    %364 = vector.shape_cast %363 : vector<1x2x128xf32> to vector<2x128xf32>
    %c0_191 = arith.constant 0 : index
    %c0_192 = arith.constant 0 : index
    %c0_193 = arith.constant 0 : index
    %365 = vector.load %arg7[%c0_191, %c0_192, %c0_193] : memref<2x2x32xf32, #tpu.memory_space<vmem>>, vector<1x2x32xf32>
    %366 = vector.shape_cast %365 : vector<1x2x32xf32> to vector<2x32xf32>
    %c0_194 = arith.constant 0 : index
    %c0_195 = arith.constant 0 : index
    %c0_196 = arith.constant 0 : index
    %367 = vector.load %arg8[%c0_194, %c0_195, %c0_196] : memref<2x2x32xf32, #tpu.memory_space<vmem>>, vector<1x2x32xf32>
    %368 = vector.shape_cast %367 : vector<1x2x32xf32> to vector<2x32xf32>
    %cst_197 = arith.constant dense<0.000000e+00> : vector<2x128xf32>
    %369 = tpu.matmul %366, %4, %cst_197 {dimension_numbers = #tpu.dot_dimension_numbers<[1], [0], [0], [1], [0, 0, 1, 1], [], []>} : vector<2x32xf32>, vector<32x128xf32>, vector<2x128xf32> -> vector<2x128xf32>
    %370 = arith.addf %364, %369 : vector<2x128xf32>
    %371 = vector.extract_strided_slice %370 {offsets = [0, 0], sizes = [2, 96], strides = [1, 1]} : vector<2x128xf32> to vector<2x96xf32>
    %372 = arith.negf %371 : vector<2x96xf32>
    %373 = math.exp %372 : vector<2x96xf32>
    %cst_198 = arith.constant 1.000000e+00 : f32
    %374 = vector.broadcast %cst_198 : f32 to vector<2x96xf32>
    %375 = arith.addf %374, %373 : vector<2x96xf32>
    %376 = arith.divf %374, %375 : vector<2x96xf32>
    %377 = vector.extract_strided_slice %370 {offsets = [0, 96], sizes = [2, 32], strides = [1, 1]} : vector<2x128xf32> to vector<2x32xf32>
    %378 = math.tanh %377 : vector<2x32xf32>
    %379 = vector.extract_strided_slice %376 {offsets = [0, 32], sizes = [2, 32], strides = [1, 1]} : vector<2x96xf32> to vector<2x32xf32>
    %380 = arith.mulf %379, %368 : vector<2x32xf32>
    %381 = vector.extract_strided_slice %376 {offsets = [0, 0], sizes = [2, 32], strides = [1, 1]} : vector<2x96xf32> to vector<2x32xf32>
    %382 = arith.mulf %381, %378 : vector<2x32xf32>
    %383 = arith.addf %380, %382 : vector<2x32xf32>
    %384 = vector.extract_strided_slice %376 {offsets = [0, 64], sizes = [2, 32], strides = [1, 1]} : vector<2x96xf32> to vector<2x32xf32>
    %385 = math.tanh %383 : vector<2x32xf32>
    %386 = arith.mulf %384, %385 : vector<2x32xf32>
    %c0_199 = arith.constant 0 : index
    %c0_200 = arith.constant 0 : index
    %c0_201 = arith.constant 0 : index
    %387 = vector.load %arg7[%c0_199, %c0_200, %c0_201] : memref<2x2x32xf32, #tpu.memory_space<vmem>>, vector<1x2x32xf32>
    %388 = vector.shape_cast %387 : vector<1x2x32xf32> to vector<2x32xf32>
    %389 = vector.shape_cast %386 : vector<2x32xf32> to vector<1x2x32xf32>
    tpu.vector_store %arg7[%c0_199, %c0_200, %c0_201], %389 {strides = array<i32>} : memref<2x2x32xf32, #tpu.memory_space<vmem>>, vector<1x2x32xf32>,
    %c0_202 = arith.constant 0 : index
    %c0_203 = arith.constant 0 : index
    %c0_204 = arith.constant 0 : index
    %390 = vector.load %arg8[%c0_202, %c0_203, %c0_204] : memref<2x2x32xf32, #tpu.memory_space<vmem>>, vector<1x2x32xf32>
    %391 = vector.shape_cast %390 : vector<1x2x32xf32> to vector<2x32xf32>
    %392 = vector.shape_cast %383 : vector<2x32xf32> to vector<1x2x32xf32>
    tpu.vector_store %arg8[%c0_202, %c0_203, %c0_204], %392 {strides = array<i32>} : memref<2x2x32xf32, #tpu.memory_space<vmem>>, vector<1x2x32xf32>,
    %393 = arith.index_cast %c5_i32 : i32 to index
    %c0_205 = arith.constant 0 : index
    %c0_206 = arith.constant 0 : index
    %394 = vector.load %arg4[%393, %c0_205, %c0_206] : memref<8x2x32xf32, #tpu.memory_space<vmem>>, vector<1x2x32xf32>
    %395 = vector.shape_cast %394 : vector<1x2x32xf32> to vector<2x32xf32>
    %396 = vector.shape_cast %386 : vector<2x32xf32> to vector<1x2x32xf32>
    tpu.vector_store %arg4[%393, %c0_205, %c0_206], %396 {strides = array<i32>} : memref<8x2x32xf32, #tpu.memory_space<vmem>>, vector<1x2x32xf32>,
    %c7_i32_207 = arith.constant 7 : i32
    %397 = arith.subi %c7_i32_207, %c5_i32 : i32
    %398 = arith.index_cast %397 : i32 to index
    %c0_208 = arith.constant 0 : index
    %c0_209 = arith.constant 0 : index
    %399 = vector.load %arg2[%398, %c0_208, %c0_209] : memref<8x2x128xf32, #tpu.memory_space<vmem>>, vector<1x2x128xf32>
    %400 = vector.shape_cast %399 : vector<1x2x128xf32> to vector<2x128xf32>
    %c1_210 = arith.constant 1 : index
    %c0_211 = arith.constant 0 : index
    %c0_212 = arith.constant 0 : index
    %401 = vector.load %arg7[%c1_210, %c0_211, %c0_212] : memref<2x2x32xf32, #tpu.memory_space<vmem>>, vector<1x2x32xf32>
    %402 = vector.shape_cast %401 : vector<1x2x32xf32> to vector<2x32xf32>
    %c1_213 = arith.constant 1 : index
    %c0_214 = arith.constant 0 : index
    %c0_215 = arith.constant 0 : index
    %403 = vector.load %arg8[%c1_213, %c0_214, %c0_215] : memref<2x2x32xf32, #tpu.memory_space<vmem>>, vector<1x2x32xf32>
    %404 = vector.shape_cast %403 : vector<1x2x32xf32> to vector<2x32xf32>
    %cst_216 = arith.constant dense<0.000000e+00> : vector<2x128xf32>
    %405 = tpu.matmul %402, %6, %cst_216 {dimension_numbers = #tpu.dot_dimension_numbers<[1], [0], [0], [1], [0, 0, 1, 1], [], []>} : vector<2x32xf32>, vector<32x128xf32>, vector<2x128xf32> -> vector<2x128xf32>
    %406 = arith.addf %400, %405 : vector<2x128xf32>
    %407 = vector.extract_strided_slice %406 {offsets = [0, 0], sizes = [2, 96], strides = [1, 1]} : vector<2x128xf32> to vector<2x96xf32>
    %408 = arith.negf %407 : vector<2x96xf32>
    %409 = math.exp %408 : vector<2x96xf32>
    %cst_217 = arith.constant 1.000000e+00 : f32
    %410 = vector.broadcast %cst_217 : f32 to vector<2x96xf32>
    %411 = arith.addf %410, %409 : vector<2x96xf32>
    %412 = arith.divf %410, %411 : vector<2x96xf32>
    %413 = vector.extract_strided_slice %406 {offsets = [0, 96], sizes = [2, 32], strides = [1, 1]} : vector<2x128xf32> to vector<2x32xf32>
    %414 = math.tanh %413 : vector<2x32xf32>
    %415 = vector.extract_strided_slice %412 {offsets = [0, 32], sizes = [2, 32], strides = [1, 1]} : vector<2x96xf32> to vector<2x32xf32>
    %416 = arith.mulf %415, %404 : vector<2x32xf32>
    %417 = vector.extract_strided_slice %412 {offsets = [0, 0], sizes = [2, 32], strides = [1, 1]} : vector<2x96xf32> to vector<2x32xf32>
    %418 = arith.mulf %417, %414 : vector<2x32xf32>
    %419 = arith.addf %416, %418 : vector<2x32xf32>
    %420 = vector.extract_strided_slice %412 {offsets = [0, 64], sizes = [2, 32], strides = [1, 1]} : vector<2x96xf32> to vector<2x32xf32>
    %421 = math.tanh %419 : vector<2x32xf32>
    %422 = arith.mulf %420, %421 : vector<2x32xf32>
    %c1_218 = arith.constant 1 : index
    %c0_219 = arith.constant 0 : index
    %c0_220 = arith.constant 0 : index
    %423 = vector.load %arg7[%c1_218, %c0_219, %c0_220] : memref<2x2x32xf32, #tpu.memory_space<vmem>>, vector<1x2x32xf32>
    %424 = vector.shape_cast %423 : vector<1x2x32xf32> to vector<2x32xf32>
    %425 = vector.shape_cast %422 : vector<2x32xf32> to vector<1x2x32xf32>
    tpu.vector_store %arg7[%c1_218, %c0_219, %c0_220], %425 {strides = array<i32>} : memref<2x2x32xf32, #tpu.memory_space<vmem>>, vector<1x2x32xf32>,
    %c1_221 = arith.constant 1 : index
    %c0_222 = arith.constant 0 : index
    %c0_223 = arith.constant 0 : index
    %426 = vector.load %arg8[%c1_221, %c0_222, %c0_223] : memref<2x2x32xf32, #tpu.memory_space<vmem>>, vector<1x2x32xf32>
    %427 = vector.shape_cast %426 : vector<1x2x32xf32> to vector<2x32xf32>
    %428 = vector.shape_cast %419 : vector<2x32xf32> to vector<1x2x32xf32>
    tpu.vector_store %arg8[%c1_221, %c0_222, %c0_223], %428 {strides = array<i32>} : memref<2x2x32xf32, #tpu.memory_space<vmem>>, vector<1x2x32xf32>,
    %429 = arith.index_cast %397 : i32 to index
    %c0_224 = arith.constant 0 : index
    %c0_225 = arith.constant 0 : index
    %430 = vector.load %arg5[%429, %c0_224, %c0_225] : memref<8x2x32xf32, #tpu.memory_space<vmem>>, vector<1x2x32xf32>
    %431 = vector.shape_cast %430 : vector<1x2x32xf32> to vector<2x32xf32>
    %432 = vector.shape_cast %422 : vector<2x32xf32> to vector<1x2x32xf32>
    tpu.vector_store %arg5[%429, %c0_224, %c0_225], %432 {strides = array<i32>} : memref<8x2x32xf32, #tpu.memory_space<vmem>>, vector<1x2x32xf32>,
    %c6_i32 = arith.constant 6 : i32
    %433 = arith.index_cast %c6_i32 : i32 to index
    %c0_226 = arith.constant 0 : index
    %c0_227 = arith.constant 0 : index
    %434 = vector.load %arg1[%433, %c0_226, %c0_227] : memref<8x2x128xf32, #tpu.memory_space<vmem>>, vector<1x2x128xf32>
    %435 = vector.shape_cast %434 : vector<1x2x128xf32> to vector<2x128xf32>
    %c0_228 = arith.constant 0 : index
    %c0_229 = arith.constant 0 : index
    %c0_230 = arith.constant 0 : index
    %436 = vector.load %arg7[%c0_228, %c0_229, %c0_230] : memref<2x2x32xf32, #tpu.memory_space<vmem>>, vector<1x2x32xf32>
    %437 = vector.shape_cast %436 : vector<1x2x32xf32> to vector<2x32xf32>
    %c0_231 = arith.constant 0 : index
    %c0_232 = arith.constant 0 : index
    %c0_233 = arith.constant 0 : index
    %438 = vector.load %arg8[%c0_231, %c0_232, %c0_233] : memref<2x2x32xf32, #tpu.memory_space<vmem>>, vector<1x2x32xf32>
    %439 = vector.shape_cast %438 : vector<1x2x32xf32> to vector<2x32xf32>
    %cst_234 = arith.constant dense<0.000000e+00> : vector<2x128xf32>
    %440 = tpu.matmul %437, %4, %cst_234 {dimension_numbers = #tpu.dot_dimension_numbers<[1], [0], [0], [1], [0, 0, 1, 1], [], []>} : vector<2x32xf32>, vector<32x128xf32>, vector<2x128xf32> -> vector<2x128xf32>
    %441 = arith.addf %435, %440 : vector<2x128xf32>
    %442 = vector.extract_strided_slice %441 {offsets = [0, 0], sizes = [2, 96], strides = [1, 1]} : vector<2x128xf32> to vector<2x96xf32>
    %443 = arith.negf %442 : vector<2x96xf32>
    %444 = math.exp %443 : vector<2x96xf32>
    %cst_235 = arith.constant 1.000000e+00 : f32
    %445 = vector.broadcast %cst_235 : f32 to vector<2x96xf32>
    %446 = arith.addf %445, %444 : vector<2x96xf32>
    %447 = arith.divf %445, %446 : vector<2x96xf32>
    %448 = vector.extract_strided_slice %441 {offsets = [0, 96], sizes = [2, 32], strides = [1, 1]} : vector<2x128xf32> to vector<2x32xf32>
    %449 = math.tanh %448 : vector<2x32xf32>
    %450 = vector.extract_strided_slice %447 {offsets = [0, 32], sizes = [2, 32], strides = [1, 1]} : vector<2x96xf32> to vector<2x32xf32>
    %451 = arith.mulf %450, %439 : vector<2x32xf32>
    %452 = vector.extract_strided_slice %447 {offsets = [0, 0], sizes = [2, 32], strides = [1, 1]} : vector<2x96xf32> to vector<2x32xf32>
    %453 = arith.mulf %452, %449 : vector<2x32xf32>
    %454 = arith.addf %451, %453 : vector<2x32xf32>
    %455 = vector.extract_strided_slice %447 {offsets = [0, 64], sizes = [2, 32], strides = [1, 1]} : vector<2x96xf32> to vector<2x32xf32>
    %456 = math.tanh %454 : vector<2x32xf32>
    %457 = arith.mulf %455, %456 : vector<2x32xf32>
    %c0_236 = arith.constant 0 : index
    %c0_237 = arith.constant 0 : index
    %c0_238 = arith.constant 0 : index
    %458 = vector.load %arg7[%c0_236, %c0_237, %c0_238] : memref<2x2x32xf32, #tpu.memory_space<vmem>>, vector<1x2x32xf32>
    %459 = vector.shape_cast %458 : vector<1x2x32xf32> to vector<2x32xf32>
    %460 = vector.shape_cast %457 : vector<2x32xf32> to vector<1x2x32xf32>
    tpu.vector_store %arg7[%c0_236, %c0_237, %c0_238], %460 {strides = array<i32>} : memref<2x2x32xf32, #tpu.memory_space<vmem>>, vector<1x2x32xf32>,
    %c0_239 = arith.constant 0 : index
    %c0_240 = arith.constant 0 : index
    %c0_241 = arith.constant 0 : index
    %461 = vector.load %arg8[%c0_239, %c0_240, %c0_241] : memref<2x2x32xf32, #tpu.memory_space<vmem>>, vector<1x2x32xf32>
    %462 = vector.shape_cast %461 : vector<1x2x32xf32> to vector<2x32xf32>
    %463 = vector.shape_cast %454 : vector<2x32xf32> to vector<1x2x32xf32>
    tpu.vector_store %arg8[%c0_239, %c0_240, %c0_241], %463 {strides = array<i32>} : memref<2x2x32xf32, #tpu.memory_space<vmem>>, vector<1x2x32xf32>,
    %464 = arith.index_cast %c6_i32 : i32 to index
    %c0_242 = arith.constant 0 : index
    %c0_243 = arith.constant 0 : index
    %465 = vector.load %arg4[%464, %c0_242, %c0_243] : memref<8x2x32xf32, #tpu.memory_space<vmem>>, vector<1x2x32xf32>
    %466 = vector.shape_cast %465 : vector<1x2x32xf32> to vector<2x32xf32>
    %467 = vector.shape_cast %457 : vector<2x32xf32> to vector<1x2x32xf32>
    tpu.vector_store %arg4[%464, %c0_242, %c0_243], %467 {strides = array<i32>} : memref<8x2x32xf32, #tpu.memory_space<vmem>>, vector<1x2x32xf32>,
    %c7_i32_244 = arith.constant 7 : i32
    %468 = arith.subi %c7_i32_244, %c6_i32 : i32
    %469 = arith.index_cast %468 : i32 to index
    %c0_245 = arith.constant 0 : index
    %c0_246 = arith.constant 0 : index
    %470 = vector.load %arg2[%469, %c0_245, %c0_246] : memref<8x2x128xf32, #tpu.memory_space<vmem>>, vector<1x2x128xf32>
    %471 = vector.shape_cast %470 : vector<1x2x128xf32> to vector<2x128xf32>
    %c1_247 = arith.constant 1 : index
    %c0_248 = arith.constant 0 : index
    %c0_249 = arith.constant 0 : index
    %472 = vector.load %arg7[%c1_247, %c0_248, %c0_249] : memref<2x2x32xf32, #tpu.memory_space<vmem>>, vector<1x2x32xf32>
    %473 = vector.shape_cast %472 : vector<1x2x32xf32> to vector<2x32xf32>
    %c1_250 = arith.constant 1 : index
    %c0_251 = arith.constant 0 : index
    %c0_252 = arith.constant 0 : index
    %474 = vector.load %arg8[%c1_250, %c0_251, %c0_252] : memref<2x2x32xf32, #tpu.memory_space<vmem>>, vector<1x2x32xf32>
    %475 = vector.shape_cast %474 : vector<1x2x32xf32> to vector<2x32xf32>
    %cst_253 = arith.constant dense<0.000000e+00> : vector<2x128xf32>
    %476 = tpu.matmul %473, %6, %cst_253 {dimension_numbers = #tpu.dot_dimension_numbers<[1], [0], [0], [1], [0, 0, 1, 1], [], []>} : vector<2x32xf32>, vector<32x128xf32>, vector<2x128xf32> -> vector<2x128xf32>
    %477 = arith.addf %471, %476 : vector<2x128xf32>
    %478 = vector.extract_strided_slice %477 {offsets = [0, 0], sizes = [2, 96], strides = [1, 1]} : vector<2x128xf32> to vector<2x96xf32>
    %479 = arith.negf %478 : vector<2x96xf32>
    %480 = math.exp %479 : vector<2x96xf32>
    %cst_254 = arith.constant 1.000000e+00 : f32
    %481 = vector.broadcast %cst_254 : f32 to vector<2x96xf32>
    %482 = arith.addf %481, %480 : vector<2x96xf32>
    %483 = arith.divf %481, %482 : vector<2x96xf32>
    %484 = vector.extract_strided_slice %477 {offsets = [0, 96], sizes = [2, 32], strides = [1, 1]} : vector<2x128xf32> to vector<2x32xf32>
    %485 = math.tanh %484 : vector<2x32xf32>
    %486 = vector.extract_strided_slice %483 {offsets = [0, 32], sizes = [2, 32], strides = [1, 1]} : vector<2x96xf32> to vector<2x32xf32>
    %487 = arith.mulf %486, %475 : vector<2x32xf32>
    %488 = vector.extract_strided_slice %483 {offsets = [0, 0], sizes = [2, 32], strides = [1, 1]} : vector<2x96xf32> to vector<2x32xf32>
    %489 = arith.mulf %488, %485 : vector<2x32xf32>
    %490 = arith.addf %487, %489 : vector<2x32xf32>
    %491 = vector.extract_strided_slice %483 {offsets = [0, 64], sizes = [2, 32], strides = [1, 1]} : vector<2x96xf32> to vector<2x32xf32>
    %492 = math.tanh %490 : vector<2x32xf32>
    %493 = arith.mulf %491, %492 : vector<2x32xf32>
    %c1_255 = arith.constant 1 : index
    %c0_256 = arith.constant 0 : index
    %c0_257 = arith.constant 0 : index
    %494 = vector.load %arg7[%c1_255, %c0_256, %c0_257] : memref<2x2x32xf32, #tpu.memory_space<vmem>>, vector<1x2x32xf32>
    %495 = vector.shape_cast %494 : vector<1x2x32xf32> to vector<2x32xf32>
    %496 = vector.shape_cast %493 : vector<2x32xf32> to vector<1x2x32xf32>
    tpu.vector_store %arg7[%c1_255, %c0_256, %c0_257], %496 {strides = array<i32>} : memref<2x2x32xf32, #tpu.memory_space<vmem>>, vector<1x2x32xf32>,
    %c1_258 = arith.constant 1 : index
    %c0_259 = arith.constant 0 : index
    %c0_260 = arith.constant 0 : index
    %497 = vector.load %arg8[%c1_258, %c0_259, %c0_260] : memref<2x2x32xf32, #tpu.memory_space<vmem>>, vector<1x2x32xf32>
    %498 = vector.shape_cast %497 : vector<1x2x32xf32> to vector<2x32xf32>
    %499 = vector.shape_cast %490 : vector<2x32xf32> to vector<1x2x32xf32>
    tpu.vector_store %arg8[%c1_258, %c0_259, %c0_260], %499 {strides = array<i32>} : memref<2x2x32xf32, #tpu.memory_space<vmem>>, vector<1x2x32xf32>,
    %500 = arith.index_cast %468 : i32 to index
    %c0_261 = arith.constant 0 : index
    %c0_262 = arith.constant 0 : index
    %501 = vector.load %arg5[%500, %c0_261, %c0_262] : memref<8x2x32xf32, #tpu.memory_space<vmem>>, vector<1x2x32xf32>
    %502 = vector.shape_cast %501 : vector<1x2x32xf32> to vector<2x32xf32>
    %503 = vector.shape_cast %493 : vector<2x32xf32> to vector<1x2x32xf32>
    tpu.vector_store %arg5[%500, %c0_261, %c0_262], %503 {strides = array<i32>} : memref<8x2x32xf32, #tpu.memory_space<vmem>>, vector<1x2x32xf32>,
    %c7_i32_263 = arith.constant 7 : i32
    %504 = arith.index_cast %c7_i32_263 : i32 to index
    %c0_264 = arith.constant 0 : index
    %c0_265 = arith.constant 0 : index
    %505 = vector.load %arg1[%504, %c0_264, %c0_265] : memref<8x2x128xf32, #tpu.memory_space<vmem>>, vector<1x2x128xf32>
    %506 = vector.shape_cast %505 : vector<1x2x128xf32> to vector<2x128xf32>
    %c0_266 = arith.constant 0 : index
    %c0_267 = arith.constant 0 : index
    %c0_268 = arith.constant 0 : index
    %507 = vector.load %arg7[%c0_266, %c0_267, %c0_268] : memref<2x2x32xf32, #tpu.memory_space<vmem>>, vector<1x2x32xf32>
    %508 = vector.shape_cast %507 : vector<1x2x32xf32> to vector<2x32xf32>
    %c0_269 = arith.constant 0 : index
    %c0_270 = arith.constant 0 : index
    %c0_271 = arith.constant 0 : index
    %509 = vector.load %arg8[%c0_269, %c0_270, %c0_271] : memref<2x2x32xf32, #tpu.memory_space<vmem>>, vector<1x2x32xf32>
    %510 = vector.shape_cast %509 : vector<1x2x32xf32> to vector<2x32xf32>
    %cst_272 = arith.constant dense<0.000000e+00> : vector<2x128xf32>
    %511 = tpu.matmul %508, %4, %cst_272 {dimension_numbers = #tpu.dot_dimension_numbers<[1], [0], [0], [1], [0, 0, 1, 1], [], []>} : vector<2x32xf32>, vector<32x128xf32>, vector<2x128xf32> -> vector<2x128xf32>
    %512 = arith.addf %506, %511 : vector<2x128xf32>
    %513 = vector.extract_strided_slice %512 {offsets = [0, 0], sizes = [2, 96], strides = [1, 1]} : vector<2x128xf32> to vector<2x96xf32>
    %514 = arith.negf %513 : vector<2x96xf32>
    %515 = math.exp %514 : vector<2x96xf32>
    %cst_273 = arith.constant 1.000000e+00 : f32
    %516 = vector.broadcast %cst_273 : f32 to vector<2x96xf32>
    %517 = arith.addf %516, %515 : vector<2x96xf32>
    %518 = arith.divf %516, %517 : vector<2x96xf32>
    %519 = vector.extract_strided_slice %512 {offsets = [0, 96], sizes = [2, 32], strides = [1, 1]} : vector<2x128xf32> to vector<2x32xf32>
    %520 = math.tanh %519 : vector<2x32xf32>
    %521 = vector.extract_strided_slice %518 {offsets = [0, 32], sizes = [2, 32], strides = [1, 1]} : vector<2x96xf32> to vector<2x32xf32>
    %522 = arith.mulf %521, %510 : vector<2x32xf32>
    %523 = vector.extract_strided_slice %518 {offsets = [0, 0], sizes = [2, 32], strides = [1, 1]} : vector<2x96xf32> to vector<2x32xf32>
    %524 = arith.mulf %523, %520 : vector<2x32xf32>
    %525 = arith.addf %522, %524 : vector<2x32xf32>
    %526 = vector.extract_strided_slice %518 {offsets = [0, 64], sizes = [2, 32], strides = [1, 1]} : vector<2x96xf32> to vector<2x32xf32>
    %527 = math.tanh %525 : vector<2x32xf32>
    %528 = arith.mulf %526, %527 : vector<2x32xf32>
    %c0_274 = arith.constant 0 : index
    %c0_275 = arith.constant 0 : index
    %c0_276 = arith.constant 0 : index
    %529 = vector.load %arg7[%c0_274, %c0_275, %c0_276] : memref<2x2x32xf32, #tpu.memory_space<vmem>>, vector<1x2x32xf32>
    %530 = vector.shape_cast %529 : vector<1x2x32xf32> to vector<2x32xf32>
    %531 = vector.shape_cast %528 : vector<2x32xf32> to vector<1x2x32xf32>
    tpu.vector_store %arg7[%c0_274, %c0_275, %c0_276], %531 {strides = array<i32>} : memref<2x2x32xf32, #tpu.memory_space<vmem>>, vector<1x2x32xf32>,
    %c0_277 = arith.constant 0 : index
    %c0_278 = arith.constant 0 : index
    %c0_279 = arith.constant 0 : index
    %532 = vector.load %arg8[%c0_277, %c0_278, %c0_279] : memref<2x2x32xf32, #tpu.memory_space<vmem>>, vector<1x2x32xf32>
    %533 = vector.shape_cast %532 : vector<1x2x32xf32> to vector<2x32xf32>
    %534 = vector.shape_cast %525 : vector<2x32xf32> to vector<1x2x32xf32>
    tpu.vector_store %arg8[%c0_277, %c0_278, %c0_279], %534 {strides = array<i32>} : memref<2x2x32xf32, #tpu.memory_space<vmem>>, vector<1x2x32xf32>,
    %535 = arith.index_cast %c7_i32_263 : i32 to index
    %c0_280 = arith.constant 0 : index
    %c0_281 = arith.constant 0 : index
    %536 = vector.load %arg4[%535, %c0_280, %c0_281] : memref<8x2x32xf32, #tpu.memory_space<vmem>>, vector<1x2x32xf32>
    %537 = vector.shape_cast %536 : vector<1x2x32xf32> to vector<2x32xf32>
    %538 = vector.shape_cast %528 : vector<2x32xf32> to vector<1x2x32xf32>
    tpu.vector_store %arg4[%535, %c0_280, %c0_281], %538 {strides = array<i32>} : memref<8x2x32xf32, #tpu.memory_space<vmem>>, vector<1x2x32xf32>,
    %c7_i32_282 = arith.constant 7 : i32
    %539 = arith.subi %c7_i32_282, %c7_i32_263 : i32
    %540 = arith.index_cast %539 : i32 to index
    %c0_283 = arith.constant 0 : index
    %c0_284 = arith.constant 0 : index
    %541 = vector.load %arg2[%540, %c0_283, %c0_284] : memref<8x2x128xf32, #tpu.memory_space<vmem>>, vector<1x2x128xf32>
    %542 = vector.shape_cast %541 : vector<1x2x128xf32> to vector<2x128xf32>
    %c1_285 = arith.constant 1 : index
    %c0_286 = arith.constant 0 : index
    %c0_287 = arith.constant 0 : index
    %543 = vector.load %arg7[%c1_285, %c0_286, %c0_287] : memref<2x2x32xf32, #tpu.memory_space<vmem>>, vector<1x2x32xf32>
    %544 = vector.shape_cast %543 : vector<1x2x32xf32> to vector<2x32xf32>
    %c1_288 = arith.constant 1 : index
    %c0_289 = arith.constant 0 : index
    %c0_290 = arith.constant 0 : index
    %545 = vector.load %arg8[%c1_288, %c0_289, %c0_290] : memref<2x2x32xf32, #tpu.memory_space<vmem>>, vector<1x2x32xf32>
    %546 = vector.shape_cast %545 : vector<1x2x32xf32> to vector<2x32xf32>
    %cst_291 = arith.constant dense<0.000000e+00> : vector<2x128xf32>
    %547 = tpu.matmul %544, %6, %cst_291 {dimension_numbers = #tpu.dot_dimension_numbers<[1], [0], [0], [1], [0, 0, 1, 1], [], []>} : vector<2x32xf32>, vector<32x128xf32>, vector<2x128xf32> -> vector<2x128xf32>
    %548 = arith.addf %542, %547 : vector<2x128xf32>
    %549 = vector.extract_strided_slice %548 {offsets = [0, 0], sizes = [2, 96], strides = [1, 1]} : vector<2x128xf32> to vector<2x96xf32>
    %550 = arith.negf %549 : vector<2x96xf32>
    %551 = math.exp %550 : vector<2x96xf32>
    %cst_292 = arith.constant 1.000000e+00 : f32
    %552 = vector.broadcast %cst_292 : f32 to vector<2x96xf32>
    %553 = arith.addf %552, %551 : vector<2x96xf32>
    %554 = arith.divf %552, %553 : vector<2x96xf32>
    %555 = vector.extract_strided_slice %548 {offsets = [0, 96], sizes = [2, 32], strides = [1, 1]} : vector<2x128xf32> to vector<2x32xf32>
    %556 = math.tanh %555 : vector<2x32xf32>
    %557 = vector.extract_strided_slice %554 {offsets = [0, 32], sizes = [2, 32], strides = [1, 1]} : vector<2x96xf32> to vector<2x32xf32>
    %558 = arith.mulf %557, %546 : vector<2x32xf32>
    %559 = vector.extract_strided_slice %554 {offsets = [0, 0], sizes = [2, 32], strides = [1, 1]} : vector<2x96xf32> to vector<2x32xf32>
    %560 = arith.mulf %559, %556 : vector<2x32xf32>
    %561 = arith.addf %558, %560 : vector<2x32xf32>
    %562 = vector.extract_strided_slice %554 {offsets = [0, 64], sizes = [2, 32], strides = [1, 1]} : vector<2x96xf32> to vector<2x32xf32>
    %563 = math.tanh %561 : vector<2x32xf32>
    %564 = arith.mulf %562, %563 : vector<2x32xf32>
    %c1_293 = arith.constant 1 : index
    %c0_294 = arith.constant 0 : index
    %c0_295 = arith.constant 0 : index
    %565 = vector.load %arg7[%c1_293, %c0_294, %c0_295] : memref<2x2x32xf32, #tpu.memory_space<vmem>>, vector<1x2x32xf32>
    %566 = vector.shape_cast %565 : vector<1x2x32xf32> to vector<2x32xf32>
    %567 = vector.shape_cast %564 : vector<2x32xf32> to vector<1x2x32xf32>
    tpu.vector_store %arg7[%c1_293, %c0_294, %c0_295], %567 {strides = array<i32>} : memref<2x2x32xf32, #tpu.memory_space<vmem>>, vector<1x2x32xf32>,
    %c1_296 = arith.constant 1 : index
    %c0_297 = arith.constant 0 : index
    %c0_298 = arith.constant 0 : index
    %568 = vector.load %arg8[%c1_296, %c0_297, %c0_298] : memref<2x2x32xf32, #tpu.memory_space<vmem>>, vector<1x2x32xf32>
    %569 = vector.shape_cast %568 : vector<1x2x32xf32> to vector<2x32xf32>
    %570 = vector.shape_cast %561 : vector<2x32xf32> to vector<1x2x32xf32>
    tpu.vector_store %arg8[%c1_296, %c0_297, %c0_298], %570 {strides = array<i32>} : memref<2x2x32xf32, #tpu.memory_space<vmem>>, vector<1x2x32xf32>,
    %571 = arith.index_cast %539 : i32 to index
    %c0_299 = arith.constant 0 : index
    %c0_300 = arith.constant 0 : index
    %572 = vector.load %arg5[%571, %c0_299, %c0_300] : memref<8x2x32xf32, #tpu.memory_space<vmem>>, vector<1x2x32xf32>
    %573 = vector.shape_cast %572 : vector<1x2x32xf32> to vector<2x32xf32>
    %574 = vector.shape_cast %564 : vector<2x32xf32> to vector<1x2x32xf32>
    tpu.vector_store %arg5[%571, %c0_299, %c0_300], %574 {strides = array<i32>} : memref<8x2x32xf32, #tpu.memory_space<vmem>>, vector<1x2x32xf32>,
    %c8_i32 = arith.constant 8 : i32
    %c0_i32_301 = arith.constant 0 : i32
    %575 = arith.cmpi eq, %arg0, %c0_i32_301 : i32
    %576 = arith.extui %575 : i1 to i32
    %c0_i32_302 = arith.constant 0 : i32
    %577 = arith.cmpi ne, %576, %c0_i32_302 : i32
    scf.if %577 {
      %c0_303 = arith.constant 0 : index
      %c0_304 = arith.constant 0 : index
      %c0_305 = arith.constant 0 : index
      %578 = vector.load %arg7[%c0_303, %c0_304, %c0_305] : memref<2x2x32xf32, #tpu.memory_space<vmem>>, vector<2x2x32xf32>
      %c0_306 = arith.constant 0 : index
      %c0_307 = arith.constant 0 : index
      %c0_308 = arith.constant 0 : index
      %579 = vector.load %arg6[%c0_306, %c0_307, %c0_308] : memref<2x2x32xf32, #tpu.memory_space<vmem>>, vector<2x2x32xf32>
      tpu.vector_store %arg6[%c0_306, %c0_307, %c0_308], %578 {strides = array<i32>} : memref<2x2x32xf32, #tpu.memory_space<vmem>>, vector<2x2x32xf32>,
    } else {
    }
    return
  }
  func.func @transform_0(%arg0: i32) -> (i32, i32, i32) {
    %c0_i32 = arith.constant 0 : i32
    %c0_i32_0 = arith.constant 0 : i32
    %c0_i32_1 = arith.constant 0 : i32
    return %arg0, %c0_i32, %c0_i32_0 : i32, i32, i32
  }
  func.func @transform_1(%arg0: i32) -> (i32, i32, i32) {
    %c0_i32 = arith.constant 0 : i32
    %0 = arith.subi %c0_i32, %arg0 : i32
    %c0_i32_0 = arith.constant 0 : i32
    %c0_i32_1 = arith.constant 0 : i32
    %c0_i32_2 = arith.constant 0 : i32
    return %0, %c0_i32_0, %c0_i32_1 : i32, i32, i32
  }
  func.func @transform_2(%arg0: i32) -> (i32, i32, i32) {
    %c0_i32 = arith.constant 0 : i32
    %c0_i32_0 = arith.constant 0 : i32
    %c0_i32_1 = arith.constant 0 : i32
    %c0_i32_2 = arith.constant 0 : i32
    return %c0_i32, %c0_i32_0, %c0_i32_1 : i32, i32, i32
  }
  func.func @transform_3(%arg0: i32) -> (i32, i32, i32) {
    %c0_i32 = arith.constant 0 : i32
    %c0_i32_0 = arith.constant 0 : i32
    %c0_i32_1 = arith.constant 0 : i32
    return %arg0, %c0_i32, %c0_i32_0 : i32, i32, i32
  }
  func.func @transform_4(%arg0: i32) -> (i32, i32, i32) {
    %c0_i32 = arith.constant 0 : i32
    %0 = arith.subi %c0_i32, %arg0 : i32
    %c0_i32_0 = arith.constant 0 : i32
    %c0_i32_1 = arith.constant 0 : i32
    %c0_i32_2 = arith.constant 0 : i32
    return %0, %c0_i32_0, %c0_i32_1 : i32, i32, i32
  }
  func.func @transform_5(%arg0: i32) -> (i32, i32, i32) {
    %c0_i32 = arith.constant 0 : i32
    %c0_i32_0 = arith.constant 0 : i32
    %c0_i32_1 = arith.constant 0 : i32
    %c0_i32_2 = arith.constant 0 : i32
    return %c0_i32, %c0_i32_0, %c0_i32_1 : i32, i32, i32
  }
}

</mosaic_0001>

<llo_original>
// kernel: lstm_encoder_forward.2
$region0: #{lstm_encoder_forward.2}
  #allocation0 [shape = 'u32[]', space=smem, size = 0x4, offset = 0x4, fixed_abs, tag = 'smem constant byte address 0x4 - core index']
  #allocation1 [shape = 'u32[144,128]{1,0:T(1,128)}', space=vmem, size = 0x12000, scoped, tag = 'internal scratch']
  #allocation2 [shape = 'f32[2,2,32]{2,1,0:T(2,128)}', space=vmem, size = 0x800, scoped, tag = 'scratch operand']
  #allocation3 [shape = 'f32[2,2,32]{2,1,0:T(2,128)}', space=vmem, size = 0x800, scoped, tag = 'scratch operand']
  %s0 = inlined_call_operand.vmem [shape: f32[8,2,128], index: 0, kind: input, shape index: {}]
  %s1 = inlined_call_operand.vmem [shape: f32[8,2,128], index: 1, kind: input, shape index: {}]
  %s2 = inlined_call_operand.vmem [shape: f32[2,32,128], index: 2, kind: input, shape index: {}]
  %s3 = inlined_call_operand.vmem [shape: f32[8,2,32], index: 3, kind: output, shape index: {0}]
  %s4 = inlined_call_operand.vmem [shape: f32[8,2,32], index: 4, kind: output, shape index: {1}]
  %s5 = inlined_call_operand.vmem [shape: f32[2,2,32], index: 5, kind: output, shape index: {2}]
  %6 = xla_tuple %s3, %s4, %s5
  %s7 = sld [smem:[#allocation0]]
  $region46: #{lstm_encoder_forward.2} parent=0
    _
  %s9 = ssub.s32 1, %s7
  %s10 = scalar_select 0, %s9, %s7
  // Predicated region
  $region2: #{lstm_encoder_forward.2} parent=0 // pred_check
    _
  $region3: #{lstm_encoder_forward.2} parent=0 // pred_check_branch
    %12 = sbr.rel (0) target = $region5
  $region4: #{lstm_encoder_forward.2} parent=0 // pred_region
    _
  $region5: #{lstm_encoder_forward.2} parent=0 // pred_fallthru
    _
  // Predicated region
  $region6: #{lstm_encoder_forward.2} parent=0 // pred_check
    _
  $region7: #{lstm_encoder_forward.2} parent=0 // pred_check_branch
    %14 = sbr.rel (0) target = $region9
  $region8: #{lstm_encoder_forward.2} parent=0 // pred_region
    %s15 = ssub.s32 0, 0
    %s16 = smul.u32 8, %s15
    %p17 = scmp.lt.s32.totalorder %s16, 7
    %s18 = scalar_select %p17, %s16, 7
    %s19 = smul.addr %s18, 2
    %s20 = scalar_lea.vmem %s1, %s19
    %s21 = ssub.s32 0, 0
    %s22 = smul.u32 8, %s21
  $region9: #{lstm_encoder_forward.2} parent=0 // pred_fallthru
    _
  // Predicated region
  $region10: #{lstm_encoder_forward.2} parent=0 // pred_check
    _
  $region11: #{lstm_encoder_forward.2} parent=0 // pred_check_branch
    %24 = sbr.rel (0) target = $region13
  $region12: #{lstm_encoder_forward.2} parent=0 // pred_region
    _
  $region13: #{lstm_encoder_forward.2} parent=0 // pred_fallthru
    _
  %s25 = ssub.s32 0, 0
  %s26 = smul.u32 8, %s25
  %p27 = scmp.lt.s32.totalorder %s26, 7
  %s28 = scalar_select %p27, %s26, 7
  %s29 = smul.addr %s28, 2
  %s30 = scalar_lea.vmem %s1, %s29
  %s31 = ssub.s32 0, 0
  %s32 = smul.u32 8, %s31
  %p33 = scmp.lt.s32.totalorder %s32, 7
  %s34 = scalar_select %p33, %s32, 7
  %s35 = smul.addr %s34, 2
  %s36 = scalar_lea.vmem %s4, %s35
  %s37 = ssub.s32 0, 0
  %s38 = smul.u32 8, %s37
  %p39 = scmp.lt.s32.totalorder %s38, 7
  %s40 = scalar_select %p39, %s38, 7
  %s41 = smul.addr %s40, 2
  %s42 = scalar_lea.vmem %s1, %s41
  %s43 = ssub.s32 0, 0
  %s44 = smul.u32 8, %s43
  %s45 = ssub.s32 0, 0
  %s46 = smul.u32 8, %s45
  %p47 = scmp.lt.s32.totalorder %s46, 7
  %s48 = scalar_select %p47, %s46, 7
  %s49 = smul.addr %s48, 2
  %s50 = scalar_lea.vmem %s4, %s49
  %s51 = ssub.s32 0, 0
  %s52 = smul.u32 8, %s51
  %p53 = scmp.eq.s32.totalorder 0, 0
  // Predicated region
  $region14: #{lstm_encoder_forward.2} parent=0 // pred_check
    %p54 = pneg %p53
  $region15: #{lstm_encoder_forward.2} parent=0 // pred_check_branch
    %56 = sbr.rel (%p54) target = $region17
  $region16: #{lstm_encoder_forward.2} parent=0 // pred_region
    %vm57 = vcmask 254976
    %58 = vst.msk [vmem:[#allocation2] sm:$0x3] %vm57, 0.0
    %59 = vst.msk [vmem:[#allocation2 + $0x2] sm:$0x3] %vm57, 0.0
    %60 = vst.msk [vmem:[#allocation3] sm:$0x3] %vm57, 0.0
    %61 = vst.msk [vmem:[#allocation3 + $0x2] sm:$0x3] %vm57, 0.0
  $region17: #{lstm_encoder_forward.2} parent=0 // pred_fallthru
    _
  %v62 = vld [vmem:[%s2] sm:$0xff]
  %v63 = vld [vmem:[%s2 + $0x8] sm:$0xff]
  %v64 = vld [vmem:[%s2 + $0x10] sm:$0xff]
  %v65 = vld [vmem:[%s2 + $0x18] sm:$0xff]
  %s66 = scalar_lea.vmem %s2, 32
  %v67 = vld [vmem:[%s66] sm:$0xff]
  %v68 = vld [vmem:[%s66 + $0x8] sm:$0xff]
  %v69 = vld [vmem:[%s66 + $0x10] sm:$0xff]
  %v70 = vld [vmem:[%s66 + $0x18] sm:$0xff]
  %v71 = vld [vmem:[%s0] sm:$0x3]
  %v72 = vld [vmem:[#allocation2] sm:$0x3]
  %v73 = vld [vmem:[#allocation3] sm:$0x3]
  %vm74 = vcmask 261120
  %v76 = vsel %vm74, %v72, 0
  %78 = vmatprep.subr.mxu0 0.0
  %79 = vmatpush1.msra.mxu0 0.0
  %80 = vmatprep.subr.mxu0 0.0
  %81 = vmatpush1.msra.mxu0 0.0
  %82 = vmatprep.subr.mxu0 0.0
  %83 = vmatpush1.msra.mxu0 0.0
  %84 = vmatprep.subr.mxu0 0.0
  %85 = vmatpush1.msra.mxu0 0.0
  %86 = vmatprep.subr.mxu0 0.0
  %87 = vmatpush1.msra.mxu0 0.0
  %88 = vmatprep.subr.mxu0 0.0
  %89 = vmatpush1.msra.mxu0 0.0
  %90 = vmatprep.subr.mxu0 0.0
  %91 = vmatpush1.msra.mxu0 0.0
  %92 = vmatprep.subr.mxu0 0.0
  %93 = vmatpush1.msra.mxu0 0.0
  %94 = vmatprep.subr.mxu0 0.0
  %95 = vmatpush1.msra.mxu0 0.0
  %96 = vmatprep.subr.mxu0 0.0
  %97 = vmatpush1.msra.mxu0 0.0
  %98 = vmatprep.subr.mxu0 0.0
  %99 = vmatpush1.msra.mxu0 0.0
  %100 = vmatprep.subr.mxu0 0.0
  %101 = vmatpush1.msra.mxu0 0.0
  %102 = vmatprep.subr.mxu0 0.0
  %103 = vmatpush1.msra.mxu0 %v65
  %104 = vmatprep.subr.mxu0 0.0
  %105 = vmatpush1.msra.mxu0 %v64
  %106 = vmatprep.subr.mxu0 0.0
  %107 = vmatpush1.msra.mxu0 %v63
  %108 = vmatprep.subr.mxu0 0.0
  %109 = vmatpush1.msra.mxu0 %v62
  %110 = vmatprep.subr.mxu0 0.0
  %111 = vmatpush2.msra.mxu0 0.0
  %112 = vmatprep.subr.mxu0 0.0
  %113 = vmatpush2.msra.mxu0 0.0
  %114 = vmatprep.subr.mxu0 0.0
  %115 = vmatpush2.msra.mxu0 0.0
  %116 = vmatprep.subr.mxu0 0.0
  %117 = vmatpush2.msra.mxu0 0.0
  %118 = vmatprep.subr.mxu0 0.0
  %119 = vmatpush2.msra.mxu0 0.0
  %120 = vmatprep.subr.mxu0 0.0
  %121 = vmatpush2.msra.mxu0 0.0
  %122 = vmatprep.subr.mxu0 0.0
  %123 = vmatpush2.msra.mxu0 0.0
  %124 = vmatprep.subr.mxu0 0.0
  %125 = vmatpush2.msra.mxu0 0.0
  %126 = vmatprep.subr.mxu0 0.0
  %127 = vmatpush2.msra.mxu0 0.0
  %128 = vmatprep.subr.mxu0 0.0
  %129 = vmatpush2.msra.mxu0 0.0
  %130 = vmatprep.subr.mxu0 0.0
  %131 = vmatpush2.msra.mxu0 0.0
  %132 = vmatprep.subr.mxu0 0.0
  %133 = vmatpush2.msra.mxu0 0.0
  %134 = vmatprep.subr.mxu0 0.0
  %135 = vmatpush2.msra.mxu0 0.0
  %136 = vmatprep.subr.mxu0 0.0
  %137 = vmatpush2.msra.mxu0 0.0
  %138 = vmatprep.subr.mxu0 0.0
  %139 = vmatpush2.msra.mxu0 0.0
  %140 = vmatprep.subr.mxu0 0.0
  %141 = vmatpush2.msra.mxu0 0.0
  %142 = vmatprep.mubr.f32.mxu0 0.0
  %143 = vmatmul.mubr.f32.gmra.mxu0 %v76
  %v144 = vpop.f32.mrf.mxu0
  %v145 = vadd.f32 0.0, %v144
  %v146 = vpop.f32.mrf.mxu0
  %147 = vdwg.mxu0
  %v148 = vadd.f32 %v71, %v145
  %v149 = vxor.u32 %v148, 2147483648
  %v150 = vmul.f32 %v149, 1.442695
  %v151 = vpow.pop %v150
  %v152 = vadd.f32 %v151, 1.0
  %v153 = vrcp.pop %v152
  %v154 = vmul.f32 1.0, %v153
  %v155 = vtanh.pop %v148
  %157 = vrot.lane.b32.xlu0 %v73, 32
  %v158 = vpop.permute.xlu0 %157
  %v160 = vmul.f32 %v154, %v158
  %162 = vrot.lane.b32.xlu0 %v155, 32
  %v163 = vpop.permute.xlu0 %162
  %v165 = vmul.f32 %v154, %v163
  %167 = vrot.lane.b32.xlu0 %v165, 32
  %v168 = vpop.permute.xlu0 %167
  %v170 = vadd.f32 %v160, %v168
  %v171 = vtanh.pop %v170
  %173 = vrot.lane.b32.xlu0 %v171, 32
  %v174 = vpop.permute.xlu0 %173
  %v176 = vmul.f32 %v154, %v174
  %178 = vrot.lane.b32.xlu0 %v176, 64
  %v179 = vpop.permute.xlu0 %178
  %vm181 = vcmask 254976
  %182 = vst.msk [vmem:[#allocation2] sm:$0x3] %vm181, %v179
  %184 = vrot.lane.b32.xlu0 %v170, 96
  %v185 = vpop.permute.xlu0 %184
  %187 = vst.msk [vmem:[#allocation3] sm:$0x3] %vm181, %v185
  %188 = vst.msk [vmem:[%s3] sm:$0x3] %vm181, %v179
  %s189 = scalar_lea.vmem %s42, 14
  %v190 = vld [vmem:[%s189] sm:$0x3]
  %s191 = scalar_lea.vmem [#allocation2], 2
  %v192 = vld [vmem:[%s191] sm:$0x3]
  %s193 = scalar_lea.vmem [#allocation3], 2
  %v194 = vld [vmem:[%s193] sm:$0x3]
  %v196 = vsel %vm74, %v192, 0
  %198 = vmatprep.subr.mxu0 0.0
  %199 = vmatpush1.msra.mxu0 0.0
  %200 = vmatprep.subr.mxu0 0.0
  %201 = vmatpush1.msra.mxu0 0.0
  %202 = vmatprep.subr.mxu0 0.0
  %203 = vmatpush1.msra.mxu0 0.0
  %204 = vmatprep.subr.mxu0 0.0
  %205 = vmatpush1.msra.mxu0 0.0
  %206 = vmatprep.subr.mxu0 0.0
  %207 = vmatpush1.msra.mxu0 0.0
  %208 = vmatprep.subr.mxu0 0.0
  %209 = vmatpush1.msra.mxu0 0.0
  %210 = vmatprep.subr.mxu0 0.0
  %211 = vmatpush1.msra.mxu0 0.0
  %212 = vmatprep.subr.mxu0 0.0
  %213 = vmatpush1.msra.mxu0 0.0
  %214 = vmatprep.subr.mxu0 0.0
  %215 = vmatpush1.msra.mxu0 0.0
  %216 = vmatprep.subr.mxu0 0.0
  %217 = vmatpush1.msra.mxu0 0.0
  %218 = vmatprep.subr.mxu0 0.0
  %219 = vmatpush1.msra.mxu0 0.0
  %220 = vmatprep.subr.mxu0 0.0
  %221 = vmatpush1.msra.mxu0 0.0
  %222 = vmatprep.subr.mxu0 0.0
  %223 = vmatpush1.msra.mxu0 %v70
  %224 = vmatprep.subr.mxu0 0.0
  %225 = vmatpush1.msra.mxu0 %v69
  %226 = vmatprep.subr.mxu0 0.0
  %227 = vmatpush1.msra.mxu0 %v68
  %228 = vmatprep.subr.mxu0 0.0
  %229 = vmatpush1.msra.mxu0 %v67
  %230 = vmatprep.subr.mxu0 0.0
  %231 = vmatpush2.msra.mxu0 0.0
  %232 = vmatprep.subr.mxu0 0.0
  %233 = vmatpush2.msra.mxu0 0.0
  %234 = vmatprep.subr.mxu0 0.0
  %235 = vmatpush2.msra.mxu0 0.0
  %236 = vmatprep.subr.mxu0 0.0
  %237 = vmatpush2.msra.mxu0 0.0
  %238 = vmatprep.subr.mxu0 0.0
  %239 = vmatpush2.msra.mxu0 0.0
  %240 = vmatprep.subr.mxu0 0.0
  %241 = vmatpush2.msra.mxu0 0.0
  %242 = vmatprep.subr.mxu0 0.0
  %243 = vmatpush2.msra.mxu0 0.0
  %244 = vmatprep.subr.mxu0 0.0
  %245 = vmatpush2.msra.mxu0 0.0
  %246 = vmatprep.subr.mxu0 0.0
  %247 = vmatpush2.msra.mxu0 0.0
  %248 = vmatprep.subr.mxu0 0.0
  %249 = vmatpush2.msra.mxu0 0.0
  %250 = vmatprep.subr.mxu0 0.0
  %251 = vmatpush2.msra.mxu0 0.0
  %252 = vmatprep.subr.mxu0 0.0
  %253 = vmatpush2.msra.mxu0 0.0
  %254 = vmatprep.subr.mxu0 0.0
  %255 = vmatpush2.msra.mxu0 0.0
  %256 = vmatprep.subr.mxu0 0.0
  %257 = vmatpush2.msra.mxu0 0.0
  %258 = vmatprep.subr.mxu0 0.0
  %259 = vmatpush2.msra.mxu0 0.0
  %260 = vmatprep.subr.mxu0 0.0
  %261 = vmatpush2.msra.mxu0 0.0
  %262 = vmatprep.mubr.f32.mxu0 0.0
  %263 = vmatmul.mubr.f32.gmra.mxu0 %v196
  %v264 = vpop.f32.mrf.mxu0
  %v265 = vadd.f32 0.0, %v264
  %v266 = vpop.f32.mrf.mxu0
  %267 = vdwg.mxu0
  %v268 = vadd.f32 %v190, %v265
  %v269 = vxor.u32 %v268, 2147483648
  %v270 = vmul.f32 %v269, 1.442695
  %v271 = vpow.pop %v270
  %v272 = vadd.f32 %v271, 1.0
  %v273 = vrcp.pop %v272
  %v274 = vmul.f32 1.0, %v273
  %v275 = vtanh.pop %v268
  %277 = vrot.lane.b32.xlu0 %v194, 32
  %v278 = vpop.permute.xlu0 %277
  %v280 = vmul.f32 %v274, %v278
  %282 = vrot.lane.b32.xlu0 %v275, 32
  %v283 = vpop.permute.xlu0 %282
  %v285 = vmul.f32 %v274, %v283
  %287 = vrot.lane.b32.xlu0 %v285, 32
  %v288 = vpop.permute.xlu0 %287
  %v290 = vadd.f32 %v280, %v288
  %v291 = vtanh.pop %v290
  %293 = vrot.lane.b32.xlu0 %v291, 32
  %v294 = vpop.permute.xlu0 %293
  %v296 = vmul.f32 %v274, %v294
  %298 = vrot.lane.b32.xlu0 %v296, 64
  %v299 = vpop.permute.xlu0 %298
  %301 = vst.msk [vmem:[%s191] sm:$0x3] %vm181, %v299
  %303 = vrot.lane.b32.xlu0 %v290, 96
  %v304 = vpop.permute.xlu0 %303
  %306 = vst.msk [vmem:[%s193] sm:$0x3] %vm181, %v304
  %s307 = scalar_lea.vmem %s50, 14
  %308 = vst.msk [vmem:[%s307] sm:$0x3] %vm181, %v299
  %s309 = scalar_lea.vmem %s0, 2
  %v310 = vld [vmem:[%s309] sm:$0x3]
  %v311 = vld [vmem:[#allocation2] sm:$0x3]
  %v312 = vld [vmem:[#allocation3] sm:$0x3]
  %v314 = vsel %vm74, %v311, 0
  %316 = vmatprep.subr.mxu0 0.0
  %317 = vmatpush1.msra.mxu0 0.0
  %318 = vmatprep.subr.mxu0 0.0
  %319 = vmatpush1.msra.mxu0 0.0
  %320 = vmatprep.subr.mxu0 0.0
  %321 = vmatpush1.msra.mxu0 0.0
  %322 = vmatprep.subr.mxu0 0.0
  %323 = vmatpush1.msra.mxu0 0.0
  %324 = vmatprep.subr.mxu0 0.0
  %325 = vmatpush1.msra.mxu0 0.0
  %326 = vmatprep.subr.mxu0 0.0
  %327 = vmatpush1.msra.mxu0 0.0
  %328 = vmatprep.subr.mxu0 0.0
  %329 = vmatpush1.msra.mxu0 0.0
  %330 = vmatprep.subr.mxu0 0.0
  %331 = vmatpush1.msra.mxu0 0.0
  %332 = vmatprep.subr.mxu0 0.0
  %333 = vmatpush1.msra.mxu0 0.0
  %334 = vmatprep.subr.mxu0 0.0
  %335 = vmatpush1.msra.mxu0 0.0
  %336 = vmatprep.subr.mxu0 0.0
  %337 = vmatpush1.msra.mxu0 0.0
  %338 = vmatprep.subr.mxu0 0.0
  %339 = vmatpush1.msra.mxu0 0.0
  %340 = vmatprep.subr.mxu0 0.0
  %341 = vmatpush1.msra.mxu0 %v65
  %342 = vmatprep.subr.mxu0 0.0
  %343 = vmatpush1.msra.mxu0 %v64
  %344 = vmatprep.subr.mxu0 0.0
  %345 = vmatpush1.msra.mxu0 %v63
  %346 = vmatprep.subr.mxu0 0.0
  %347 = vmatpush1.msra.mxu0 %v62
  %348 = vmatprep.subr.mxu0 0.0
  %349 = vmatpush2.msra.mxu0 0.0
  %350 = vmatprep.subr.mxu0 0.0
  %351 = vmatpush2.msra.mxu0 0.0
  %352 = vmatprep.subr.mxu0 0.0
  %353 = vmatpush2.msra.mxu0 0.0
  %354 = vmatprep.subr.mxu0 0.0
  %355 = vmatpush2.msra.mxu0 0.0
  %356 = vmatprep.subr.mxu0 0.0
  %357 = vmatpush2.msra.mxu0 0.0
  %358 = vmatprep.subr.mxu0 0.0
  %359 = vmatpush2.msra.mxu0 0.0
  %360 = vmatprep.subr.mxu0 0.0
  %361 = vmatpush2.msra.mxu0 0.0
  %362 = vmatprep.subr.mxu0 0.0
  %363 = vmatpush2.msra.mxu0 0.0
  %364 = vmatprep.subr.mxu0 0.0
  %365 = vmatpush2.msra.mxu0 0.0
  %366 = vmatprep.subr.mxu0 0.0
  %367 = vmatpush2.msra.mxu0 0.0
  %368 = vmatprep.subr.mxu0 0.0
  %369 = vmatpush2.msra.mxu0 0.0
  %370 = vmatprep.subr.mxu0 0.0
  %371 = vmatpush2.msra.mxu0 0.0
  %372 = vmatprep.subr.mxu0 0.0
  %373 = vmatpush2.msra.mxu0 0.0
  %374 = vmatprep.subr.mxu0 0.0
  %375 = vmatpush2.msra.mxu0 0.0
  %376 = vmatprep.subr.mxu0 0.0
  %377 = vmatpush2.msra.mxu0 0.0
  %378 = vmatprep.subr.mxu0 0.0
  %379 = vmatpush2.msra.mxu0 0.0
  %380 = vmatprep.mubr.f32.mxu0 0.0
  %381 = vmatmul.mubr.f32.gmra.mxu0 %v314
  %v382 = vpop.f32.mrf.mxu0
  %v383 = vadd.f32 0.0, %v382
  %v384 = vpop.f32.mrf.mxu0
  %385 = vdwg.mxu0
  %v386 = vadd.f32 %v310, %v383
  %v387 = vxor.u32 %v386, 2147483648
  %v388 = vmul.f32 %v387, 1.442695
  %v389 = vpow.pop %v388
  %v390 = vadd.f32 %v389, 1.0
  %v391 = vrcp.pop %v390
  %v392 = vmul.f32 1.0, %v391
  %v393 = vtanh.pop %v386
  %395 = vrot.lane.b32.xlu0 %v312, 32
  %v396 = vpop.permute.xlu0 %395
  %v398 = vmul.f32 %v392, %v396
  %400 = vrot.lane.b32.xlu0 %v393, 32
  %v401 = vpop.permute.xlu0 %400
  %v403 = vmul.f32 %v392, %v401
  %405 = vrot.lane.b32.xlu0 %v403, 32
  %v406 = vpop.permute.xlu0 %405
  %v408 = vadd.f32 %v398, %v406
  %v409 = vtanh.pop %v408
  %411 = vrot.lane.b32.xlu0 %v409, 32
  %v412 = vpop.permute.xlu0 %411
  %v414 = vmul.f32 %v392, %v412
  %416 = vrot.lane.b32.xlu0 %v414, 64
  %v417 = vpop.permute.xlu0 %416
  %419 = vst.msk [vmem:[#allocation2] sm:$0x3] %vm181, %v417
  %421 = vrot.lane.b32.xlu0 %v408, 96
  %v422 = vpop.permute.xlu0 %421
  %424 = vst.msk [vmem:[#allocation3] sm:$0x3] %vm181, %v422
  %s425 = scalar_lea.vmem %s3, 2
  %426 = vst.msk [vmem:[%s425] sm:$0x3] %vm181, %v417
  %s427 = scalar_lea.vmem %s42, 12
  %v428 = vld [vmem:[%s427] sm:$0x3]
  %v429 = vld [vmem:[%s191] sm:$0x3]
  %v430 = vld [vmem:[%s193] sm:$0x3]
  %v432 = vsel %vm74, %v429, 0
  %434 = vmatprep.subr.mxu0 0.0
  %435 = vmatpush1.msra.mxu0 0.0
  %436 = vmatprep.subr.mxu0 0.0
  %437 = vmatpush1.msra.mxu0 0.0
  %438 = vmatprep.subr.mxu0 0.0
  %439 = vmatpush1.msra.mxu0 0.0
  %440 = vmatprep.subr.mxu0 0.0
  %441 = vmatpush1.msra.mxu0 0.0
  %442 = vmatprep.subr.mxu0 0.0
  %443 = vmatpush1.msra.mxu0 0.0
  %444 = vmatprep.subr.mxu0 0.0
  %445 = vmatpush1.msra.mxu0 0.0
  %446 = vmatprep.subr.mxu0 0.0
  %447 = vmatpush1.msra.mxu0 0.0
  %448 = vmatprep.subr.mxu0 0.0
  %449 = vmatpush1.msra.mxu0 0.0
  %450 = vmatprep.subr.mxu0 0.0
  %451 = vmatpush1.msra.mxu0 0.0
  %452 = vmatprep.subr.mxu0 0.0
  %453 = vmatpush1.msra.mxu0 0.0
  %454 = vmatprep.subr.mxu0 0.0
  %455 = vmatpush1.msra.mxu0 0.0
  %456 = vmatprep.subr.mxu0 0.0
  %457 = vmatpush1.msra.mxu0 0.0
  %458 = vmatprep.subr.mxu0 0.0
  %459 = vmatpush1.msra.mxu0 %v70
  %460 = vmatprep.subr.mxu0 0.0
  %461 = vmatpush1.msra.mxu0 %v69
  %462 = vmatprep.subr.mxu0 0.0
  %463 = vmatpush1.msra.mxu0 %v68
  %464 = vmatprep.subr.mxu0 0.0
  %465 = vmatpush1.msra.mxu0 %v67
  %466 = vmatprep.subr.mxu0 0.0
  %467 = vmatpush2.msra.mxu0 0.0
  %468 = vmatprep.subr.mxu0 0.0
  %469 = vmatpush2.msra.mxu0 0.0
  %470 = vmatprep.subr.mxu0 0.0
  %471 = vmatpush2.msra.mxu0 0.0
  %472 = vmatprep.subr.mxu0 0.0
  %473 = vmatpush2.msra.mxu0 0.0
  %474 = vmatprep.subr.mxu0 0.0
  %475 = vmatpush2.msra.mxu0 0.0
  %476 = vmatprep.subr.mxu0 0.0
  %477 = vmatpush2.msra.mxu0 0.0
  %478 = vmatprep.subr.mxu0 0.0
  %479 = vmatpush2.msra.mxu0 0.0
  %480 = vmatprep.subr.mxu0 0.0
  %481 = vmatpush2.msra.mxu0 0.0
  %482 = vmatprep.subr.mxu0 0.0
  %483 = vmatpush2.msra.mxu0 0.0
  %484 = vmatprep.subr.mxu0 0.0
  %485 = vmatpush2.msra.mxu0 0.0
  %486 = vmatprep.subr.mxu0 0.0
  %487 = vmatpush2.msra.mxu0 0.0
  %488 = vmatprep.subr.mxu0 0.0
  %489 = vmatpush2.msra.mxu0 0.0
  %490 = vmatprep.subr.mxu0 0.0
  %491 = vmatpush2.msra.mxu0 0.0
  %492 = vmatprep.subr.mxu0 0.0
  %493 = vmatpush2.msra.mxu0 0.0
  %494 = vmatprep.subr.mxu0 0.0
  %495 = vmatpush2.msra.mxu0 0.0
  %496 = vmatprep.subr.mxu0 0.0
  %497 = vmatpush2.msra.mxu0 0.0
  %498 = vmatprep.mubr.f32.mxu0 0.0
  %499 = vmatmul.mubr.f32.gmra.mxu0 %v432
  %v500 = vpop.f32.mrf.mxu0
  %v501 = vadd.f32 0.0, %v500
  %v502 = vpop.f32.mrf.mxu0
  %503 = vdwg.mxu0
  %v504 = vadd.f32 %v428, %v501
  %v505 = vxor.u32 %v504, 2147483648
  %v506 = vmul.f32 %v505, 1.442695
  %v507 = vpow.pop %v506
  %v508 = vadd.f32 %v507, 1.0
  %v509 = vrcp.pop %v508
  %v510 = vmul.f32 1.0, %v509
  %v511 = vtanh.pop %v504
  %513 = vrot.lane.b32.xlu0 %v430, 32
  %v514 = vpop.permute.xlu0 %513
  %v516 = vmul.f32 %v510, %v514
  %518 = vrot.lane.b32.xlu0 %v511, 32
  %v519 = vpop.permute.xlu0 %518
  %v521 = vmul.f32 %v510, %v519
  %523 = vrot.lane.b32.xlu0 %v521, 32
  %v524 = vpop.permute.xlu0 %523
  %v526 = vadd.f32 %v516, %v524
  %v527 = vtanh.pop %v526
  %529 = vrot.lane.b32.xlu0 %v527, 32
  %v530 = vpop.permute.xlu0 %529
  %v532 = vmul.f32 %v510, %v530
  %534 = vrot.lane.b32.xlu0 %v532, 64
  %v535 = vpop.permute.xlu0 %534
  %537 = vst.msk [vmem:[%s191] sm:$0x3] %vm181, %v535
  %539 = vrot.lane.b32.xlu0 %v526, 96
  %v540 = vpop.permute.xlu0 %539
  %542 = vst.msk [vmem:[%s193] sm:$0x3] %vm181, %v540
  %s543 = scalar_lea.vmem %s50, 12
  %544 = vst.msk [vmem:[%s543] sm:$0x3] %vm181, %v535
  %s545 = scalar_lea.vmem %s0, 4
  %v546 = vld [vmem:[%s545] sm:$0x3]
  %v547 = vld [vmem:[#allocation2] sm:$0x3]
  %v548 = vld [vmem:[#allocation3] sm:$0x3]
  %v550 = vsel %vm74, %v547, 0
  %552 = vmatprep.subr.mxu0 0.0
  %553 = vmatpush1.msra.mxu0 0.0
  %554 = vmatprep.subr.mxu0 0.0
  %555 = vmatpush1.msra.mxu0 0.0
  %556 = vmatprep.subr.mxu0 0.0
  %557 = vmatpush1.msra.mxu0 0.0
  %558 = vmatprep.subr.mxu0 0.0
  %559 = vmatpush1.msra.mxu0 0.0
  %560 = vmatprep.subr.mxu0 0.0
  %561 = vmatpush1.msra.mxu0 0.0
  %562 = vmatprep.subr.mxu0 0.0
  %563 = vmatpush1.msra.mxu0 0.0
  %564 = vmatprep.subr.mxu0 0.0
  %565 = vmatpush1.msra.mxu0 0.0
  %566 = vmatprep.subr.mxu0 0.0
  %567 = vmatpush1.msra.mxu0 0.0
  %568 = vmatprep.subr.mxu0 0.0
  %569 = vmatpush1.msra.mxu0 0.0
  %570 = vmatprep.subr.mxu0 0.0
  %571 = vmatpush1.msra.mxu0 0.0
  %572 = vmatprep.subr.mxu0 0.0
  %573 = vmatpush1.msra.mxu0 0.0
  %574 = vmatprep.subr.mxu0 0.0
  %575 = vmatpush1.msra.mxu0 0.0
  %576 = vmatprep.subr.mxu0 0.0
  %577 = vmatpush1.msra.mxu0 %v65
  %578 = vmatprep.subr.mxu0 0.0
  %579 = vmatpush1.msra.mxu0 %v64
  %580 = vmatprep.subr.mxu0 0.0
  %581 = vmatpush1.msra.mxu0 %v63
  %582 = vmatprep.subr.mxu0 0.0
  %583 = vmatpush1.msra.mxu0 %v62
  %584 = vmatprep.subr.mxu0 0.0
  %585 = vmatpush2.msra.mxu0 0.0
  %586 = vmatprep.subr.mxu0 0.0
  %587 = vmatpush2.msra.mxu0 0.0
  %588 = vmatprep.subr.mxu0 0.0
  %589 = vmatpush2.msra.mxu0 0.0
  %590 = vmatprep.subr.mxu0 0.0
  %591 = vmatpush2.msra.mxu0 0.0
  %592 = vmatprep.subr.mxu0 0.0
  %593 = vmatpush2.msra.mxu0 0.0
  %594 = vmatprep.subr.mxu0 0.0
  %595 = vmatpush2.msra.mxu0 0.0
  %596 = vmatprep.subr.mxu0 0.0
  %597 = vmatpush2.msra.mxu0 0.0
  %598 = vmatprep.subr.mxu0 0.0
  %599 = vmatpush2.msra.mxu0 0.0
  %600 = vmatprep.subr.mxu0 0.0
  %601 = vmatpush2.msra.mxu0 0.0
  %602 = vmatprep.subr.mxu0 0.0
  %603 = vmatpush2.msra.mxu0 0.0
  %604 = vmatprep.subr.mxu0 0.0
  %605 = vmatpush2.msra.mxu0 0.0
  %606 = vmatprep.subr.mxu0 0.0
  %607 = vmatpush2.msra.mxu0 0.0
  %608 = vmatprep.subr.mxu0 0.0
  %609 = vmatpush2.msra.mxu0 0.0
  %610 = vmatprep.subr.mxu0 0.0
  %611 = vmatpush2.msra.mxu0 0.0
  %612 = vmatprep.subr.mxu0 0.0
  %613 = vmatpush2.msra.mxu0 0.0
  %614 = vmatprep.subr.mxu0 0.0
  %615 = vmatpush2.msra.mxu0 0.0
  %616 = vmatprep.mubr.f32.mxu0 0.0
  %617 = vmatmul.mubr.f32.gmra.mxu0 %v550
  %v618 = vpop.f32.mrf.mxu0
  %v619 = vadd.f32 0.0, %v618
  %v620 = vpop.f32.mrf.mxu0
  %621 = vdwg.mxu0
  %v622 = vadd.f32 %v546, %v619
  %v623 = vxor.u32 %v622, 2147483648
  %v624 = vmul.f32 %v623, 1.442695
  %v625 = vpow.pop %v624
  %v626 = vadd.f32 %v625, 1.0
  %v627 = vrcp.pop %v626
  %v628 = vmul.f32 1.0, %v627
  %v629 = vtanh.pop %v622
  %631 = vrot.lane.b32.xlu0 %v548, 32
  %v632 = vpop.permute.xlu0 %631
  %v634 = vmul.f32 %v628, %v632
  %636 = vrot.lane.b32.xlu0 %v629, 32
  %v637 = vpop.permute.xlu0 %636
  %v639 = vmul.f32 %v628, %v637
  %641 = vrot.lane.b32.xlu0 %v639, 32
  %v642 = vpop.permute.xlu0 %641
  %v644 = vadd.f32 %v634, %v642
  %v645 = vtanh.pop %v644
  %647 = vrot.lane.b32.xlu0 %v645, 32
  %v648 = vpop.permute.xlu0 %647
  %v650 = vmul.f32 %v628, %v648
  %652 = vrot.lane.b32.xlu0 %v650, 64
  %v653 = vpop.permute.xlu0 %652
  %655 = vst.msk [vmem:[#allocation2] sm:$0x3] %vm181, %v653
  %657 = vrot.lane.b32.xlu0 %v644, 96
  %v658 = vpop.permute.xlu0 %657
  %660 = vst.msk [vmem:[#allocation3] sm:$0x3] %vm181, %v658
  %s661 = scalar_lea.vmem %s3, 4
  %662 = vst.msk [vmem:[%s661] sm:$0x3] %vm181, %v653
  %s663 = scalar_lea.vmem %s42, 10
  %v664 = vld [vmem:[%s663] sm:$0x3]
  %v665 = vld [vmem:[%s191] sm:$0x3]
  %v666 = vld [vmem:[%s193] sm:$0x3]
  %v668 = vsel %vm74, %v665, 0
  %670 = vmatprep.subr.mxu0 0.0
  %671 = vmatpush1.msra.mxu0 0.0
  %672 = vmatprep.subr.mxu0 0.0
  %673 = vmatpush1.msra.mxu0 0.0
  %674 = vmatprep.subr.mxu0 0.0
  %675 = vmatpush1.msra.mxu0 0.0
  %676 = vmatprep.subr.mxu0 0.0
  %677 = vmatpush1.msra.mxu0 0.0
  %678 = vmatprep.subr.mxu0 0.0
  %679 = vmatpush1.msra.mxu0 0.0
  %680 = vmatprep.subr.mxu0 0.0
  %681 = vmatpush1.msra.mxu0 0.0
  %682 = vmatprep.subr.mxu0 0.0
  %683 = vmatpush1.msra.mxu0 0.0
  %684 = vmatprep.subr.mxu0 0.0
  %685 = vmatpush1.msra.mxu0 0.0
  %686 = vmatprep.subr.mxu0 0.0
  %687 = vmatpush1.msra.mxu0 0.0
  %688 = vmatprep.subr.mxu0 0.0
  %689 = vmatpush1.msra.mxu0 0.0
  %690 = vmatprep.subr.mxu0 0.0
  %691 = vmatpush1.msra.mxu0 0.0
  %692 = vmatprep.subr.mxu0 0.0
  %693 = vmatpush1.msra.mxu0 0.0
  %694 = vmatprep.subr.mxu0 0.0
  %695 = vmatpush1.msra.mxu0 %v70
  %696 = vmatprep.subr.mxu0 0.0
  %697 = vmatpush1.msra.mxu0 %v69
  %698 = vmatprep.subr.mxu0 0.0
  %699 = vmatpush1.msra.mxu0 %v68
  %700 = vmatprep.subr.mxu0 0.0
  %701 = vmatpush1.msra.mxu0 %v67
  %702 = vmatprep.subr.mxu0 0.0
  %703 = vmatpush2.msra.mxu0 0.0
  %704 = vmatprep.subr.mxu0 0.0
  %705 = vmatpush2.msra.mxu0 0.0
  %706 = vmatprep.subr.mxu0 0.0
  %707 = vmatpush2.msra.mxu0 0.0
  %708 = vmatprep.subr.mxu0 0.0
  %709 = vmatpush2.msra.mxu0 0.0
  %710 = vmatprep.subr.mxu0 0.0
  %711 = vmatpush2.msra.mxu0 0.0
  %712 = vmatprep.subr.mxu0 0.0
  %713 = vmatpush2.msra.mxu0 0.0
  %714 = vmatprep.subr.mxu0 0.0
  %715 = vmatpush2.msra.mxu0 0.0
  %716 = vmatprep.subr.mxu0 0.0
  %717 = vmatpush2.msra.mxu0 0.0
  %718 = vmatprep.subr.mxu0 0.0
  %719 = vmatpush2.msra.mxu0 0.0
  %720 = vmatprep.subr.mxu0 0.0
  %721 = vmatpush2.msra.mxu0 0.0
  %722 = vmatprep.subr.mxu0 0.0
  %723 = vmatpush2.msra.mxu0 0.0
  %724 = vmatprep.subr.mxu0 0.0
  %725 = vmatpush2.msra.mxu0 0.0
  %726 = vmatprep.subr.mxu0 0.0
  %727 = vmatpush2.msra.mxu0 0.0
  %728 = vmatprep.subr.mxu0 0.0
  %729 = vmatpush2.msra.mxu0 0.0
  %730 = vmatprep.subr.mxu0 0.0
  %731 = vmatpush2.msra.mxu0 0.0
  %732 = vmatprep.subr.mxu0 0.0
  %733 = vmatpush2.msra.mxu0 0.0
  %734 = vmatprep.mubr.f32.mxu0 0.0
  %735 = vmatmul.mubr.f32.gmra.mxu0 %v668
  %v736 = vpop.f32.mrf.mxu0
  %v737 = vadd.f32 0.0, %v736
  %v738 = vpop.f32.mrf.mxu0
  %739 = vdwg.mxu0
  %v740 = vadd.f32 %v664, %v737
  %v741 = vxor.u32 %v740, 2147483648
  %v742 = vmul.f32 %v741, 1.442695
  %v743 = vpow.pop %v742
  %v744 = vadd.f32 %v743, 1.0
  %v745 = vrcp.pop %v744
  %v746 = vmul.f32 1.0, %v745
  %v747 = vtanh.pop %v740
  %749 = vrot.lane.b32.xlu0 %v666, 32
  %v750 = vpop.permute.xlu0 %749
  %v752 = vmul.f32 %v746, %v750
  %754 = vrot.lane.b32.xlu0 %v747, 32
  %v755 = vpop.permute.xlu0 %754
  %v757 = vmul.f32 %v746, %v755
  %759 = vrot.lane.b32.xlu0 %v757, 32
  %v760 = vpop.permute.xlu0 %759
  %v762 = vadd.f32 %v752, %v760
  %v763 = vtanh.pop %v762
  %765 = vrot.lane.b32.xlu0 %v763, 32
  %v766 = vpop.permute.xlu0 %765
  %v768 = vmul.f32 %v746, %v766
  %770 = vrot.lane.b32.xlu0 %v768, 64
  %v771 = vpop.permute.xlu0 %770
  %773 = vst.msk [vmem:[%s191] sm:$0x3] %vm181, %v771
  %775 = vrot.lane.b32.xlu0 %v762, 96
  %v776 = vpop.permute.xlu0 %775
  %778 = vst.msk [vmem:[%s193] sm:$0x3] %vm181, %v776
  %s779 = scalar_lea.vmem %s50, 10
  %780 = vst.msk [vmem:[%s779] sm:$0x3] %vm181, %v771
  %s781 = scalar_lea.vmem %s0, 6
  %v782 = vld [vmem:[%s781] sm:$0x3]
  %v783 = vld [vmem:[#allocation2] sm:$0x3]
  %v784 = vld [vmem:[#allocation3] sm:$0x3]
  %v786 = vsel %vm74, %v783, 0
  %788 = vmatprep.subr.mxu0 0.0
  %789 = vmatpush1.msra.mxu0 0.0
  %790 = vmatprep.subr.mxu0 0.0
  %791 = vmatpush1.msra.mxu0 0.0
  %792 = vmatprep.subr.mxu0 0.0
  %793 = vmatpush1.msra.mxu0 0.0
  %794 = vmatprep.subr.mxu0 0.0
  %795 = vmatpush1.msra.mxu0 0.0
  %796 = vmatprep.subr.mxu0 0.0
  %797 = vmatpush1.msra.mxu0 0.0
  %798 = vmatprep.subr.mxu0 0.0
  %799 = vmatpush1.msra.mxu0 0.0
  %800 = vmatprep.subr.mxu0 0.0
  %801 = vmatpush1.msra.mxu0 0.0
  %802 = vmatprep.subr.mxu0 0.0
  %803 = vmatpush1.msra.mxu0 0.0
  %804 = vmatprep.subr.mxu0 0.0
  %805 = vmatpush1.msra.mxu0 0.0
  %806 = vmatprep.subr.mxu0 0.0
  %807 = vmatpush1.msra.mxu0 0.0
  %808 = vmatprep.subr.mxu0 0.0
  %809 = vmatpush1.msra.mxu0 0.0
  %810 = vmatprep.subr.mxu0 0.0
  %811 = vmatpush1.msra.mxu0 0.0
  %812 = vmatprep.subr.mxu0 0.0
  %813 = vmatpush1.msra.mxu0 %v65
  %814 = vmatprep.subr.mxu0 0.0
  %815 = vmatpush1.msra.mxu0 %v64
  %816 = vmatprep.subr.mxu0 0.0
  %817 = vmatpush1.msra.mxu0 %v63
  %818 = vmatprep.subr.mxu0 0.0
  %819 = vmatpush1.msra.mxu0 %v62
  %820 = vmatprep.subr.mxu0 0.0
  %821 = vmatpush2.msra.mxu0 0.0
  %822 = vmatprep.subr.mxu0 0.0
  %823 = vmatpush2.msra.mxu0 0.0
  %824 = vmatprep.subr.mxu0 0.0
  %825 = vmatpush2.msra.mxu0 0.0
  %826 = vmatprep.subr.mxu0 0.0
  %827 = vmatpush2.msra.mxu0 0.0
  %828 = vmatprep.subr.mxu0 0.0
  %829 = vmatpush2.msra.mxu0 0.0
  %830 = vmatprep.subr.mxu0 0.0
  %831 = vmatpush2.msra.mxu0 0.0
  %832 = vmatprep.subr.mxu0 0.0
  %833 = vmatpush2.msra.mxu0 0.0
  %834 = vmatprep.subr.mxu0 0.0
  %835 = vmatpush2.msra.mxu0 0.0
  %836 = vmatprep.subr.mxu0 0.0
  %837 = vmatpush2.msra.mxu0 0.0
  %838 = vmatprep.subr.mxu0 0.0
  %839 = vmatpush2.msra.mxu0 0.0
  %840 = vmatprep.subr.mxu0 0.0
  %841 = vmatpush2.msra.mxu0 0.0
  %842 = vmatprep.subr.mxu0 0.0
  %843 = vmatpush2.msra.mxu0 0.0
  %844 = vmatprep.subr.mxu0 0.0
  %845 = vmatpush2.msra.mxu0 0.0
  %846 = vmatprep.subr.mxu0 0.0
  %847 = vmatpush2.msra.mxu0 0.0
  %848 = vmatprep.subr.mxu0 0.0
  %849 = vmatpush2.msra.mxu0 0.0
  %850 = vmatprep.subr.mxu0 0.0
  %851 = vmatpush2.msra.mxu0 0.0
  %852 = vmatprep.mubr.f32.mxu0 0.0
  %853 = vmatmul.mubr.f32.gmra.mxu0 %v786
  %v854 = vpop.f32.mrf.mxu0
  %v855 = vadd.f32 0.0, %v854
  %v856 = vpop.f32.mrf.mxu0
  %857 = vdwg.mxu0
  %v858 = vadd.f32 %v782, %v855
  %v859 = vxor.u32 %v858, 2147483648
  %v860 = vmul.f32 %v859, 1.442695
  %v861 = vpow.pop %v860
  %v862 = vadd.f32 %v861, 1.0
  %v863 = vrcp.pop %v862
  %v864 = vmul.f32 1.0, %v863
  %v865 = vtanh.pop %v858
  %867 = vrot.lane.b32.xlu0 %v784, 32
  %v868 = vpop.permute.xlu0 %867
  %v870 = vmul.f32 %v864, %v868
  %872 = vrot.lane.b32.xlu0 %v865, 32
  %v873 = vpop.permute.xlu0 %872
  %v875 = vmul.f32 %v864, %v873
  %877 = vrot.lane.b32.xlu0 %v875, 32
  %v878 = vpop.permute.xlu0 %877
  %v880 = vadd.f32 %v870, %v878
  %v881 = vtanh.pop %v880
  %883 = vrot.lane.b32.xlu0 %v881, 32
  %v884 = vpop.permute.xlu0 %883
  %v886 = vmul.f32 %v864, %v884
  %888 = vrot.lane.b32.xlu0 %v886, 64
  %v889 = vpop.permute.xlu0 %888
  %891 = vst.msk [vmem:[#allocation2] sm:$0x3] %vm181, %v889
  %893 = vrot.lane.b32.xlu0 %v880, 96
  %v894 = vpop.permute.xlu0 %893
  %896 = vst.msk [vmem:[#allocation3] sm:$0x3] %vm181, %v894
  %s897 = scalar_lea.vmem %s3, 6
  %898 = vst.msk [vmem:[%s897] sm:$0x3] %vm181, %v889
  %s899 = scalar_lea.vmem %s42, 8
  %v900 = vld [vmem:[%s899] sm:$0x3]
  %v901 = vld [vmem:[%s191] sm:$0x3]
  %v902 = vld [vmem:[%s193] sm:$0x3]
  %v904 = vsel %vm74, %v901, 0
  %906 = vmatprep.subr.mxu0 0.0
  %907 = vmatpush1.msra.mxu0 0.0
  %908 = vmatprep.subr.mxu0 0.0
  %909 = vmatpush1.msra.mxu0 0.0
  %910 = vmatprep.subr.mxu0 0.0
  %911 = vmatpush1.msra.mxu0 0.0
  %912 = vmatprep.subr.mxu0 0.0
  %913 = vmatpush1.msra.mxu0 0.0
  %914 = vmatprep.subr.mxu0 0.0
  %915 = vmatpush1.msra.mxu0 0.0
  %916 = vmatprep.subr.mxu0 0.0
  %917 = vmatpush1.msra.mxu0 0.0
  %918 = vmatprep.subr.mxu0 0.0
  %919 = vmatpush1.msra.mxu0 0.0
  %920 = vmatprep.subr.mxu0 0.0
  %921 = vmatpush1.msra.mxu0 0.0
  %922 = vmatprep.subr.mxu0 0.0
  %923 = vmatpush1.msra.mxu0 0.0
  %924 = vmatprep.subr.mxu0 0.0
  %925 = vmatpush1.msra.mxu0 0.0
  %926 = vmatprep.subr.mxu0 0.0
  %927 = vmatpush1.msra.mxu0 0.0
  %928 = vmatprep.subr.mxu0 0.0
  %929 = vmatpush1.msra.mxu0 0.0
  %930 = vmatprep.subr.mxu0 0.0
  %931 = vmatpush1.msra.mxu0 %v70
  %932 = vmatprep.subr.mxu0 0.0
  %933 = vmatpush1.msra.mxu0 %v69
  %934 = vmatprep.subr.mxu0 0.0
  %935 = vmatpush1.msra.mxu0 %v68
  %936 = vmatprep.subr.mxu0 0.0
  %937 = vmatpush1.msra.mxu0 %v67
  %938 = vmatprep.subr.mxu0 0.0
  %939 = vmatpush2.msra.mxu0 0.0
  %940 = vmatprep.subr.mxu0 0.0
  %941 = vmatpush2.msra.mxu0 0.0
  %942 = vmatprep.subr.mxu0 0.0
  %943 = vmatpush2.msra.mxu0 0.0
  %944 = vmatprep.subr.mxu0 0.0
  %945 = vmatpush2.msra.mxu0 0.0
  %946 = vmatprep.subr.mxu0 0.0
  %947 = vmatpush2.msra.mxu0 0.0
  %948 = vmatprep.subr.mxu0 0.0
  %949 = vmatpush2.msra.mxu0 0.0
  %950 = vmatprep.subr.mxu0 0.0
  %951 = vmatpush2.msra.mxu0 0.0
  %952 = vmatprep.subr.mxu0 0.0
  %953 = vmatpush2.msra.mxu0 0.0
  %954 = vmatprep.subr.mxu0 0.0
  %955 = vmatpush2.msra.mxu0 0.0
  %956 = vmatprep.subr.mxu0 0.0
  %957 = vmatpush2.msra.mxu0 0.0
  %958 = vmatprep.subr.mxu0 0.0
  %959 = vmatpush2.msra.mxu0 0.0
  %960 = vmatprep.subr.mxu0 0.0
  %961 = vmatpush2.msra.mxu0 0.0
  %962 = vmatprep.subr.mxu0 0.0
  %963 = vmatpush2.msra.mxu0 0.0
  %964 = vmatprep.subr.mxu0 0.0
  %965 = vmatpush2.msra.mxu0 0.0
  %966 = vmatprep.subr.mxu0 0.0
  %967 = vmatpush2.msra.mxu0 0.0
  %968 = vmatprep.subr.mxu0 0.0
  %969 = vmatpush2.msra.mxu0 0.0
  %970 = vmatprep.mubr.f32.mxu0 0.0
  %971 = vmatmul.mubr.f32.gmra.mxu0 %v904
  %v972 = vpop.f32.mrf.mxu0
  %v973 = vadd.f32 0.0, %v972
  %v974 = vpop.f32.mrf.mxu0
  %975 = vdwg.mxu0
  %v976 = vadd.f32 %v900, %v973
  %v977 = vxor.u32 %v976, 2147483648
  %v978 = vmul.f32 %v977, 1.442695
  %v979 = vpow.pop %v978
  %v980 = vadd.f32 %v979, 1.0
  %v981 = vrcp.pop %v980
  %v982 = vmul.f32 1.0, %v981
  %v983 = vtanh.pop %v976
  %985 = vrot.lane.b32.xlu0 %v902, 32
  %v986 = vpop.permute.xlu0 %985
  %v988 = vmul.f32 %v982, %v986
  %990 = vrot.lane.b32.xlu0 %v983, 32
  %v991 = vpop.permute.xlu0 %990
  %v993 = vmul.f32 %v982, %v991
  %995 = vrot.lane.b32.xlu0 %v993, 32
  %v996 = vpop.permute.xlu0 %995
  %v998 = vadd.f32 %v988, %v996
  %v999 = vtanh.pop %v998
  %1001 = vrot.lane.b32.xlu0 %v999, 32
  %v1002 = vpop.permute.xlu0 %1001
  %v1004 = vmul.f32 %v982, %v1002
  %1006 = vrot.lane.b32.xlu0 %v1004, 64
  %v1007 = vpop.permute.xlu0 %1006
  %1009 = vst.msk [vmem:[%s191] sm:$0x3] %vm181, %v1007
  %1011 = vrot.lane.b32.xlu0 %v998, 96
  %v1012 = vpop.permute.xlu0 %1011
  %1014 = vst.msk [vmem:[%s193] sm:$0x3] %vm181, %v1012
  %s1015 = scalar_lea.vmem %s50, 8
  %1016 = vst.msk [vmem:[%s1015] sm:$0x3] %vm181, %v1007
  %s1017 = scalar_lea.vmem %s0, 8
  %v1018 = vld [vmem:[%s1017] sm:$0x3]
  %v1019 = vld [vmem:[#allocation2] sm:$0x3]
  %v1020 = vld [vmem:[#allocation3] sm:$0x3]
  %v1022 = vsel %vm74, %v1019, 0
  %1024 = vmatprep.subr.mxu0 0.0
  %1025 = vmatpush1.msra.mxu0 0.0
  %1026 = vmatprep.subr.mxu0 0.0
  %1027 = vmatpush1.msra.mxu0 0.0
  %1028 = vmatprep.subr.mxu0 0.0
  %1029 = vmatpush1.msra.mxu0 0.0
  %1030 = vmatprep.subr.mxu0 0.0
  %1031 = vmatpush1.msra.mxu0 0.0
  %1032 = vmatprep.subr.mxu0 0.0
  %1033 = vmatpush1.msra.mxu0 0.0
  %1034 = vmatprep.subr.mxu0 0.0
  %1035 = vmatpush1.msra.mxu0 0.0
  %1036 = vmatprep.subr.mxu0 0.0
  %1037 = vmatpush1.msra.mxu0 0.0
  %1038 = vmatprep.subr.mxu0 0.0
  %1039 = vmatpush1.msra.mxu0 0.0
  %1040 = vmatprep.subr.mxu0 0.0
  %1041 = vmatpush1.msra.mxu0 0.0
  %1042 = vmatprep.subr.mxu0 0.0
  %1043 = vmatpush1.msra.mxu0 0.0
  %1044 = vmatprep.subr.mxu0 0.0
  %1045 = vmatpush1.msra.mxu0 0.0
  %1046 = vmatprep.subr.mxu0 0.0
  %1047 = vmatpush1.msra.mxu0 0.0
  %1048 = vmatprep.subr.mxu0 0.0
  %1049 = vmatpush1.msra.mxu0 %v65
  %1050 = vmatprep.subr.mxu0 0.0
  %1051 = vmatpush1.msra.mxu0 %v64
  %1052 = vmatprep.subr.mxu0 0.0
  %1053 = vmatpush1.msra.mxu0 %v63
  %1054 = vmatprep.subr.mxu0 0.0
  %1055 = vmatpush1.msra.mxu0 %v62
  %1056 = vmatprep.subr.mxu0 0.0
  %1057 = vmatpush2.msra.mxu0 0.0
  %1058 = vmatprep.subr.mxu0 0.0
  %1059 = vmatpush2.msra.mxu0 0.0
  %1060 = vmatprep.subr.mxu0 0.0
  %1061 = vmatpush2.msra.mxu0 0.0
  %1062 = vmatprep.subr.mxu0 0.0
  %1063 = vmatpush2.msra.mxu0 0.0
  %1064 = vmatprep.subr.mxu0 0.0
  %1065 = vmatpush2.msra.mxu0 0.0
  %1066 = vmatprep.subr.mxu0 0.0
  %1067 = vmatpush2.msra.mxu0 0.0
  %1068 = vmatprep.subr.mxu0 0.0
  %1069 = vmatpush2.msra.mxu0 0.0
  %1070 = vmatprep.subr.mxu0 0.0
  %1071 = vmatpush2.msra.mxu0 0.0
  %1072 = vmatprep.subr.mxu0 0.0
  %1073 = vmatpush2.msra.mxu0 0.0
  %1074 = vmatprep.subr.mxu0 0.0
  %1075 = vmatpush2.msra.mxu0 0.0
  %1076 = vmatprep.subr.mxu0 0.0
  %1077 = vmatpush2.msra.mxu0 0.0
  %1078 = vmatprep.subr.mxu0 0.0
  %1079 = vmatpush2.msra.mxu0 0.0
  %1080 = vmatprep.subr.mxu0 0.0
  %1081 = vmatpush2.msra.mxu0 0.0
  %1082 = vmatprep.subr.mxu0 0.0
  %1083 = vmatpush2.msra.mxu0 0.0
  %1084 = vmatprep.subr.mxu0 0.0
  %1085 = vmatpush2.msra.mxu0 0.0
  %1086 = vmatprep.subr.mxu0 0.0
  %1087 = vmatpush2.msra.mxu0 0.0
  %1088 = vmatprep.mubr.f32.mxu0 0.0
  %1089 = vmatmul.mubr.f32.gmra.mxu0 %v1022
  %v1090 = vpop.f32.mrf.mxu0
  %v1091 = vadd.f32 0.0, %v1090
  %v1092 = vpop.f32.mrf.mxu0
  %1093 = vdwg.mxu0
  %v1094 = vadd.f32 %v1018, %v1091
  %v1095 = vxor.u32 %v1094, 2147483648
  %v1096 = vmul.f32 %v1095, 1.442695
  %v1097 = vpow.pop %v1096
  %v1098 = vadd.f32 %v1097, 1.0
  %v1099 = vrcp.pop %v1098
  %v1100 = vmul.f32 1.0, %v1099
  %v1101 = vtanh.pop %v1094
  %1103 = vrot.lane.b32.xlu0 %v1020, 32
  %v1104 = vpop.permute.xlu0 %1103
  %v1106 = vmul.f32 %v1100, %v1104
  %1108 = vrot.lane.b32.xlu0 %v1101, 32
  %v1109 = vpop.permute.xlu0 %1108
  %v1111 = vmul.f32 %v1100, %v1109
  %1113 = vrot.lane.b32.xlu0 %v1111, 32
  %v1114 = vpop.permute.xlu0 %1113
  %v1116 = vadd.f32 %v1106, %v1114
  %v1117 = vtanh.pop %v1116
  %1119 = vrot.lane.b32.xlu0 %v1117, 32
  %v1120 = vpop.permute.xlu0 %1119
  %v1122 = vmul.f32 %v1100, %v1120
  %1124 = vrot.lane.b32.xlu0 %v1122, 64
  %v1125 = vpop.permute.xlu0 %1124
  %1127 = vst.msk [vmem:[#allocation2] sm:$0x3] %vm181, %v1125
  %1129 = vrot.lane.b32.xlu0 %v1116, 96
  %v1130 = vpop.permute.xlu0 %1129
  %1132 = vst.msk [vmem:[#allocation3] sm:$0x3] %vm181, %v1130
  %s1133 = scalar_lea.vmem %s3, 8
  %1134 = vst.msk [vmem:[%s1133] sm:$0x3] %vm181, %v1125
  %s1135 = scalar_lea.vmem %s42, 6
  %v1136 = vld [vmem:[%s1135] sm:$0x3]
  %v1137 = vld [vmem:[%s191] sm:$0x3]
  %v1138 = vld [vmem:[%s193] sm:$0x3]
  %v1140 = vsel %vm74, %v1137, 0
  %1142 = vmatprep.subr.mxu0 0.0
  %1143 = vmatpush1.msra.mxu0 0.0
  %1144 = vmatprep.subr.mxu0 0.0
  %1145 = vmatpush1.msra.mxu0 0.0
  %1146 = vmatprep.subr.mxu0 0.0
  %1147 = vmatpush1.msra.mxu0 0.0
  %1148 = vmatprep.subr.mxu0 0.0
  %1149 = vmatpush1.msra.mxu0 0.0
  %1150 = vmatprep.subr.mxu0 0.0
  %1151 = vmatpush1.msra.mxu0 0.0
  %1152 = vmatprep.subr.mxu0 0.0
  %1153 = vmatpush1.msra.mxu0 0.0
  %1154 = vmatprep.subr.mxu0 0.0
  %1155 = vmatpush1.msra.mxu0 0.0
  %1156 = vmatprep.subr.mxu0 0.0
  %1157 = vmatpush1.msra.mxu0 0.0
  %1158 = vmatprep.subr.mxu0 0.0
  %1159 = vmatpush1.msra.mxu0 0.0
  %1160 = vmatprep.subr.mxu0 0.0
  %1161 = vmatpush1.msra.mxu0 0.0
  %1162 = vmatprep.subr.mxu0 0.0
  %1163 = vmatpush1.msra.mxu0 0.0
  %1164 = vmatprep.subr.mxu0 0.0
  %1165 = vmatpush1.msra.mxu0 0.0
  %1166 = vmatprep.subr.mxu0 0.0
  %1167 = vmatpush1.msra.mxu0 %v70
  %1168 = vmatprep.subr.mxu0 0.0
  %1169 = vmatpush1.msra.mxu0 %v69
  %1170 = vmatprep.subr.mxu0 0.0
  %1171 = vmatpush1.msra.mxu0 %v68
  %1172 = vmatprep.subr.mxu0 0.0
  %1173 = vmatpush1.msra.mxu0 %v67
  %1174 = vmatprep.subr.mxu0 0.0
  %1175 = vmatpush2.msra.mxu0 0.0
  %1176 = vmatprep.subr.mxu0 0.0
  %1177 = vmatpush2.msra.mxu0 0.0
  %1178 = vmatprep.subr.mxu0 0.0
  %1179 = vmatpush2.msra.mxu0 0.0
  %1180 = vmatprep.subr.mxu0 0.0
  %1181 = vmatpush2.msra.mxu0 0.0
  %1182 = vmatprep.subr.mxu0 0.0
  %1183 = vmatpush2.msra.mxu0 0.0
  %1184 = vmatprep.subr.mxu0 0.0
  %1185 = vmatpush2.msra.mxu0 0.0
  %1186 = vmatprep.subr.mxu0 0.0
  %1187 = vmatpush2.msra.mxu0 0.0
  %1188 = vmatprep.subr.mxu0 0.0
  %1189 = vmatpush2.msra.mxu0 0.0
  %1190 = vmatprep.subr.mxu0 0.0
  %1191 = vmatpush2.msra.mxu0 0.0
  %1192 = vmatprep.subr.mxu0 0.0
  %1193 = vmatpush2.msra.mxu0 0.0
  %1194 = vmatprep.subr.mxu0 0.0
  %1195 = vmatpush2.msra.mxu0 0.0
  %1196 = vmatprep.subr.mxu0 0.0
  %1197 = vmatpush2.msra.mxu0 0.0
  %1198 = vmatprep.subr.mxu0 0.0
  %1199 = vmatpush2.msra.mxu0 0.0
  %1200 = vmatprep.subr.mxu0 0.0
  %1201 = vmatpush2.msra.mxu0 0.0
  %1202 = vmatprep.subr.mxu0 0.0
  %1203 = vmatpush2.msra.mxu0 0.0
  %1204 = vmatprep.subr.mxu0 0.0
  %1205 = vmatpush2.msra.mxu0 0.0
  %1206 = vmatprep.mubr.f32.mxu0 0.0
  %1207 = vmatmul.mubr.f32.gmra.mxu0 %v1140
  %v1208 = vpop.f32.mrf.mxu0
  %v1209 = vadd.f32 0.0, %v1208
  %v1210 = vpop.f32.mrf.mxu0
  %1211 = vdwg.mxu0
  %v1212 = vadd.f32 %v1136, %v1209
  %v1213 = vxor.u32 %v1212, 2147483648
  %v1214 = vmul.f32 %v1213, 1.442695
  %v1215 = vpow.pop %v1214
  %v1216 = vadd.f32 %v1215, 1.0
  %v1217 = vrcp.pop %v1216
  %v1218 = vmul.f32 1.0, %v1217
  %v1219 = vtanh.pop %v1212
  %1221 = vrot.lane.b32.xlu0 %v1138, 32
  %v1222 = vpop.permute.xlu0 %1221
  %v1224 = vmul.f32 %v1218, %v1222
  %1226 = vrot.lane.b32.xlu0 %v1219, 32
  %v1227 = vpop.permute.xlu0 %1226
  %v1229 = vmul.f32 %v1218, %v1227
  %1231 = vrot.lane.b32.xlu0 %v1229, 32
  %v1232 = vpop.permute.xlu0 %1231
  %v1234 = vadd.f32 %v1224, %v1232
  %v1235 = vtanh.pop %v1234
  %1237 = vrot.lane.b32.xlu0 %v1235, 32
  %v1238 = vpop.permute.xlu0 %1237
  %v1240 = vmul.f32 %v1218, %v1238
  %1242 = vrot.lane.b32.xlu0 %v1240, 64
  %v1243 = vpop.permute.xlu0 %1242
  %1245 = vst.msk [vmem:[%s191] sm:$0x3] %vm181, %v1243
  %1247 = vrot.lane.b32.xlu0 %v1234, 96
  %v1248 = vpop.permute.xlu0 %1247
  %1250 = vst.msk [vmem:[%s193] sm:$0x3] %vm181, %v1248
  %s1251 = scalar_lea.vmem %s50, 6
  %1252 = vst.msk [vmem:[%s1251] sm:$0x3] %vm181, %v1243
  %s1253 = scalar_lea.vmem %s0, 10
  %v1254 = vld [vmem:[%s1253] sm:$0x3]
  %v1255 = vld [vmem:[#allocation2] sm:$0x3]
  %v1256 = vld [vmem:[#allocation3] sm:$0x3]
  %v1258 = vsel %vm74, %v1255, 0
  %1260 = vmatprep.subr.mxu0 0.0
  %1261 = vmatpush1.msra.mxu0 0.0
  %1262 = vmatprep.subr.mxu0 0.0
  %1263 = vmatpush1.msra.mxu0 0.0
  %1264 = vmatprep.subr.mxu0 0.0
  %1265 = vmatpush1.msra.mxu0 0.0
  %1266 = vmatprep.subr.mxu0 0.0
  %1267 = vmatpush1.msra.mxu0 0.0
  %1268 = vmatprep.subr.mxu0 0.0
  %1269 = vmatpush1.msra.mxu0 0.0
  %1270 = vmatprep.subr.mxu0 0.0
  %1271 = vmatpush1.msra.mxu0 0.0
  %1272 = vmatprep.subr.mxu0 0.0
  %1273 = vmatpush1.msra.mxu0 0.0
  %1274 = vmatprep.subr.mxu0 0.0
  %1275 = vmatpush1.msra.mxu0 0.0
  %1276 = vmatprep.subr.mxu0 0.0
  %1277 = vmatpush1.msra.mxu0 0.0
  %1278 = vmatprep.subr.mxu0 0.0
  %1279 = vmatpush1.msra.mxu0 0.0
  %1280 = vmatprep.subr.mxu0 0.0
  %1281 = vmatpush1.msra.mxu0 0.0
  %1282 = vmatprep.subr.mxu0 0.0
  %1283 = vmatpush1.msra.mxu0 0.0
  %1284 = vmatprep.subr.mxu0 0.0
  %1285 = vmatpush1.msra.mxu0 %v65
  %1286 = vmatprep.subr.mxu0 0.0
  %1287 = vmatpush1.msra.mxu0 %v64
  %1288 = vmatprep.subr.mxu0 0.0
  %1289 = vmatpush1.msra.mxu0 %v63
  %1290 = vmatprep.subr.mxu0 0.0
  %1291 = vmatpush1.msra.mxu0 %v62
  %1292 = vmatprep.subr.mxu0 0.0
  %1293 = vmatpush2.msra.mxu0 0.0
  %1294 = vmatprep.subr.mxu0 0.0
  %1295 = vmatpush2.msra.mxu0 0.0
  %1296 = vmatprep.subr.mxu0 0.0
  %1297 = vmatpush2.msra.mxu0 0.0
  %1298 = vmatprep.subr.mxu0 0.0
  %1299 = vmatpush2.msra.mxu0 0.0
  %1300 = vmatprep.subr.mxu0 0.0
  %1301 = vmatpush2.msra.mxu0 0.0
  %1302 = vmatprep.subr.mxu0 0.0
  %1303 = vmatpush2.msra.mxu0 0.0
  %1304 = vmatprep.subr.mxu0 0.0
  %1305 = vmatpush2.msra.mxu0 0.0
  %1306 = vmatprep.subr.mxu0 0.0
  %1307 = vmatpush2.msra.mxu0 0.0
  %1308 = vmatprep.subr.mxu0 0.0
  %1309 = vmatpush2.msra.mxu0 0.0
  %1310 = vmatprep.subr.mxu0 0.0
  %1311 = vmatpush2.msra.mxu0 0.0
  %1312 = vmatprep.subr.mxu0 0.0
  %1313 = vmatpush2.msra.mxu0 0.0
  %1314 = vmatprep.subr.mxu0 0.0
  %1315 = vmatpush2.msra.mxu0 0.0
  %1316 = vmatprep.subr.mxu0 0.0
  %1317 = vmatpush2.msra.mxu0 0.0
  %1318 = vmatprep.subr.mxu0 0.0
  %1319 = vmatpush2.msra.mxu0 0.0
  %1320 = vmatprep.subr.mxu0 0.0
  %1321 = vmatpush2.msra.mxu0 0.0
  %1322 = vmatprep.subr.mxu0 0.0
  %1323 = vmatpush2.msra.mxu0 0.0
  %1324 = vmatprep.mubr.f32.mxu0 0.0
  %1325 = vmatmul.mubr.f32.gmra.mxu0 %v1258
  %v1326 = vpop.f32.mrf.mxu0
  %v1327 = vadd.f32 0.0, %v1326
  %v1328 = vpop.f32.mrf.mxu0
  %1329 = vdwg.mxu0
  %v1330 = vadd.f32 %v1254, %v1327
  %v1331 = vxor.u32 %v1330, 2147483648
  %v1332 = vmul.f32 %v1331, 1.442695
  %v1333 = vpow.pop %v1332
  %v1334 = vadd.f32 %v1333, 1.0
  %v1335 = vrcp.pop %v1334
  %v1336 = vmul.f32 1.0, %v1335
  %v1337 = vtanh.pop %v1330
  %1339 = vrot.lane.b32.xlu0 %v1256, 32
  %v1340 = vpop.permute.xlu0 %1339
  %v1342 = vmul.f32 %v1336, %v1340
  %1344 = vrot.lane.b32.xlu0 %v1337, 32
  %v1345 = vpop.permute.xlu0 %1344
  %v1347 = vmul.f32 %v1336, %v1345
  %1349 = vrot.lane.b32.xlu0 %v1347, 32
  %v1350 = vpop.permute.xlu0 %1349
  %v1352 = vadd.f32 %v1342, %v1350
  %v1353 = vtanh.pop %v1352
  %1355 = vrot.lane.b32.xlu0 %v1353, 32
  %v1356 = vpop.permute.xlu0 %1355
  %v1358 = vmul.f32 %v1336, %v1356
  %1360 = vrot.lane.b32.xlu0 %v1358, 64
  %v1361 = vpop.permute.xlu0 %1360
  %1363 = vst.msk [vmem:[#allocation2] sm:$0x3] %vm181, %v1361
  %1365 = vrot.lane.b32.xlu0 %v1352, 96
  %v1366 = vpop.permute.xlu0 %1365
  %1368 = vst.msk [vmem:[#allocation3] sm:$0x3] %vm181, %v1366
  %s1369 = scalar_lea.vmem %s3, 10
  %1370 = vst.msk [vmem:[%s1369] sm:$0x3] %vm181, %v1361
  %s1371 = scalar_lea.vmem %s42, 4
  %v1372 = vld [vmem:[%s1371] sm:$0x3]
  %v1373 = vld [vmem:[%s191] sm:$0x3]
  %v1374 = vld [vmem:[%s193] sm:$0x3]
  %v1376 = vsel %vm74, %v1373, 0
  %1378 = vmatprep.subr.mxu0 0.0
  %1379 = vmatpush1.msra.mxu0 0.0
  %1380 = vmatprep.subr.mxu0 0.0
  %1381 = vmatpush1.msra.mxu0 0.0
  %1382 = vmatprep.subr.mxu0 0.0
  %1383 = vmatpush1.msra.mxu0 0.0
  %1384 = vmatprep.subr.mxu0 0.0
  %1385 = vmatpush1.msra.mxu0 0.0
  %1386 = vmatprep.subr.mxu0 0.0
  %1387 = vmatpush1.msra.mxu0 0.0
  %1388 = vmatprep.subr.mxu0 0.0
  %1389 = vmatpush1.msra.mxu0 0.0
  %1390 = vmatprep.subr.mxu0 0.0
  %1391 = vmatpush1.msra.mxu0 0.0
  %1392 = vmatprep.subr.mxu0 0.0
  %1393 = vmatpush1.msra.mxu0 0.0
  %1394 = vmatprep.subr.mxu0 0.0
  %1395 = vmatpush1.msra.mxu0 0.0
  %1396 = vmatprep.subr.mxu0 0.0
  %1397 = vmatpush1.msra.mxu0 0.0
  %1398 = vmatprep.subr.mxu0 0.0
  %1399 = vmatpush1.msra.mxu0 0.0
  %1400 = vmatprep.subr.mxu0 0.0
  %1401 = vmatpush1.msra.mxu0 0.0
  %1402 = vmatprep.subr.mxu0 0.0
  %1403 = vmatpush1.msra.mxu0 %v70
  %1404 = vmatprep.subr.mxu0 0.0
  %1405 = vmatpush1.msra.mxu0 %v69
  %1406 = vmatprep.subr.mxu0 0.0
  %1407 = vmatpush1.msra.mxu0 %v68
  %1408 = vmatprep.subr.mxu0 0.0
  %1409 = vmatpush1.msra.mxu0 %v67
  %1410 = vmatprep.subr.mxu0 0.0
  %1411 = vmatpush2.msra.mxu0 0.0
  %1412 = vmatprep.subr.mxu0 0.0
  %1413 = vmatpush2.msra.mxu0 0.0
  %1414 = vmatprep.subr.mxu0 0.0
  %1415 = vmatpush2.msra.mxu0 0.0
  %1416 = vmatprep.subr.mxu0 0.0
  %1417 = vmatpush2.msra.mxu0 0.0
  %1418 = vmatprep.subr.mxu0 0.0
  %1419 = vmatpush2.msra.mxu0 0.0
  %1420 = vmatprep.subr.mxu0 0.0
  %1421 = vmatpush2.msra.mxu0 0.0
  %1422 = vmatprep.subr.mxu0 0.0
  %1423 = vmatpush2.msra.mxu0 0.0
  %1424 = vmatprep.subr.mxu0 0.0
  %1425 = vmatpush2.msra.mxu0 0.0
  %1426 = vmatprep.subr.mxu0 0.0
  %1427 = vmatpush2.msra.mxu0 0.0
  %1428 = vmatprep.subr.mxu0 0.0
  %1429 = vmatpush2.msra.mxu0 0.0
  %1430 = vmatprep.subr.mxu0 0.0
  %1431 = vmatpush2.msra.mxu0 0.0
  %1432 = vmatprep.subr.mxu0 0.0
  %1433 = vmatpush2.msra.mxu0 0.0
  %1434 = vmatprep.subr.mxu0 0.0
  %1435 = vmatpush2.msra.mxu0 0.0
  %1436 = vmatprep.subr.mxu0 0.0
  %1437 = vmatpush2.msra.mxu0 0.0
  %1438 = vmatprep.subr.mxu0 0.0
  %1439 = vmatpush2.msra.mxu0 0.0
  %1440 = vmatprep.subr.mxu0 0.0
  %1441 = vmatpush2.msra.mxu0 0.0
  %1442 = vmatprep.mubr.f32.mxu0 0.0
  %1443 = vmatmul.mubr.f32.gmra.mxu0 %v1376
  %v1444 = vpop.f32.mrf.mxu0
  %v1445 = vadd.f32 0.0, %v1444
  %v1446 = vpop.f32.mrf.mxu0
  %1447 = vdwg.mxu0
  %v1448 = vadd.f32 %v1372, %v1445
  %v1449 = vxor.u32 %v1448, 2147483648
  %v1450 = vmul.f32 %v1449, 1.442695
  %v1451 = vpow.pop %v1450
  %v1452 = vadd.f32 %v1451, 1.0
  %v1453 = vrcp.pop %v1452
  %v1454 = vmul.f32 1.0, %v1453
  %v1455 = vtanh.pop %v1448
  %1457 = vrot.lane.b32.xlu0 %v1374, 32
  %v1458 = vpop.permute.xlu0 %1457
  %v1460 = vmul.f32 %v1454, %v1458
  %1462 = vrot.lane.b32.xlu0 %v1455, 32
  %v1463 = vpop.permute.xlu0 %1462
  %v1465 = vmul.f32 %v1454, %v1463
  %1467 = vrot.lane.b32.xlu0 %v1465, 32
  %v1468 = vpop.permute.xlu0 %1467
  %v1470 = vadd.f32 %v1460, %v1468
  %v1471 = vtanh.pop %v1470
  %1473 = vrot.lane.b32.xlu0 %v1471, 32
  %v1474 = vpop.permute.xlu0 %1473
  %v1476 = vmul.f32 %v1454, %v1474
  %1478 = vrot.lane.b32.xlu0 %v1476, 64
  %v1479 = vpop.permute.xlu0 %1478
  %1481 = vst.msk [vmem:[%s191] sm:$0x3] %vm181, %v1479
  %1483 = vrot.lane.b32.xlu0 %v1470, 96
  %v1484 = vpop.permute.xlu0 %1483
  %1486 = vst.msk [vmem:[%s193] sm:$0x3] %vm181, %v1484
  %s1487 = scalar_lea.vmem %s50, 4
  %1488 = vst.msk [vmem:[%s1487] sm:$0x3] %vm181, %v1479
  %s1489 = scalar_lea.vmem %s0, 12
  %v1490 = vld [vmem:[%s1489] sm:$0x3]
  %v1491 = vld [vmem:[#allocation2] sm:$0x3]
  %v1492 = vld [vmem:[#allocation3] sm:$0x3]
  %v1494 = vsel %vm74, %v1491, 0
  %1496 = vmatprep.subr.mxu0 0.0
  %1497 = vmatpush1.msra.mxu0 0.0
  %1498 = vmatprep.subr.mxu0 0.0
  %1499 = vmatpush1.msra.mxu0 0.0
  %1500 = vmatprep.subr.mxu0 0.0
  %1501 = vmatpush1.msra.mxu0 0.0
  %1502 = vmatprep.subr.mxu0 0.0
  %1503 = vmatpush1.msra.mxu0 0.0
  %1504 = vmatprep.subr.mxu0 0.0
  %1505 = vmatpush1.msra.mxu0 0.0
  %1506 = vmatprep.subr.mxu0 0.0
  %1507 = vmatpush1.msra.mxu0 0.0
  %1508 = vmatprep.subr.mxu0 0.0
  %1509 = vmatpush1.msra.mxu0 0.0
  %1510 = vmatprep.subr.mxu0 0.0
  %1511 = vmatpush1.msra.mxu0 0.0
  %1512 = vmatprep.subr.mxu0 0.0
  %1513 = vmatpush1.msra.mxu0 0.0
  %1514 = vmatprep.subr.mxu0 0.0
  %1515 = vmatpush1.msra.mxu0 0.0
  %1516 = vmatprep.subr.mxu0 0.0
  %1517 = vmatpush1.msra.mxu0 0.0
  %1518 = vmatprep.subr.mxu0 0.0
  %1519 = vmatpush1.msra.mxu0 0.0
  %1520 = vmatprep.subr.mxu0 0.0
  %1521 = vmatpush1.msra.mxu0 %v65
  %1522 = vmatprep.subr.mxu0 0.0
  %1523 = vmatpush1.msra.mxu0 %v64
  %1524 = vmatprep.subr.mxu0 0.0
  %1525 = vmatpush1.msra.mxu0 %v63
  %1526 = vmatprep.subr.mxu0 0.0
  %1527 = vmatpush1.msra.mxu0 %v62
  %1528 = vmatprep.subr.mxu0 0.0
  %1529 = vmatpush2.msra.mxu0 0.0
  %1530 = vmatprep.subr.mxu0 0.0
  %1531 = vmatpush2.msra.mxu0 0.0
  %1532 = vmatprep.subr.mxu0 0.0
  %1533 = vmatpush2.msra.mxu0 0.0
  %1534 = vmatprep.subr.mxu0 0.0
  %1535 = vmatpush2.msra.mxu0 0.0
  %1536 = vmatprep.subr.mxu0 0.0
  %1537 = vmatpush2.msra.mxu0 0.0
  %1538 = vmatprep.subr.mxu0 0.0
  %1539 = vmatpush2.msra.mxu0 0.0
  %1540 = vmatprep.subr.mxu0 0.0
  %1541 = vmatpush2.msra.mxu0 0.0
  %1542 = vmatprep.subr.mxu0 0.0
  %1543 = vmatpush2.msra.mxu0 0.0
  %1544 = vmatprep.subr.mxu0 0.0
  %1545 = vmatpush2.msra.mxu0 0.0
  %1546 = vmatprep.subr.mxu0 0.0
  %1547 = vmatpush2.msra.mxu0 0.0
  %1548 = vmatprep.subr.mxu0 0.0
  %1549 = vmatpush2.msra.mxu0 0.0
  %1550 = vmatprep.subr.mxu0 0.0
  %1551 = vmatpush2.msra.mxu0 0.0
  %1552 = vmatprep.subr.mxu0 0.0
  %1553 = vmatpush2.msra.mxu0 0.0
  %1554 = vmatprep.subr.mxu0 0.0
  %1555 = vmatpush2.msra.mxu0 0.0
  %1556 = vmatprep.subr.mxu0 0.0
  %1557 = vmatpush2.msra.mxu0 0.0
  %1558 = vmatprep.subr.mxu0 0.0
  %1559 = vmatpush2.msra.mxu0 0.0
  %1560 = vmatprep.mubr.f32.mxu0 0.0
  %1561 = vmatmul.mubr.f32.gmra.mxu0 %v1494
  %v1562 = vpop.f32.mrf.mxu0
  %v1563 = vadd.f32 0.0, %v1562
  %v1564 = vpop.f32.mrf.mxu0
  %1565 = vdwg.mxu0
  %v1566 = vadd.f32 %v1490, %v1563
  %v1567 = vxor.u32 %v1566, 2147483648
  %v1568 = vmul.f32 %v1567, 1.442695
  %v1569 = vpow.pop %v1568
  %v1570 = vadd.f32 %v1569, 1.0
  %v1571 = vrcp.pop %v1570
  %v1572 = vmul.f32 1.0, %v1571
  %v1573 = vtanh.pop %v1566
  %1575 = vrot.lane.b32.xlu0 %v1492, 32
  %v1576 = vpop.permute.xlu0 %1575
  %v1578 = vmul.f32 %v1572, %v1576
  %1580 = vrot.lane.b32.xlu0 %v1573, 32
  %v1581 = vpop.permute.xlu0 %1580
  %v1583 = vmul.f32 %v1572, %v1581
  %1585 = vrot.lane.b32.xlu0 %v1583, 32
  %v1586 = vpop.permute.xlu0 %1585
  %v1588 = vadd.f32 %v1578, %v1586
  %v1589 = vtanh.pop %v1588
  %1591 = vrot.lane.b32.xlu0 %v1589, 32
  %v1592 = vpop.permute.xlu0 %1591
  %v1594 = vmul.f32 %v1572, %v1592
  %1596 = vrot.lane.b32.xlu0 %v1594, 64
  %v1597 = vpop.permute.xlu0 %1596
  %1599 = vst.msk [vmem:[#allocation2] sm:$0x3] %vm181, %v1597
  %1601 = vrot.lane.b32.xlu0 %v1588, 96
  %v1602 = vpop.permute.xlu0 %1601
  %1604 = vst.msk [vmem:[#allocation3] sm:$0x3] %vm181, %v1602
  %s1605 = scalar_lea.vmem %s3, 12
  %1606 = vst.msk [vmem:[%s1605] sm:$0x3] %vm181, %v1597
  %s1607 = scalar_lea.vmem %s42, 2
  %v1608 = vld [vmem:[%s1607] sm:$0x3]
  %v1609 = vld [vmem:[%s191] sm:$0x3]
  %v1610 = vld [vmem:[%s193] sm:$0x3]
  %v1612 = vsel %vm74, %v1609, 0
  %1614 = vmatprep.subr.mxu0 0.0
  %1615 = vmatpush1.msra.mxu0 0.0
  %1616 = vmatprep.subr.mxu0 0.0
  %1617 = vmatpush1.msra.mxu0 0.0
  %1618 = vmatprep.subr.mxu0 0.0
  %1619 = vmatpush1.msra.mxu0 0.0
  %1620 = vmatprep.subr.mxu0 0.0
  %1621 = vmatpush1.msra.mxu0 0.0
  %1622 = vmatprep.subr.mxu0 0.0
  %1623 = vmatpush1.msra.mxu0 0.0
  %1624 = vmatprep.subr.mxu0 0.0
  %1625 = vmatpush1.msra.mxu0 0.0
  %1626 = vmatprep.subr.mxu0 0.0
  %1627 = vmatpush1.msra.mxu0 0.0
  %1628 = vmatprep.subr.mxu0 0.0
  %1629 = vmatpush1.msra.mxu0 0.0
  %1630 = vmatprep.subr.mxu0 0.0
  %1631 = vmatpush1.msra.mxu0 0.0
  %1632 = vmatprep.subr.mxu0 0.0
  %1633 = vmatpush1.msra.mxu0 0.0
  %1634 = vmatprep.subr.mxu0 0.0
  %1635 = vmatpush1.msra.mxu0 0.0
  %1636 = vmatprep.subr.mxu0 0.0
  %1637 = vmatpush1.msra.mxu0 0.0
  %1638 = vmatprep.subr.mxu0 0.0
  %1639 = vmatpush1.msra.mxu0 %v70
  %1640 = vmatprep.subr.mxu0 0.0
  %1641 = vmatpush1.msra.mxu0 %v69
  %1642 = vmatprep.subr.mxu0 0.0
  %1643 = vmatpush1.msra.mxu0 %v68
  %1644 = vmatprep.subr.mxu0 0.0
  %1645 = vmatpush1.msra.mxu0 %v67
  %1646 = vmatprep.subr.mxu0 0.0
  %1647 = vmatpush2.msra.mxu0 0.0
  %1648 = vmatprep.subr.mxu0 0.0
  %1649 = vmatpush2.msra.mxu0 0.0
  %1650 = vmatprep.subr.mxu0 0.0
  %1651 = vmatpush2.msra.mxu0 0.0
  %1652 = vmatprep.subr.mxu0 0.0
  %1653 = vmatpush2.msra.mxu0 0.0
  %1654 = vmatprep.subr.mxu0 0.0
  %1655 = vmatpush2.msra.mxu0 0.0
  %1656 = vmatprep.subr.mxu0 0.0
  %1657 = vmatpush2.msra.mxu0 0.0
  %1658 = vmatprep.subr.mxu0 0.0
  %1659 = vmatpush2.msra.mxu0 0.0
  %1660 = vmatprep.subr.mxu0 0.0
  %1661 = vmatpush2.msra.mxu0 0.0
  %1662 = vmatprep.subr.mxu0 0.0
  %1663 = vmatpush2.msra.mxu0 0.0
  %1664 = vmatprep.subr.mxu0 0.0
  %1665 = vmatpush2.msra.mxu0 0.0
  %1666 = vmatprep.subr.mxu0 0.0
  %1667 = vmatpush2.msra.mxu0 0.0
  %1668 = vmatprep.subr.mxu0 0.0
  %1669 = vmatpush2.msra.mxu0 0.0
  %1670 = vmatprep.subr.mxu0 0.0
  %1671 = vmatpush2.msra.mxu0 0.0
  %1672 = vmatprep.subr.mxu0 0.0
  %1673 = vmatpush2.msra.mxu0 0.0
  %1674 = vmatprep.subr.mxu0 0.0
  %1675 = vmatpush2.msra.mxu0 0.0
  %1676 = vmatprep.subr.mxu0 0.0
  %1677 = vmatpush2.msra.mxu0 0.0
  %1678 = vmatprep.mubr.f32.mxu0 0.0
  %1679 = vmatmul.mubr.f32.gmra.mxu0 %v1612
  %v1680 = vpop.f32.mrf.mxu0
  %v1681 = vadd.f32 0.0, %v1680
  %v1682 = vpop.f32.mrf.mxu0
  %1683 = vdwg.mxu0
  %v1684 = vadd.f32 %v1608, %v1681
  %v1685 = vxor.u32 %v1684, 2147483648
  %v1686 = vmul.f32 %v1685, 1.442695
  %v1687 = vpow.pop %v1686
  %v1688 = vadd.f32 %v1687, 1.0
  %v1689 = vrcp.pop %v1688
  %v1690 = vmul.f32 1.0, %v1689
  %v1691 = vtanh.pop %v1684
  %1693 = vrot.lane.b32.xlu0 %v1610, 32
  %v1694 = vpop.permute.xlu0 %1693
  %v1696 = vmul.f32 %v1690, %v1694
  %1698 = vrot.lane.b32.xlu0 %v1691, 32
  %v1699 = vpop.permute.xlu0 %1698
  %v1701 = vmul.f32 %v1690, %v1699
  %1703 = vrot.lane.b32.xlu0 %v1701, 32
  %v1704 = vpop.permute.xlu0 %1703
  %v1706 = vadd.f32 %v1696, %v1704
  %v1707 = vtanh.pop %v1706
  %1709 = vrot.lane.b32.xlu0 %v1707, 32
  %v1710 = vpop.permute.xlu0 %1709
  %v1712 = vmul.f32 %v1690, %v1710
  %1714 = vrot.lane.b32.xlu0 %v1712, 64
  %v1715 = vpop.permute.xlu0 %1714
  %1717 = vst.msk [vmem:[%s191] sm:$0x3] %vm181, %v1715
  %1719 = vrot.lane.b32.xlu0 %v1706, 96
  %v1720 = vpop.permute.xlu0 %1719
  %1722 = vst.msk [vmem:[%s193] sm:$0x3] %vm181, %v1720
  %s1723 = scalar_lea.vmem %s50, 2
  %1724 = vst.msk [vmem:[%s1723] sm:$0x3] %vm181, %v1715
  %s1725 = scalar_lea.vmem %s0, 14
  %v1726 = vld [vmem:[%s1725] sm:$0x3]
  %v1727 = vld [vmem:[#allocation2] sm:$0x3]
  %v1728 = vld [vmem:[#allocation3] sm:$0x3]
  %v1730 = vsel %vm74, %v1727, 0
  %1732 = vmatprep.subr.mxu0 0.0
  %1733 = vmatpush1.msra.mxu0 0.0
  %1734 = vmatprep.subr.mxu0 0.0
  %1735 = vmatpush1.msra.mxu0 0.0
  %1736 = vmatprep.subr.mxu0 0.0
  %1737 = vmatpush1.msra.mxu0 0.0
  %1738 = vmatprep.subr.mxu0 0.0
  %1739 = vmatpush1.msra.mxu0 0.0
  %1740 = vmatprep.subr.mxu0 0.0
  %1741 = vmatpush1.msra.mxu0 0.0
  %1742 = vmatprep.subr.mxu0 0.0
  %1743 = vmatpush1.msra.mxu0 0.0
  %1744 = vmatprep.subr.mxu0 0.0
  %1745 = vmatpush1.msra.mxu0 0.0
  %1746 = vmatprep.subr.mxu0 0.0
  %1747 = vmatpush1.msra.mxu0 0.0
  %1748 = vmatprep.subr.mxu0 0.0
  %1749 = vmatpush1.msra.mxu0 0.0
  %1750 = vmatprep.subr.mxu0 0.0
  %1751 = vmatpush1.msra.mxu0 0.0
  %1752 = vmatprep.subr.mxu0 0.0
  %1753 = vmatpush1.msra.mxu0 0.0
  %1754 = vmatprep.subr.mxu0 0.0
  %1755 = vmatpush1.msra.mxu0 0.0
  %1756 = vmatprep.subr.mxu0 0.0
  %1757 = vmatpush1.msra.mxu0 %v65
  %1758 = vmatprep.subr.mxu0 0.0
  %1759 = vmatpush1.msra.mxu0 %v64
  %1760 = vmatprep.subr.mxu0 0.0
  %1761 = vmatpush1.msra.mxu0 %v63
  %1762 = vmatprep.subr.mxu0 0.0
  %1763 = vmatpush1.msra.mxu0 %v62
  %1764 = vmatprep.subr.mxu0 0.0
  %1765 = vmatpush2.msra.mxu0 0.0
  %1766 = vmatprep.subr.mxu0 0.0
  %1767 = vmatpush2.msra.mxu0 0.0
  %1768 = vmatprep.subr.mxu0 0.0
  %1769 = vmatpush2.msra.mxu0 0.0
  %1770 = vmatprep.subr.mxu0 0.0
  %1771 = vmatpush2.msra.mxu0 0.0
  %1772 = vmatprep.subr.mxu0 0.0
  %1773 = vmatpush2.msra.mxu0 0.0
  %1774 = vmatprep.subr.mxu0 0.0
  %1775 = vmatpush2.msra.mxu0 0.0
  %1776 = vmatprep.subr.mxu0 0.0
  %1777 = vmatpush2.msra.mxu0 0.0
  %1778 = vmatprep.subr.mxu0 0.0
  %1779 = vmatpush2.msra.mxu0 0.0
  %1780 = vmatprep.subr.mxu0 0.0
  %1781 = vmatpush2.msra.mxu0 0.0
  %1782 = vmatprep.subr.mxu0 0.0
  %1783 = vmatpush2.msra.mxu0 0.0
  %1784 = vmatprep.subr.mxu0 0.0
  %1785 = vmatpush2.msra.mxu0 0.0
  %1786 = vmatprep.subr.mxu0 0.0
  %1787 = vmatpush2.msra.mxu0 0.0
  %1788 = vmatprep.subr.mxu0 0.0
  %1789 = vmatpush2.msra.mxu0 0.0
  %1790 = vmatprep.subr.mxu0 0.0
  %1791 = vmatpush2.msra.mxu0 0.0
  %1792 = vmatprep.subr.mxu0 0.0
  %1793 = vmatpush2.msra.mxu0 0.0
  %1794 = vmatprep.subr.mxu0 0.0
  %1795 = vmatpush2.msra.mxu0 0.0
  %1796 = vmatprep.mubr.f32.mxu0 0.0
  %1797 = vmatmul.mubr.f32.gmra.mxu0 %v1730
  %v1798 = vpop.f32.mrf.mxu0
  %v1799 = vadd.f32 0.0, %v1798
  %v1800 = vpop.f32.mrf.mxu0
  %1801 = vdwg.mxu0
  %v1802 = vadd.f32 %v1726, %v1799
  %v1803 = vxor.u32 %v1802, 2147483648
  %v1804 = vmul.f32 %v1803, 1.442695
  %v1805 = vpow.pop %v1804
  %v1806 = vadd.f32 %v1805, 1.0
  %v1807 = vrcp.pop %v1806
  %v1808 = vmul.f32 1.0, %v1807
  %v1809 = vtanh.pop %v1802
  %1811 = vrot.lane.b32.xlu0 %v1728, 32
  %v1812 = vpop.permute.xlu0 %1811
  %v1814 = vmul.f32 %v1808, %v1812
  %1816 = vrot.lane.b32.xlu0 %v1809, 32
  %v1817 = vpop.permute.xlu0 %1816
  %v1819 = vmul.f32 %v1808, %v1817
  %1821 = vrot.lane.b32.xlu0 %v1819, 32
  %v1822 = vpop.permute.xlu0 %1821
  %v1824 = vadd.f32 %v1814, %v1822
  %v1825 = vtanh.pop %v1824
  %1827 = vrot.lane.b32.xlu0 %v1825, 32
  %v1828 = vpop.permute.xlu0 %1827
  %v1830 = vmul.f32 %v1808, %v1828
  %1832 = vrot.lane.b32.xlu0 %v1830, 64
  %v1833 = vpop.permute.xlu0 %1832
  %1835 = vst.msk [vmem:[#allocation2] sm:$0x3] %vm181, %v1833
  %1837 = vrot.lane.b32.xlu0 %v1824, 96
  %v1838 = vpop.permute.xlu0 %1837
  %1840 = vst.msk [vmem:[#allocation3] sm:$0x3] %vm181, %v1838
  %s1841 = scalar_lea.vmem %s3, 14
  %1842 = vst.msk [vmem:[%s1841] sm:$0x3] %vm181, %v1833
  %v1843 = vld [vmem:[%s42] sm:$0x3]
  %v1844 = vld [vmem:[%s191] sm:$0x3]
  %v1845 = vld [vmem:[%s193] sm:$0x3]
  %v1847 = vsel %vm74, %v1844, 0
  %1849 = vmatprep.subr.mxu0 0.0
  %1850 = vmatpush1.msra.mxu0 0.0
  %1851 = vmatprep.subr.mxu0 0.0
  %1852 = vmatpush1.msra.mxu0 0.0
  %1853 = vmatprep.subr.mxu0 0.0
  %1854 = vmatpush1.msra.mxu0 0.0
  %1855 = vmatprep.subr.mxu0 0.0
  %1856 = vmatpush1.msra.mxu0 0.0
  %1857 = vmatprep.subr.mxu0 0.0
  %1858 = vmatpush1.msra.mxu0 0.0
  %1859 = vmatprep.subr.mxu0 0.0
  %1860 = vmatpush1.msra.mxu0 0.0
  %1861 = vmatprep.subr.mxu0 0.0
  %1862 = vmatpush1.msra.mxu0 0.0
  %1863 = vmatprep.subr.mxu0 0.0
  %1864 = vmatpush1.msra.mxu0 0.0
  %1865 = vmatprep.subr.mxu0 0.0
  %1866 = vmatpush1.msra.mxu0 0.0
  %1867 = vmatprep.subr.mxu0 0.0
  %1868 = vmatpush1.msra.mxu0 0.0
  %1869 = vmatprep.subr.mxu0 0.0
  %1870 = vmatpush1.msra.mxu0 0.0
  %1871 = vmatprep.subr.mxu0 0.0
  %1872 = vmatpush1.msra.mxu0 0.0
  %1873 = vmatprep.subr.mxu0 0.0
  %1874 = vmatpush1.msra.mxu0 %v70
  %1875 = vmatprep.subr.mxu0 0.0
  %1876 = vmatpush1.msra.mxu0 %v69
  %1877 = vmatprep.subr.mxu0 0.0
  %1878 = vmatpush1.msra.mxu0 %v68
  %1879 = vmatprep.subr.mxu0 0.0
  %1880 = vmatpush1.msra.mxu0 %v67
  %1881 = vmatprep.subr.mxu0 0.0
  %1882 = vmatpush2.msra.mxu0 0.0
  %1883 = vmatprep.subr.mxu0 0.0
  %1884 = vmatpush2.msra.mxu0 0.0
  %1885 = vmatprep.subr.mxu0 0.0
  %1886 = vmatpush2.msra.mxu0 0.0
  %1887 = vmatprep.subr.mxu0 0.0
  %1888 = vmatpush2.msra.mxu0 0.0
  %1889 = vmatprep.subr.mxu0 0.0
  %1890 = vmatpush2.msra.mxu0 0.0
  %1891 = vmatprep.subr.mxu0 0.0
  %1892 = vmatpush2.msra.mxu0 0.0
  %1893 = vmatprep.subr.mxu0 0.0
  %1894 = vmatpush2.msra.mxu0 0.0
  %1895 = vmatprep.subr.mxu0 0.0
  %1896 = vmatpush2.msra.mxu0 0.0
  %1897 = vmatprep.subr.mxu0 0.0
  %1898 = vmatpush2.msra.mxu0 0.0
  %1899 = vmatprep.subr.mxu0 0.0
  %1900 = vmatpush2.msra.mxu0 0.0
  %1901 = vmatprep.subr.mxu0 0.0
  %1902 = vmatpush2.msra.mxu0 0.0
  %1903 = vmatprep.subr.mxu0 0.0
  %1904 = vmatpush2.msra.mxu0 0.0
  %1905 = vmatprep.subr.mxu0 0.0
  %1906 = vmatpush2.msra.mxu0 0.0
  %1907 = vmatprep.subr.mxu0 0.0
  %1908 = vmatpush2.msra.mxu0 0.0
  %1909 = vmatprep.subr.mxu0 0.0
  %1910 = vmatpush2.msra.mxu0 0.0
  %1911 = vmatprep.subr.mxu0 0.0
  %1912 = vmatpush2.msra.mxu0 0.0
  %1913 = vmatprep.mubr.f32.mxu0 0.0
  %1914 = vmatmul.mubr.f32.gmra.mxu0 %v1847
  %v1915 = vpop.f32.mrf.mxu0
  %v1916 = vadd.f32 0.0, %v1915
  %v1917 = vpop.f32.mrf.mxu0
  %1918 = vdwg.mxu0
  %v1919 = vadd.f32 %v1843, %v1916
  %v1920 = vxor.u32 %v1919, 2147483648
  %v1921 = vmul.f32 %v1920, 1.442695
  %v1922 = vpow.pop %v1921
  %v1923 = vadd.f32 %v1922, 1.0
  %v1924 = vrcp.pop %v1923
  %v1925 = vmul.f32 1.0, %v1924
  %v1926 = vtanh.pop %v1919
  %1928 = vrot.lane.b32.xlu0 %v1845, 32
  %v1929 = vpop.permute.xlu0 %1928
  %v1931 = vmul.f32 %v1925, %v1929
  %1933 = vrot.lane.b32.xlu0 %v1926, 32
  %v1934 = vpop.permute.xlu0 %1933
  %v1936 = vmul.f32 %v1925, %v1934
  %1938 = vrot.lane.b32.xlu0 %v1936, 32
  %v1939 = vpop.permute.xlu0 %1938
  %v1941 = vadd.f32 %v1931, %v1939
  %v1942 = vtanh.pop %v1941
  %1944 = vrot.lane.b32.xlu0 %v1942, 32
  %v1945 = vpop.permute.xlu0 %1944
  %v1947 = vmul.f32 %v1925, %v1945
  %1949 = vrot.lane.b32.xlu0 %v1947, 64
  %v1950 = vpop.permute.xlu0 %1949
  %1952 = vst.msk [vmem:[%s191] sm:$0x3] %vm181, %v1950
  %1954 = vrot.lane.b32.xlu0 %v1941, 96
  %v1955 = vpop.permute.xlu0 %1954
  %1957 = vst.msk [vmem:[%s193] sm:$0x3] %vm181, %v1955
  %1958 = vst.msk [vmem:[%s50] sm:$0x3] %vm181, %v1950
  // Predicated region
  $region18: #{lstm_encoder_forward.2} parent=0 // pred_check
    %p1959 = pneg %p53
  $region19: #{lstm_encoder_forward.2} parent=0 // pred_check_branch
    %1961 = sbr.rel (%p1959) target = $region21
  $region20: #{lstm_encoder_forward.2} parent=0 // pred_region
    %v1962 = vld [vmem:[#allocation2] sm:$0x3]
    %v1963 = vld [vmem:[#allocation2 + $0x2] sm:$0x3]
    %1964 = vst.msk [vmem:[%s5] sm:$0x3] %vm181, %v1962
    %1965 = vst.msk [vmem:[%s5 + $0x2] sm:$0x3] %vm181, %v1963
  $region21: #{lstm_encoder_forward.2} parent=0 // pred_fallthru
    _
  %s1966 = ssub.s32 0, 0
  %s1967 = smul.u32 8, %s1966
  %p1968 = scmp.lt.s32.totalorder %s1967, 7
  %s1969 = scalar_select %p1968, %s1967, 7
  %s1970 = smul.addr %s1969, 2
  %s1971 = scalar_lea.vmem %s4, %s1970
  // Predicated region
  $region22: #{lstm_encoder_forward.2} parent=0 // pred_check
    _
  $region23: #{lstm_encoder_forward.2} parent=0 // pred_check_branch
    %1973 = sbr.rel (0) target = $region25
  $region24: #{lstm_encoder_forward.2} parent=0 // pred_region
    _
  $region25: #{lstm_encoder_forward.2} parent=0 // pred_fallthru
    _
  // Predicated region
  $region26: #{lstm_encoder_forward.2} parent=0 // pred_check
    _
  $region27: #{lstm_encoder_forward.2} parent=0 // pred_check_branch
    %1975 = sbr.rel (0) target = $region29
  $region28: #{lstm_encoder_forward.2} parent=0 // pred_region
    %s1976 = ssub.s32 0, 0
    %s1977 = smul.u32 8, %s1976
  $region29: #{lstm_encoder_forward.2} parent=0 // pred_fallthru
    _
  // Predicated region
  $region30: #{lstm_encoder_forward.2} parent=0 // pred_check
    _
  $region31: #{lstm_encoder_forward.2} parent=0 // pred_check_branch
    %1979 = sbr.rel (0) target = $region33
  $region32: #{lstm_encoder_forward.2} parent=0 // pred_region
    _
  $region33: #{lstm_encoder_forward.2} parent=0 // pred_fallthru
    _
  // Predicated region
  $region34: #{lstm_encoder_forward.2} parent=0 // pred_check
    _
  $region35: #{lstm_encoder_forward.2} parent=0 // pred_check_branch
    %1981 = sbr.rel (0) target = $region37
  $region36: #{lstm_encoder_forward.2} parent=0 // pred_region
    _
  $region37: #{lstm_encoder_forward.2} parent=0 // pred_fallthru
    _
  // Predicated region
  $region38: #{lstm_encoder_forward.2} parent=0 // pred_check
    _
  $region39: #{lstm_encoder_forward.2} parent=0 // pred_check_branch
    %1983 = sbr.rel (0) target = $region41
  $region40: #{lstm_encoder_forward.2} parent=0 // pred_region
    %s1984 = ssub.s32 0, 0
    %s1985 = smul.u32 8, %s1984
    %p1986 = scmp.lt.s32.totalorder %s1985, 7
    %s1987 = scalar_select %p1986, %s1985, 7
    %s1988 = smul.addr %s1987, 2
    %s1989 = scalar_lea.vmem %s4, %s1988
  $region41: #{lstm_encoder_forward.2} parent=0 // pred_fallthru
    _
  // Predicated region
  $region42: #{lstm_encoder_forward.2} parent=0 // pred_check
    _
  $region43: #{lstm_encoder_forward.2} parent=0 // pred_check_branch
    %1991 = sbr.rel (0) target = $region45
  $region44: #{lstm_encoder_forward.2} parent=0 // pred_region
    _
  $region45: #{lstm_encoder_forward.2} parent=0 // pred_fallthru
    _

</llo_original>
